<compile_context>
chip_gen: v6e
topology: v6e:2x2x1
jax: 0.10.0
libtpu: 0.0.40
codegen_flags: <defaults>
</compile_context>

<pallas_src>
import math

import jax
import jax.numpy as jnp
import numpy as np
from jax import lax
from jax.experimental import pallas as pl
from jax.experimental.pallas import tpu as pltpu

_ACT_DTYPE = jnp.bfloat16

_CPARAMS = pltpu.CompilerParams(
    dimension_semantics=("parallel",),
    # Headroom below v7x's 64 MiB physical VMEM; also raises the small
    # default scoped limit on v5e/v6e.
    vmem_limit_bytes=48 * 1024 * 1024,
)


# ---------------------------------------------------------------------------
# Pallas kernels (one grid step == one image; intermediates stay in VMEM)
# ---------------------------------------------------------------------------
def _make_stem12_pool_kernel(wa, nk):
    """Fused stem1 + stem2a + stem2b + 2x2 'same' max pool.

    Flattened padded domain D1 = (ha+1, wa+1) -> L1 rows, channels on lanes.
    wa : stem1 output width, nk = L1 - (wa + 2) covers every valid position.
    """
    wp1 = wa + 1
    shifts = (0, 1, wp1, wp1 + 1)          # (dh, dw) = (0,0),(0,1),(1,0),(1,1)

    def kernel(x_ref, mask_ref, w1_ref, b1_ref, w2a_ref, b2a_ref,
               w2b_ref, b2b_ref, cat_ref, acc_m, acc_h):
        l1 = x_ref.shape[1]
        mid = acc_m.shape[1]
        x = x_ref[0]                        # (L1, 4*cin)  bf16
        mask = mask_ref[...]                # (L1, 1)      f32, 0 on pad row/col

        def conv2x2(lhs, w_ref, acc_ref):
            # lhs (L1, K) bf16, w_ref (4, K, M) bf16, acc_ref (L1, M) f32.
            for k, s in enumerate(shifts):
                prod = jnp.dot(lhs, w_ref[k],
                               preferred_element_type=jnp.float32)  # (L1, M)
                if s == 0:
                    acc_ref[...] = prod
                else:
                    acc_ref[0:l1 - s, :] = acc_ref[0:l1 - s, :] + prod[s:, :]
            return acc_ref[...]

        # stem1 (3x3 s2 conv on phase-packed input) + folded BN + ReLU.
        # Mask zeroes the bottom/right pad row/col so the downstream 2x2 ops
        # read exact zero padding.
        y1 = jnp.maximum(conv2x2(x, w1_ref, acc_m) + b1_ref[...], 0.0) * mask

        # stem2a -> stem2b (2x2 s1, pad bottom/right), BN+ReLU folded.
        z2a = jnp.maximum(conv2x2(y1.astype(x.dtype), w2a_ref, acc_h)
                          + b2a_ref[...], 0.0) * mask
        z2b = jnp.maximum(conv2x2(z2a.astype(x.dtype), w2b_ref, acc_m)
                          + b2b_ref[...], 0.0)

        # 2x2 stride-1 max pool over y1 zero-padded bottom/right
        # (exactly the torch F.pad(value=0) + MaxPool2d(ceil_mode) semantics).
        pool = jnp.maximum(
            jnp.maximum(y1[0:nk, :], y1[1:nk + 1, :]),
            jnp.maximum(y1[wp1:nk + wp1, :], y1[wp1 + 1:nk + wp1 + 1, :]))
        pool = jnp.concatenate(
            [pool, jnp.zeros((wp1 + 1, mid), pool.dtype)], axis=0)   # -> L1 rows

        # Single store of the channel-concatenated [pool | stem2b] buffer.
        cat_ref[0] = jnp.concatenate([pool, z2b], axis=-1).astype(cat_ref.dtype)

    return kernel


def _make_stem34_kernel(wb):
    """Fused stem3 (3x3 s2, phase-packed input) + stem4 (1x1), BN+ReLU folded.

    Flattened packed domain D3 = (hb+1, wb+1) -> L3 rows.
    """
    wp1 = wb + 1
    shifts = (0, 1, wp1, wp1 + 1)

    def kernel(c_ref, w3_ref, b3_ref, w4_ref, b4_ref, o_ref, acc):
        l3 = c_ref.shape[1]
        c = c_ref[0]                                     # (L3, 8*mid) bf16
        for k, s in enumerate(shifts):
            prod = jnp.dot(c, w3_ref[k], preferred_element_type=jnp.float32)
            if s == 0:
                acc[...] = prod
            else:
                acc[0:l3 - s, :] = acc[0:l3 - s, :] + prod[s:, :]
        x3 = jnp.maximum(acc[...] + b3_ref[...], 0.0).astype(c.dtype)  # stem3 (VMEM only)
        x4 = jnp.dot(x3, w4_ref[...], preferred_element_type=jnp.float32)
        o_ref[0] = jnp.maximum(x4 + b4_ref[...], 0.0).astype(o_ref.dtype)

    return kernel


# ---------------------------------------------------------------------------
# XLA-side glue (pure data movement / weight repacking)
# ---------------------------------------------------------------------------
def _space_to_depth2(x):
    """(N, 2A, 2B, C) -> (N, A, B, 4C); channel block (2a+b) holds pixel (2i+a, 2j+b)."""
    n, h, w, c = x.shape
    x = x.reshape(n, h // 2, 2, w // 2, 2, c)
    x = x.transpose(0, 1, 3, 2, 4, 5)
    return x.reshape(n, h // 2, w // 2, 4 * c)


def _pack_stride2_weight(w):
    """(3, 3, K, M) -> (2, 2, 4K, M): one (4K, M) matrix per packed shift (dr, dc)."""
    k_in, m = w.shape[2], w.shape[3]
    wp = jnp.pad(w, ((0, 1), (0, 1), (0, 0), (0, 0)))     # (4, 4, K, M)
    wp = wp.reshape(2, 2, 2, 2, k_in, m)                  # (dr, a, dc, b, K, M)
    wp = wp.transpose(0, 2, 1, 3, 4, 5)                   # (dr, dc, a, b, K, M)
    return wp.reshape(2, 2, 4 * k_in, m)


# ---------------------------------------------------------------------------
# Forward pass
# ---------------------------------------------------------------------------
def stem_block_forward(x_nchw, params):
    # TODO(synk): accept/produce NHWC directly when the caller is NHWC to drop
    #             the boundary transposes (one extra HBM pass each).
    x = jnp.transpose(x_nchw, (0, 2, 3, 1)).astype(jnp.float32)   # NHWC
    n, h0, w0, cin = x.shape

    w1f, b1 = params["stem1"]
    w2af, b2a = params["stem2a"]
    w2bf, b2b = params["stem2b"]
    w3f, b3 = params["stem3"]
    w4f, b4 = params["stem4"]
    mid = w1f.shape[-1]
    mid2 = w2af.shape[-1]
    outc = w4f.shape[-1]

    ha = (h0 - 1) // 2 + 1        # stem1 output spatial (k=3, s=2, p=1)
    wa = (w0 - 1) // 2 + 1
    hb = (ha - 1) // 2 + 1        # stem3 output spatial
    wb = (wa - 1) // 2 + 1
    l1 = (ha + 1) * (wa + 1)
    l3 = (hb + 1) * (wb + 1)
    nk = l1 - (wa + 2)

    # ---- stem1 input: pad + mod-2 space-to-depth + flatten (one XLA pass) ----
    xp = jnp.pad(x, ((0, 0), (1, 2 * ha + 1 - h0), (1, 2 * wa + 1 - w0), (0, 0)))
    x2 = _space_to_depth2(xp).reshape(n, l1, 4 * cin).astype(_ACT_DTYPE)

    # ---- weights: fold the stride-2 3x3 taps into 2x2 packed shifts, bf16 ----
    w1p = _pack_stride2_weight(w1f).reshape(4, 4 * cin, mid).astype(_ACT_DTYPE)
    w2ap = w2af.reshape(4, mid, mid2).astype(_ACT_DTYPE)
    w2bp = w2bf.reshape(4, mid2, mid).astype(_ACT_DTYPE)
    w3p = _pack_stride2_weight(w3f).reshape(4, 8 * mid, mid).astype(_ACT_DTYPE)
    w4p = w4f.reshape(mid, outc).astype(_ACT_DTYPE)

    # Validity mask over the flattened padded domain D1 (0 on pad row/col).
    mask = ((jnp.arange(ha + 1) < ha)[:, None]
            & (jnp.arange(wa + 1) < wa)[None, :]).reshape(l1, 1).astype(jnp.float32)

    # ---- fused stem1 + stem2a + stem2b + maxpool ----
    cat = pl.pallas_call(
        _make_stem12_pool_kernel(wa, nk),
        out_shape=jax.ShapeDtypeStruct((n, l1, 2 * mid), _ACT_DTYPE),
        grid=(n,),
        in_specs=[
            pl.BlockSpec((1, l1, 4 * cin), lambda i: (i, 0, 0)),
            pl.BlockSpec((l1, 1), lambda i: (0, 0)),
            pl.BlockSpec((4, 4 * cin, mid), lambda i: (0, 0, 0)),
            pl.BlockSpec((1, mid), lambda i: (0, 0)),
            pl.BlockSpec((4, mid, mid2), lambda i: (0, 0, 0)),
            pl.BlockSpec((1, mid2), lambda i: (0, 0)),
            pl.BlockSpec((4, mid2, mid), lambda i: (0, 0, 0)),
            pl.BlockSpec((1, mid), lambda i: (0, 0)),
        ],
        out_specs=pl.BlockSpec((1, l1, 2 * mid), lambda i: (i, 0, 0)),
        scratch_shapes=[pltpu.VMEM((l1, mid), jnp.float32),
                        pltpu.VMEM((l1, mid2), jnp.float32)],
        compiler_params=_CPARAMS,
    )(x2, mask, w1p, b1.reshape(1, mid), w2ap, b2a.reshape(1, mid2),
      w2bp, b2b.reshape(1, mid))

    # ---- repack [pool|stem2b] for the stride-2 stem3 (single XLA pass, bf16) ----
    # TODO(synk): emit this phase-packed layout directly from the kernel above.
    catr = cat.reshape(n, ha + 1, wa + 1, 2 * mid)[:, :ha, :wa, :]
    catp = jnp.pad(catr, ((0, 0), (1, 2 * hb + 1 - ha), (1, 2 * wb + 1 - wa), (0, 0)))
    c2 = _space_to_depth2(catp).reshape(n, l3, 8 * mid)

    # ---- fused stem3 + stem4 ----
    out_flat = pl.pallas_call(
        _make_stem34_kernel(wb),
        out_shape=jax.ShapeDtypeStruct((n, l3, outc), jnp.float32),
        grid=(n,),
        in_specs=[
            pl.BlockSpec((1, l3, 8 * mid), lambda i: (i, 0, 0)),
            pl.BlockSpec((4, 8 * mid, mid), lambda i: (0, 0, 0)),
            pl.BlockSpec((1, mid), lambda i: (0, 0)),
            pl.BlockSpec((mid, outc), lambda i: (0, 0)),
            pl.BlockSpec((1, outc), lambda i: (0, 0)),
        ],
        out_specs=pl.BlockSpec((1, l3, outc), lambda i: (i, 0, 0)),
        scratch_shapes=[pltpu.VMEM((l3, mid), jnp.float32)],
        compiler_params=_CPARAMS,
    )(c2, w3p, b3.reshape(1, mid), w4p, b4.reshape(1, outc))

    out = out_flat.reshape(n, hb + 1, wb + 1, outc)[:, :hb, :wb, :]
    return jnp.transpose(out, (0, 3, 1, 2))                # NCHW


# ---------------------------------------------------------------------------
# Deterministic parameter init (BN folded into conv, inference semantics)
# ---------------------------------------------------------------------------
def make_convbn_params(key, cin, cout, k, eps=1e-5):
    kw_, kg, kb, km, kv = jax.random.split(key, 5)
    w = jax.random.normal(kw_, (k, k, cin, cout), jnp.float32) / math.sqrt(k * k * cin)
    gamma = 1.0 + 0.1 * jax.random.normal(kg, (cout,), jnp.float32)
    beta = 0.1 * jax.random.normal(kb, (cout,), jnp.float32)
    mean = 0.1 * jax.random.normal(km, (cout,), jnp.float32)
    var = jnp.abs(jax.random.normal(kv, (cout,), jnp.float32)) + 0.5
    scale = gamma / jnp.sqrt(var + eps)
    return w * scale, beta - mean * scale


def init_stem_params(key, in_c, mid_c, out_c):
    k1, k2a, k2b, k3, k4 = jax.random.split(key, 5)
    return {
        "stem1": make_convbn_params(k1, in_c, mid_c, 3),
        "stem2a": make_convbn_params(k2a, mid_c, mid_c // 2, 2),
        "stem2b": make_convbn_params(k2b, mid_c // 2, mid_c, 2),
        "stem3": make_convbn_params(k3, mid_c * 2, mid_c, 3),
        "stem4": make_convbn_params(k4, mid_c, out_c, 1),
    }


# ---------------------------------------------------------------------------
# Pure-JAX f32 reference (ground truth for the Pallas path)
# ---------------------------------------------------------------------------
def _ref_conv(x, w4, b, stride, pad):
    y = lax.conv_general_dilated(
        x, w4, (stride, stride), pad, dimension_numbers=("NHWC", "HWIO", "NHWC"),
        precision=lax.Precision.HIGHEST)
    return jnp.maximum(y + b, 0.0)


def _ref_pool(x):
    xp = jnp.pad(x, ((0, 0), (0, 1), (0, 1), (0, 0)))
    return lax.reduce_window(xp, -jnp.inf, lax.max, (1, 2, 2, 1), (1, 1, 1, 1), "VALID")


def stem_block_reference(x_nchw, params):
    x = jnp.transpose(x_nchw, (0, 2, 3, 1))
    x = _ref_conv(x, *params["stem1"], 2, ((1, 1), (1, 1)))
    x2 = _ref_conv(x, *params["stem2a"], 1, ((0, 1), (0, 1)))
    x2 = _ref_conv(x2, *params["stem2b"], 1, ((0, 1), (0, 1)))
    x1 = _ref_pool(x)
    x = jnp.concatenate([x1, x2], axis=-1)
    x = _ref_conv(x, *params["stem3"], 2, ((1, 1), (1, 1)))
    x = _ref_conv(x, *params["stem4"], 1, ((0, 0), (0, 0)))
    return jnp.transpose(x, (0, 3, 1, 2))


# ---------------------------------------------------------------------------
if __name__ == "__main__":
    key = jax.random.PRNGKey(0)
    kx, kp = jax.random.split(key)

    in_channels, mid_channels, out_channels = 4, 8, 16
    x_nchw = jax.random.normal(kx, (2, in_channels, 16, 16), jnp.float32)
    params = init_stem_params(kp, in_channels, mid_channels, out_channels)

    y = jax.jit(stem_block_forward)(x_nchw, params)
    y = jax.block_until_ready(y)

    assert y.shape == (2, out_channels, 4, 4), y.shape

    y_ref = jax.block_until_ready(stem_block_reference(x_nchw, params))
    # Tolerance reflects the intentional bf16 activation/weight path vs the
    # f32 (precision=HIGHEST) reference; accumulation is f32 throughout.
    np.testing.assert_allclose(np.asarray(y, dtype=np.float32), np.asarray(y_ref),
                               rtol=3e-2, atol=3e-2)

    print("KERNEL_OK")
</pallas_src>

<mosaic_0001>
module attributes {stable_mosaic.version = 11 : i64} {
  func.func @kernel(%arg0: i32, %arg1: memref<1x81x16xbf16, #tpu.memory_space<vmem>>, %arg2: memref<81x1xf32, #tpu.memory_space<vmem>>, %arg3: memref<4x16x8xbf16, #tpu.memory_space<vmem>>, %arg4: memref<1x8xf32, #tpu.memory_space<vmem>>, %arg5: memref<4x8x4xbf16, #tpu.memory_space<vmem>>, %arg6: memref<1x4xf32, #tpu.memory_space<vmem>>, %arg7: memref<4x4x8xbf16, #tpu.memory_space<vmem>>, %arg8: memref<1x8xf32, #tpu.memory_space<vmem>>, %arg9: memref<1x81x16xbf16, #tpu.memory_space<vmem>>, %arg10: memref<81x8xf32, #tpu.memory_space<vmem>>, %arg11: memref<81x4xf32, #tpu.memory_space<vmem>>) attributes {dimension_semantics = [#tpu.dimension_semantics<parallel>], iteration_bounds = array<i64: 2>, scalar_prefetch = 0 : i64, scratch_operands = 2 : i64, tpu.core_type = #tpu.core_type<tc>, window_params = [{transform_indices = @transform_0, window_bounds = array<i64: 1, 81, 16>}, {pipeline_mode = #tpu.pipeline_mode<synchronous>, transform_indices = @transform_1, window_bounds = array<i64: 81, 1>}, {pipeline_mode = #tpu.pipeline_mode<synchronous>, transform_indices = @transform_2, window_bounds = array<i64: 4, 16, 8>}, {pipeline_mode = #tpu.pipeline_mode<synchronous>, transform_indices = @transform_3, window_bounds = array<i64: 1, 8>}, {pipeline_mode = #tpu.pipeline_mode<synchronous>, transform_indices = @transform_4, window_bounds = array<i64: 4, 8, 4>}, {pipeline_mode = #tpu.pipeline_mode<synchronous>, transform_indices = @transform_5, window_bounds = array<i64: 1, 4>}, {pipeline_mode = #tpu.pipeline_mode<synchronous>, transform_indices = @transform_6, window_bounds = array<i64: 4, 4, 8>}, {pipeline_mode = #tpu.pipeline_mode<synchronous>, transform_indices = @transform_7, window_bounds = array<i64: 1, 8>}, {transform_indices = @transform_8, window_bounds = array<i64: 1, 81, 16>}]} {
    %c0 = arith.constant 0 : index
    %c0_0 = arith.constant 0 : index
    %c0_1 = arith.constant 0 : index
    %0 = vector.load %arg1[%c0, %c0_0, %c0_1] : memref<1x81x16xbf16, #tpu.memory_space<vmem>>, vector<1x81x16xbf16>
    %1 = vector.shape_cast %0 : vector<1x81x16xbf16> to vector<81x16xbf16>
    %c0_2 = arith.constant 0 : index
    %c0_3 = arith.constant 0 : index
    %2 = vector.load %arg2[%c0_2, %c0_3] : memref<81x1xf32, #tpu.memory_space<vmem>>, vector<81x1xf32>
    %c0_4 = arith.constant 0 : index
    %c0_5 = arith.constant 0 : index
    %c0_6 = arith.constant 0 : index
    %3 = vector.load %arg3[%c0_4, %c0_5, %c0_6] : memref<4x16x8xbf16, #tpu.memory_space<vmem>>, vector<1x16x8xbf16>
    %4 = vector.shape_cast %3 : vector<1x16x8xbf16> to vector<16x8xbf16>
    %cst = arith.constant dense<0.000000e+00> : vector<81x8xf32>
    %5 = tpu.matmul %1, %4, %cst {dimension_numbers = #tpu.dot_dimension_numbers<[1], [0], [0], [1], [0, 0, 1, 1], [], []>} : vector<81x16xbf16>, vector<16x8xbf16>, vector<81x8xf32> -> vector<81x8xf32>
    %c0_7 = arith.constant 0 : index
    %c0_8 = arith.constant 0 : index
    %6 = vector.load %arg10[%c0_7, %c0_8] : memref<81x8xf32, #tpu.memory_space<vmem>>, vector<81x8xf32>
    tpu.vector_store %arg10[%c0_7, %c0_8], %5 {strides = array<i32>} : memref<81x8xf32, #tpu.memory_space<vmem>>, vector<81x8xf32>,
    %c1 = arith.constant 1 : index
    %c0_9 = arith.constant 0 : index
    %c0_10 = arith.constant 0 : index
    %7 = vector.load %arg3[%c1, %c0_9, %c0_10] : memref<4x16x8xbf16, #tpu.memory_space<vmem>>, vector<1x16x8xbf16>
    %8 = vector.shape_cast %7 : vector<1x16x8xbf16> to vector<16x8xbf16>
    %cst_11 = arith.constant dense<0.000000e+00> : vector<81x8xf32>
    %9 = tpu.matmul %1, %8, %cst_11 {dimension_numbers = #tpu.dot_dimension_numbers<[1], [0], [0], [1], [0, 0, 1, 1], [], []>} : vector<81x16xbf16>, vector<16x8xbf16>, vector<81x8xf32> -> vector<81x8xf32>
    %c0_12 = arith.constant 0 : index
    %c0_13 = arith.constant 0 : index
    %10 = vector.load %arg10[%c0_12, %c0_13] : memref<81x8xf32, #tpu.memory_space<vmem>>, vector<80x8xf32>
    %11 = vector.extract_strided_slice %9 {offsets = [1, 0], sizes = [80, 8], strides = [1, 1]} : vector<81x8xf32> to vector<80x8xf32>
    %12 = arith.addf %10, %11 : vector<80x8xf32>
    %c0_14 = arith.constant 0 : index
    %c0_15 = arith.constant 0 : index
    %13 = vector.load %arg10[%c0_14, %c0_15] : memref<81x8xf32, #tpu.memory_space<vmem>>, vector<80x8xf32>
    tpu.vector_store %arg10[%c0_14, %c0_15], %12 {strides = array<i32>} : memref<81x8xf32, #tpu.memory_space<vmem>>, vector<80x8xf32>,
    %c2 = arith.constant 2 : index
    %c0_16 = arith.constant 0 : index
    %c0_17 = arith.constant 0 : index
    %14 = vector.load %arg3[%c2, %c0_16, %c0_17] : memref<4x16x8xbf16, #tpu.memory_space<vmem>>, vector<1x16x8xbf16>
    %15 = vector.shape_cast %14 : vector<1x16x8xbf16> to vector<16x8xbf16>
    %cst_18 = arith.constant dense<0.000000e+00> : vector<81x8xf32>
    %16 = tpu.matmul %1, %15, %cst_18 {dimension_numbers = #tpu.dot_dimension_numbers<[1], [0], [0], [1], [0, 0, 1, 1], [], []>} : vector<81x16xbf16>, vector<16x8xbf16>, vector<81x8xf32> -> vector<81x8xf32>
    %c0_19 = arith.constant 0 : index
    %c0_20 = arith.constant 0 : index
    %17 = vector.load %arg10[%c0_19, %c0_20] : memref<81x8xf32, #tpu.memory_space<vmem>>, vector<72x8xf32>
    %18 = vector.extract_strided_slice %16 {offsets = [9, 0], sizes = [72, 8], strides = [1, 1]} : vector<81x8xf32> to vector<72x8xf32>
    %19 = arith.addf %17, %18 : vector<72x8xf32>
    %c0_21 = arith.constant 0 : index
    %c0_22 = arith.constant 0 : index
    %20 = vector.load %arg10[%c0_21, %c0_22] : memref<81x8xf32, #tpu.memory_space<vmem>>, vector<72x8xf32>
    tpu.vector_store %arg10[%c0_21, %c0_22], %19 {strides = array<i32>} : memref<81x8xf32, #tpu.memory_space<vmem>>, vector<72x8xf32>,
    %c3 = arith.constant 3 : index
    %c0_23 = arith.constant 0 : index
    %c0_24 = arith.constant 0 : index
    %21 = vector.load %arg3[%c3, %c0_23, %c0_24] : memref<4x16x8xbf16, #tpu.memory_space<vmem>>, vector<1x16x8xbf16>
    %22 = vector.shape_cast %21 : vector<1x16x8xbf16> to vector<16x8xbf16>
    %cst_25 = arith.constant dense<0.000000e+00> : vector<81x8xf32>
    %23 = tpu.matmul %1, %22, %cst_25 {dimension_numbers = #tpu.dot_dimension_numbers<[1], [0], [0], [1], [0, 0, 1, 1], [], []>} : vector<81x16xbf16>, vector<16x8xbf16>, vector<81x8xf32> -> vector<81x8xf32>
    %c0_26 = arith.constant 0 : index
    %c0_27 = arith.constant 0 : index
    %24 = vector.load %arg10[%c0_26, %c0_27] : memref<81x8xf32, #tpu.memory_space<vmem>>, vector<71x8xf32>
    %25 = vector.extract_strided_slice %23 {offsets = [10, 0], sizes = [71, 8], strides = [1, 1]} : vector<81x8xf32> to vector<71x8xf32>
    %26 = arith.addf %24, %25 : vector<71x8xf32>
    %c0_28 = arith.constant 0 : index
    %c0_29 = arith.constant 0 : index
    %27 = vector.load %arg10[%c0_28, %c0_29] : memref<81x8xf32, #tpu.memory_space<vmem>>, vector<71x8xf32>
    tpu.vector_store %arg10[%c0_28, %c0_29], %26 {strides = array<i32>} : memref<81x8xf32, #tpu.memory_space<vmem>>, vector<71x8xf32>,
    %c0_30 = arith.constant 0 : index
    %c0_31 = arith.constant 0 : index
    %28 = vector.load %arg10[%c0_30, %c0_31] : memref<81x8xf32, #tpu.memory_space<vmem>>, vector<81x8xf32>
    %c0_32 = arith.constant 0 : index
    %c0_33 = arith.constant 0 : index
    %29 = vector.load %arg4[%c0_32, %c0_33] : memref<1x8xf32, #tpu.memory_space<vmem>>, vector<1x8xf32>
    %30 = vector.broadcast %29 : vector<1x8xf32> to vector<81x8xf32>
    %31 = arith.addf %28, %30 : vector<81x8xf32>
    %cst_34 = arith.constant 0.000000e+00 : f32
    %32 = vector.broadcast %cst_34 : f32 to vector<81x8xf32>
    %33 = arith.maximumf %31, %32 : vector<81x8xf32>
    %34 = vector.broadcast %2 : vector<81x1xf32> to vector<81x8xf32>
    %35 = arith.mulf %33, %34 : vector<81x8xf32>
    %36 = arith.truncf %35 : vector<81x8xf32> to vector<81x8xbf16>
    %c0_35 = arith.constant 0 : index
    %c0_36 = arith.constant 0 : index
    %c0_37 = arith.constant 0 : index
    %37 = vector.load %arg5[%c0_35, %c0_36, %c0_37] : memref<4x8x4xbf16, #tpu.memory_space<vmem>>, vector<1x8x4xbf16>
    %38 = vector.shape_cast %37 : vector<1x8x4xbf16> to vector<8x4xbf16>
    %cst_38 = arith.constant dense<0.000000e+00> : vector<81x4xf32>
    %39 = tpu.matmul %36, %38, %cst_38 {dimension_numbers = #tpu.dot_dimension_numbers<[1], [0], [0], [1], [0, 0, 1, 1], [], []>} : vector<81x8xbf16>, vector<8x4xbf16>, vector<81x4xf32> -> vector<81x4xf32>
    %c0_39 = arith.constant 0 : index
    %c0_40 = arith.constant 0 : index
    %40 = vector.load %arg11[%c0_39, %c0_40] : memref<81x4xf32, #tpu.memory_space<vmem>>, vector<81x4xf32>
    tpu.vector_store %arg11[%c0_39, %c0_40], %39 {strides = array<i32>} : memref<81x4xf32, #tpu.memory_space<vmem>>, vector<81x4xf32>,
    %c1_41 = arith.constant 1 : index
    %c0_42 = arith.constant 0 : index
    %c0_43 = arith.constant 0 : index
    %41 = vector.load %arg5[%c1_41, %c0_42, %c0_43] : memref<4x8x4xbf16, #tpu.memory_space<vmem>>, vector<1x8x4xbf16>
    %42 = vector.shape_cast %41 : vector<1x8x4xbf16> to vector<8x4xbf16>
    %cst_44 = arith.constant dense<0.000000e+00> : vector<81x4xf32>
    %43 = tpu.matmul %36, %42, %cst_44 {dimension_numbers = #tpu.dot_dimension_numbers<[1], [0], [0], [1], [0, 0, 1, 1], [], []>} : vector<81x8xbf16>, vector<8x4xbf16>, vector<81x4xf32> -> vector<81x4xf32>
    %c0_45 = arith.constant 0 : index
    %c0_46 = arith.constant 0 : index
    %44 = vector.load %arg11[%c0_45, %c0_46] : memref<81x4xf32, #tpu.memory_space<vmem>>, vector<80x4xf32>
    %45 = vector.extract_strided_slice %43 {offsets = [1, 0], sizes = [80, 4], strides = [1, 1]} : vector<81x4xf32> to vector<80x4xf32>
    %46 = arith.addf %44, %45 : vector<80x4xf32>
    %c0_47 = arith.constant 0 : index
    %c0_48 = arith.constant 0 : index
    %47 = vector.load %arg11[%c0_47, %c0_48] : memref<81x4xf32, #tpu.memory_space<vmem>>, vector<80x4xf32>
    tpu.vector_store %arg11[%c0_47, %c0_48], %46 {strides = array<i32>} : memref<81x4xf32, #tpu.memory_space<vmem>>, vector<80x4xf32>,
    %c2_49 = arith.constant 2 : index
    %c0_50 = arith.constant 0 : index
    %c0_51 = arith.constant 0 : index
    %48 = vector.load %arg5[%c2_49, %c0_50, %c0_51] : memref<4x8x4xbf16, #tpu.memory_space<vmem>>, vector<1x8x4xbf16>
    %49 = vector.shape_cast %48 : vector<1x8x4xbf16> to vector<8x4xbf16>
    %cst_52 = arith.constant dense<0.000000e+00> : vector<81x4xf32>
    %50 = tpu.matmul %36, %49, %cst_52 {dimension_numbers = #tpu.dot_dimension_numbers<[1], [0], [0], [1], [0, 0, 1, 1], [], []>} : vector<81x8xbf16>, vector<8x4xbf16>, vector<81x4xf32> -> vector<81x4xf32>
    %c0_53 = arith.constant 0 : index
    %c0_54 = arith.constant 0 : index
    %51 = vector.load %arg11[%c0_53, %c0_54] : memref<81x4xf32, #tpu.memory_space<vmem>>, vector<72x4xf32>
    %52 = vector.extract_strided_slice %50 {offsets = [9, 0], sizes = [72, 4], strides = [1, 1]} : vector<81x4xf32> to vector<72x4xf32>
    %53 = arith.addf %51, %52 : vector<72x4xf32>
    %c0_55 = arith.constant 0 : index
    %c0_56 = arith.constant 0 : index
    %54 = vector.load %arg11[%c0_55, %c0_56] : memref<81x4xf32, #tpu.memory_space<vmem>>, vector<72x4xf32>
    tpu.vector_store %arg11[%c0_55, %c0_56], %53 {strides = array<i32>} : memref<81x4xf32, #tpu.memory_space<vmem>>, vector<72x4xf32>,
    %c3_57 = arith.constant 3 : index
    %c0_58 = arith.constant 0 : index
    %c0_59 = arith.constant 0 : index
    %55 = vector.load %arg5[%c3_57, %c0_58, %c0_59] : memref<4x8x4xbf16, #tpu.memory_space<vmem>>, vector<1x8x4xbf16>
    %56 = vector.shape_cast %55 : vector<1x8x4xbf16> to vector<8x4xbf16>
    %cst_60 = arith.constant dense<0.000000e+00> : vector<81x4xf32>
    %57 = tpu.matmul %36, %56, %cst_60 {dimension_numbers = #tpu.dot_dimension_numbers<[1], [0], [0], [1], [0, 0, 1, 1], [], []>} : vector<81x8xbf16>, vector<8x4xbf16>, vector<81x4xf32> -> vector<81x4xf32>
    %c0_61 = arith.constant 0 : index
    %c0_62 = arith.constant 0 : index
    %58 = vector.load %arg11[%c0_61, %c0_62] : memref<81x4xf32, #tpu.memory_space<vmem>>, vector<71x4xf32>
    %59 = vector.extract_strided_slice %57 {offsets = [10, 0], sizes = [71, 4], strides = [1, 1]} : vector<81x4xf32> to vector<71x4xf32>
    %60 = arith.addf %58, %59 : vector<71x4xf32>
    %c0_63 = arith.constant 0 : index
    %c0_64 = arith.constant 0 : index
    %61 = vector.load %arg11[%c0_63, %c0_64] : memref<81x4xf32, #tpu.memory_space<vmem>>, vector<71x4xf32>
    tpu.vector_store %arg11[%c0_63, %c0_64], %60 {strides = array<i32>} : memref<81x4xf32, #tpu.memory_space<vmem>>, vector<71x4xf32>,
    %c0_65 = arith.constant 0 : index
    %c0_66 = arith.constant 0 : index
    %62 = vector.load %arg11[%c0_65, %c0_66] : memref<81x4xf32, #tpu.memory_space<vmem>>, vector<81x4xf32>
    %c0_67 = arith.constant 0 : index
    %c0_68 = arith.constant 0 : index
    %63 = vector.load %arg6[%c0_67, %c0_68] : memref<1x4xf32, #tpu.memory_space<vmem>>, vector<1x4xf32>
    %64 = vector.broadcast %63 : vector<1x4xf32> to vector<81x4xf32>
    %65 = arith.addf %62, %64 : vector<81x4xf32>
    %cst_69 = arith.constant 0.000000e+00 : f32
    %66 = vector.broadcast %cst_69 : f32 to vector<81x4xf32>
    %67 = arith.maximumf %65, %66 : vector<81x4xf32>
    %68 = vector.broadcast %2 : vector<81x1xf32> to vector<81x4xf32>
    %69 = arith.mulf %67, %68 : vector<81x4xf32>
    %70 = arith.truncf %69 : vector<81x4xf32> to vector<81x4xbf16>
    %c0_70 = arith.constant 0 : index
    %c0_71 = arith.constant 0 : index
    %c0_72 = arith.constant 0 : index
    %71 = vector.load %arg7[%c0_70, %c0_71, %c0_72] : memref<4x4x8xbf16, #tpu.memory_space<vmem>>, vector<1x4x8xbf16>
    %72 = vector.shape_cast %71 : vector<1x4x8xbf16> to vector<4x8xbf16>
    %cst_73 = arith.constant dense<0.000000e+00> : vector<81x8xf32>
    %73 = tpu.matmul %70, %72, %cst_73 {dimension_numbers = #tpu.dot_dimension_numbers<[1], [0], [0], [1], [0, 0, 1, 1], [], []>} : vector<81x4xbf16>, vector<4x8xbf16>, vector<81x8xf32> -> vector<81x8xf32>
    %c0_74 = arith.constant 0 : index
    %c0_75 = arith.constant 0 : index
    %74 = vector.load %arg10[%c0_74, %c0_75] : memref<81x8xf32, #tpu.memory_space<vmem>>, vector<81x8xf32>
    tpu.vector_store %arg10[%c0_74, %c0_75], %73 {strides = array<i32>} : memref<81x8xf32, #tpu.memory_space<vmem>>, vector<81x8xf32>,
    %c1_76 = arith.constant 1 : index
    %c0_77 = arith.constant 0 : index
    %c0_78 = arith.constant 0 : index
    %75 = vector.load %arg7[%c1_76, %c0_77, %c0_78] : memref<4x4x8xbf16, #tpu.memory_space<vmem>>, vector<1x4x8xbf16>
    %76 = vector.shape_cast %75 : vector<1x4x8xbf16> to vector<4x8xbf16>
    %cst_79 = arith.constant dense<0.000000e+00> : vector<81x8xf32>
    %77 = tpu.matmul %70, %76, %cst_79 {dimension_numbers = #tpu.dot_dimension_numbers<[1], [0], [0], [1], [0, 0, 1, 1], [], []>} : vector<81x4xbf16>, vector<4x8xbf16>, vector<81x8xf32> -> vector<81x8xf32>
    %c0_80 = arith.constant 0 : index
    %c0_81 = arith.constant 0 : index
    %78 = vector.load %arg10[%c0_80, %c0_81] : memref<81x8xf32, #tpu.memory_space<vmem>>, vector<80x8xf32>
    %79 = vector.extract_strided_slice %77 {offsets = [1, 0], sizes = [80, 8], strides = [1, 1]} : vector<81x8xf32> to vector<80x8xf32>
    %80 = arith.addf %78, %79 : vector<80x8xf32>
    %c0_82 = arith.constant 0 : index
    %c0_83 = arith.constant 0 : index
    %81 = vector.load %arg10[%c0_82, %c0_83] : memref<81x8xf32, #tpu.memory_space<vmem>>, vector<80x8xf32>
    tpu.vector_store %arg10[%c0_82, %c0_83], %80 {strides = array<i32>} : memref<81x8xf32, #tpu.memory_space<vmem>>, vector<80x8xf32>,
    %c2_84 = arith.constant 2 : index
    %c0_85 = arith.constant 0 : index
    %c0_86 = arith.constant 0 : index
    %82 = vector.load %arg7[%c2_84, %c0_85, %c0_86] : memref<4x4x8xbf16, #tpu.memory_space<vmem>>, vector<1x4x8xbf16>
    %83 = vector.shape_cast %82 : vector<1x4x8xbf16> to vector<4x8xbf16>
    %cst_87 = arith.constant dense<0.000000e+00> : vector<81x8xf32>
    %84 = tpu.matmul %70, %83, %cst_87 {dimension_numbers = #tpu.dot_dimension_numbers<[1], [0], [0], [1], [0, 0, 1, 1], [], []>} : vector<81x4xbf16>, vector<4x8xbf16>, vector<81x8xf32> -> vector<81x8xf32>
    %c0_88 = arith.constant 0 : index
    %c0_89 = arith.constant 0 : index
    %85 = vector.load %arg10[%c0_88, %c0_89] : memref<81x8xf32, #tpu.memory_space<vmem>>, vector<72x8xf32>
    %86 = vector.extract_strided_slice %84 {offsets = [9, 0], sizes = [72, 8], strides = [1, 1]} : vector<81x8xf32> to vector<72x8xf32>
    %87 = arith.addf %85, %86 : vector<72x8xf32>
    %c0_90 = arith.constant 0 : index
    %c0_91 = arith.constant 0 : index
    %88 = vector.load %arg10[%c0_90, %c0_91] : memref<81x8xf32, #tpu.memory_space<vmem>>, vector<72x8xf32>
    tpu.vector_store %arg10[%c0_90, %c0_91], %87 {strides = array<i32>} : memref<81x8xf32, #tpu.memory_space<vmem>>, vector<72x8xf32>,
    %c3_92 = arith.constant 3 : index
    %c0_93 = arith.constant 0 : index
    %c0_94 = arith.constant 0 : index
    %89 = vector.load %arg7[%c3_92, %c0_93, %c0_94] : memref<4x4x8xbf16, #tpu.memory_space<vmem>>, vector<1x4x8xbf16>
    %90 = vector.shape_cast %89 : vector<1x4x8xbf16> to vector<4x8xbf16>
    %cst_95 = arith.constant dense<0.000000e+00> : vector<81x8xf32>
    %91 = tpu.matmul %70, %90, %cst_95 {dimension_numbers = #tpu.dot_dimension_numbers<[1], [0], [0], [1], [0, 0, 1, 1], [], []>} : vector<81x4xbf16>, vector<4x8xbf16>, vector<81x8xf32> -> vector<81x8xf32>
    %c0_96 = arith.constant 0 : index
    %c0_97 = arith.constant 0 : index
    %92 = vector.load %arg10[%c0_96, %c0_97] : memref<81x8xf32, #tpu.memory_space<vmem>>, vector<71x8xf32>
    %93 = vector.extract_strided_slice %91 {offsets = [10, 0], sizes = [71, 8], strides = [1, 1]} : vector<81x8xf32> to vector<71x8xf32>
    %94 = arith.addf %92, %93 : vector<71x8xf32>
    %c0_98 = arith.constant 0 : index
    %c0_99 = arith.constant 0 : index
    %95 = vector.load %arg10[%c0_98, %c0_99] : memref<81x8xf32, #tpu.memory_space<vmem>>, vector<71x8xf32>
    tpu.vector_store %arg10[%c0_98, %c0_99], %94 {strides = array<i32>} : memref<81x8xf32, #tpu.memory_space<vmem>>, vector<71x8xf32>,
    %c0_100 = arith.constant 0 : index
    %c0_101 = arith.constant 0 : index
    %96 = vector.load %arg10[%c0_100, %c0_101] : memref<81x8xf32, #tpu.memory_space<vmem>>, vector<81x8xf32>
    %c0_102 = arith.constant 0 : index
    %c0_103 = arith.constant 0 : index
    %97 = vector.load %arg8[%c0_102, %c0_103] : memref<1x8xf32, #tpu.memory_space<vmem>>, vector<1x8xf32>
    %98 = vector.broadcast %97 : vector<1x8xf32> to vector<81x8xf32>
    %99 = arith.addf %96, %98 : vector<81x8xf32>
    %cst_104 = arith.constant 0.000000e+00 : f32
    %100 = vector.broadcast %cst_104 : f32 to vector<81x8xf32>
    %101 = arith.maximumf %99, %100 : vector<81x8xf32>
    %102 = vector.extract_strided_slice %35 {offsets = [0, 0], sizes = [71, 8], strides = [1, 1]} : vector<81x8xf32> to vector<71x8xf32>
    %103 = vector.extract_strided_slice %35 {offsets = [1, 0], sizes = [71, 8], strides = [1, 1]} : vector<81x8xf32> to vector<71x8xf32>
    %104 = arith.maximumf %102, %103 : vector<71x8xf32>
    %105 = vector.extract_strided_slice %35 {offsets = [9, 0], sizes = [71, 8], strides = [1, 1]} : vector<81x8xf32> to vector<71x8xf32>
    %106 = vector.extract_strided_slice %35 {offsets = [10, 0], sizes = [71, 8], strides = [1, 1]} : vector<81x8xf32> to vector<71x8xf32>
    %107 = arith.maximumf %105, %106 : vector<71x8xf32>
    %108 = arith.maximumf %104, %107 : vector<71x8xf32>
    %cst_105 = arith.constant 0.000000e+00 : f32
    %109 = vector.broadcast %cst_105 : f32 to vector<10x8xf32>
    %110 = tpu.concatenate %108, %109 in 0 : vector<71x8xf32>, vector<10x8xf32> -> vector<81x8xf32>
    %111 = tpu.concatenate %110, %101 in 1 : vector<81x8xf32>, vector<81x8xf32> -> vector<81x16xf32>
    %112 = arith.truncf %111 : vector<81x16xf32> to vector<81x16xbf16>
    %c0_106 = arith.constant 0 : index
    %c0_107 = arith.constant 0 : index
    %c0_108 = arith.constant 0 : index
    %113 = vector.load %arg9[%c0_106, %c0_107, %c0_108] : memref<1x81x16xbf16, #tpu.memory_space<vmem>>, vector<1x81x16xbf16>
    %114 = vector.shape_cast %113 : vector<1x81x16xbf16> to vector<81x16xbf16>
    %115 = vector.shape_cast %112 : vector<81x16xbf16> to vector<1x81x16xbf16>
    tpu.vector_store %arg9[%c0_106, %c0_107, %c0_108], %115 {strides = array<i32>} : memref<1x81x16xbf16, #tpu.memory_space<vmem>>, vector<1x81x16xbf16>,
    return
  }
  func.func @transform_0(%arg0: i32) -> (i32, i32, i32) {
    %c0_i32 = arith.constant 0 : i32
    %c0_i32_0 = arith.constant 0 : i32
    %c0_i32_1 = arith.constant 0 : i32
    return %arg0, %c0_i32, %c0_i32_0 : i32, i32, i32
  }
  func.func @transform_1(%arg0: i32) -> (i32, i32) {
    %c0_i32 = arith.constant 0 : i32
    %c0_i32_0 = arith.constant 0 : i32
    %c0_i32_1 = arith.constant 0 : i32
    return %c0_i32, %c0_i32_0 : i32, i32
  }
  func.func @transform_2(%arg0: i32) -> (i32, i32, i32) {
    %c0_i32 = arith.constant 0 : i32
    %c0_i32_0 = arith.constant 0 : i32
    %c0_i32_1 = arith.constant 0 : i32
    %c0_i32_2 = arith.constant 0 : i32
    return %c0_i32, %c0_i32_0, %c0_i32_1 : i32, i32, i32
  }
  func.func @transform_3(%arg0: i32) -> (i32, i32) {
    %c0_i32 = arith.constant 0 : i32
    %c0_i32_0 = arith.constant 0 : i32
    %c0_i32_1 = arith.constant 0 : i32
    return %c0_i32, %c0_i32_0 : i32, i32
  }
  func.func @transform_4(%arg0: i32) -> (i32, i32, i32) {
    %c0_i32 = arith.constant 0 : i32
    %c0_i32_0 = arith.constant 0 : i32
    %c0_i32_1 = arith.constant 0 : i32
    %c0_i32_2 = arith.constant 0 : i32
    return %c0_i32, %c0_i32_0, %c0_i32_1 : i32, i32, i32
  }
  func.func @transform_5(%arg0: i32) -> (i32, i32) {
    %c0_i32 = arith.constant 0 : i32
    %c0_i32_0 = arith.constant 0 : i32
    %c0_i32_1 = arith.constant 0 : i32
    return %c0_i32, %c0_i32_0 : i32, i32
  }
  func.func @transform_6(%arg0: i32) -> (i32, i32, i32) {
    %c0_i32 = arith.constant 0 : i32
    %c0_i32_0 = arith.constant 0 : i32
    %c0_i32_1 = arith.constant 0 : i32
    %c0_i32_2 = arith.constant 0 : i32
    return %c0_i32, %c0_i32_0, %c0_i32_1 : i32, i32, i32
  }
  func.func @transform_7(%arg0: i32) -> (i32, i32) {
    %c0_i32 = arith.constant 0 : i32
    %c0_i32_0 = arith.constant 0 : i32
    %c0_i32_1 = arith.constant 0 : i32
    return %c0_i32, %c0_i32_0 : i32, i32
  }
  func.func @transform_8(%arg0: i32) -> (i32, i32, i32) {
    %c0_i32 = arith.constant 0 : i32
    %c0_i32_0 = arith.constant 0 : i32
    %c0_i32_1 = arith.constant 0 : i32
    return %arg0, %c0_i32, %c0_i32_0 : i32, i32, i32
  }
}

module attributes {stable_mosaic.version = 11 : i64} {
  func.func @kernel(%arg0: i32, %arg1: memref<1x25x64xbf16, #tpu.memory_space<vmem>>, %arg2: memref<4x64x8xbf16, #tpu.memory_space<vmem>>, %arg3: memref<1x8xf32, #tpu.memory_space<vmem>>, %arg4: memref<8x16xbf16, #tpu.memory_space<vmem>>, %arg5: memref<1x16xf32, #tpu.memory_space<vmem>>, %arg6: memref<1x25x16xf32, #tpu.memory_space<vmem>>, %arg7: memref<25x8xf32, #tpu.memory_space<vmem>>) attributes {dimension_semantics = [#tpu.dimension_semantics<parallel>], iteration_bounds = array<i64: 2>, scalar_prefetch = 0 : i64, scratch_operands = 1 : i64, tpu.core_type = #tpu.core_type<tc>, window_params = [{transform_indices = @transform_0, window_bounds = array<i64: 1, 25, 64>}, {pipeline_mode = #tpu.pipeline_mode<synchronous>, transform_indices = @transform_1, window_bounds = array<i64: 4, 64, 8>}, {pipeline_mode = #tpu.pipeline_mode<synchronous>, transform_indices = @transform_2, window_bounds = array<i64: 1, 8>}, {pipeline_mode = #tpu.pipeline_mode<synchronous>, transform_indices = @transform_3, window_bounds = array<i64: 8, 16>}, {pipeline_mode = #tpu.pipeline_mode<synchronous>, transform_indices = @transform_4, window_bounds = array<i64: 1, 16>}, {transform_indices = @transform_5, window_bounds = array<i64: 1, 25, 16>}]} {
    %c0 = arith.constant 0 : index
    %c0_0 = arith.constant 0 : index
    %c0_1 = arith.constant 0 : index
    %0 = vector.load %arg1[%c0, %c0_0, %c0_1] : memref<1x25x64xbf16, #tpu.memory_space<vmem>>, vector<1x25x64xbf16>
    %1 = vector.shape_cast %0 : vector<1x25x64xbf16> to vector<25x64xbf16>
    %c0_2 = arith.constant 0 : index
    %c0_3 = arith.constant 0 : index
    %c0_4 = arith.constant 0 : index
    %2 = vector.load %arg2[%c0_2, %c0_3, %c0_4] : memref<4x64x8xbf16, #tpu.memory_space<vmem>>, vector<1x64x8xbf16>
    %3 = vector.shape_cast %2 : vector<1x64x8xbf16> to vector<64x8xbf16>
    %cst = arith.constant dense<0.000000e+00> : vector<25x8xf32>
    %4 = tpu.matmul %1, %3, %cst {dimension_numbers = #tpu.dot_dimension_numbers<[1], [0], [0], [1], [0, 0, 1, 1], [], []>} : vector<25x64xbf16>, vector<64x8xbf16>, vector<25x8xf32> -> vector<25x8xf32>
    %c0_5 = arith.constant 0 : index
    %c0_6 = arith.constant 0 : index
    %5 = vector.load %arg7[%c0_5, %c0_6] : memref<25x8xf32, #tpu.memory_space<vmem>>, vector<25x8xf32>
    tpu.vector_store %arg7[%c0_5, %c0_6], %4 {strides = array<i32>} : memref<25x8xf32, #tpu.memory_space<vmem>>, vector<25x8xf32>,
    %c1 = arith.constant 1 : index
    %c0_7 = arith.constant 0 : index
    %c0_8 = arith.constant 0 : index
    %6 = vector.load %arg2[%c1, %c0_7, %c0_8] : memref<4x64x8xbf16, #tpu.memory_space<vmem>>, vector<1x64x8xbf16>
    %7 = vector.shape_cast %6 : vector<1x64x8xbf16> to vector<64x8xbf16>
    %cst_9 = arith.constant dense<0.000000e+00> : vector<25x8xf32>
    %8 = tpu.matmul %1, %7, %cst_9 {dimension_numbers = #tpu.dot_dimension_numbers<[1], [0], [0], [1], [0, 0, 1, 1], [], []>} : vector<25x64xbf16>, vector<64x8xbf16>, vector<25x8xf32> -> vector<25x8xf32>
    %c0_10 = arith.constant 0 : index
    %c0_11 = arith.constant 0 : index
    %9 = vector.load %arg7[%c0_10, %c0_11] : memref<25x8xf32, #tpu.memory_space<vmem>>, vector<24x8xf32>
    %10 = vector.extract_strided_slice %8 {offsets = [1, 0], sizes = [24, 8], strides = [1, 1]} : vector<25x8xf32> to vector<24x8xf32>
    %11 = arith.addf %9, %10 : vector<24x8xf32>
    %c0_12 = arith.constant 0 : index
    %c0_13 = arith.constant 0 : index
    %12 = vector.load %arg7[%c0_12, %c0_13] : memref<25x8xf32, #tpu.memory_space<vmem>>, vector<24x8xf32>
    tpu.vector_store %arg7[%c0_12, %c0_13], %11 {strides = array<i32>} : memref<25x8xf32, #tpu.memory_space<vmem>>, vector<24x8xf32>,
    %c2 = arith.constant 2 : index
    %c0_14 = arith.constant 0 : index
    %c0_15 = arith.constant 0 : index
    %13 = vector.load %arg2[%c2, %c0_14, %c0_15] : memref<4x64x8xbf16, #tpu.memory_space<vmem>>, vector<1x64x8xbf16>
    %14 = vector.shape_cast %13 : vector<1x64x8xbf16> to vector<64x8xbf16>
    %cst_16 = arith.constant dense<0.000000e+00> : vector<25x8xf32>
    %15 = tpu.matmul %1, %14, %cst_16 {dimension_numbers = #tpu.dot_dimension_numbers<[1], [0], [0], [1], [0, 0, 1, 1], [], []>} : vector<25x64xbf16>, vector<64x8xbf16>, vector<25x8xf32> -> vector<25x8xf32>
    %c0_17 = arith.constant 0 : index
    %c0_18 = arith.constant 0 : index
    %16 = vector.load %arg7[%c0_17, %c0_18] : memref<25x8xf32, #tpu.memory_space<vmem>>, vector<20x8xf32>
    %17 = vector.extract_strided_slice %15 {offsets = [5, 0], sizes = [20, 8], strides = [1, 1]} : vector<25x8xf32> to vector<20x8xf32>
    %18 = arith.addf %16, %17 : vector<20x8xf32>
    %c0_19 = arith.constant 0 : index
    %c0_20 = arith.constant 0 : index
    %19 = vector.load %arg7[%c0_19, %c0_20] : memref<25x8xf32, #tpu.memory_space<vmem>>, vector<20x8xf32>
    tpu.vector_store %arg7[%c0_19, %c0_20], %18 {strides = array<i32>} : memref<25x8xf32, #tpu.memory_space<vmem>>, vector<20x8xf32>,
    %c3 = arith.constant 3 : index
    %c0_21 = arith.constant 0 : index
    %c0_22 = arith.constant 0 : index
    %20 = vector.load %arg2[%c3, %c0_21, %c0_22] : memref<4x64x8xbf16, #tpu.memory_space<vmem>>, vector<1x64x8xbf16>
    %21 = vector.shape_cast %20 : vector<1x64x8xbf16> to vector<64x8xbf16>
    %cst_23 = arith.constant dense<0.000000e+00> : vector<25x8xf32>
    %22 = tpu.matmul %1, %21, %cst_23 {dimension_numbers = #tpu.dot_dimension_numbers<[1], [0], [0], [1], [0, 0, 1, 1], [], []>} : vector<25x64xbf16>, vector<64x8xbf16>, vector<25x8xf32> -> vector<25x8xf32>
    %c0_24 = arith.constant 0 : index
    %c0_25 = arith.constant 0 : index
    %23 = vector.load %arg7[%c0_24, %c0_25] : memref<25x8xf32, #tpu.memory_space<vmem>>, vector<19x8xf32>
    %24 = vector.extract_strided_slice %22 {offsets = [6, 0], sizes = [19, 8], strides = [1, 1]} : vector<25x8xf32> to vector<19x8xf32>
    %25 = arith.addf %23, %24 : vector<19x8xf32>
    %c0_26 = arith.constant 0 : index
    %c0_27 = arith.constant 0 : index
    %26 = vector.load %arg7[%c0_26, %c0_27] : memref<25x8xf32, #tpu.memory_space<vmem>>, vector<19x8xf32>
    tpu.vector_store %arg7[%c0_26, %c0_27], %25 {strides = array<i32>} : memref<25x8xf32, #tpu.memory_space<vmem>>, vector<19x8xf32>,
    %c0_28 = arith.constant 0 : index
    %c0_29 = arith.constant 0 : index
    %27 = vector.load %arg7[%c0_28, %c0_29] : memref<25x8xf32, #tpu.memory_space<vmem>>, vector<25x8xf32>
    %c0_30 = arith.constant 0 : index
    %c0_31 = arith.constant 0 : index
    %28 = vector.load %arg3[%c0_30, %c0_31] : memref<1x8xf32, #tpu.memory_space<vmem>>, vector<1x8xf32>
    %29 = vector.broadcast %28 : vector<1x8xf32> to vector<25x8xf32>
    %30 = arith.addf %27, %29 : vector<25x8xf32>
    %cst_32 = arith.constant 0.000000e+00 : f32
    %31 = vector.broadcast %cst_32 : f32 to vector<25x8xf32>
    %32 = arith.maximumf %30, %31 : vector<25x8xf32>
    %33 = arith.truncf %32 : vector<25x8xf32> to vector<25x8xbf16>
    %c0_33 = arith.constant 0 : index
    %c0_34 = arith.constant 0 : index
    %34 = vector.load %arg4[%c0_33, %c0_34] : memref<8x16xbf16, #tpu.memory_space<vmem>>, vector<8x16xbf16>
    %cst_35 = arith.constant dense<0.000000e+00> : vector<25x16xf32>
    %35 = tpu.matmul %33, %34, %cst_35 {dimension_numbers = #tpu.dot_dimension_numbers<[1], [0], [0], [1], [0, 0, 1, 1], [], []>} : vector<25x8xbf16>, vector<8x16xbf16>, vector<25x16xf32> -> vector<25x16xf32>
    %c0_36 = arith.constant 0 : index
    %c0_37 = arith.constant 0 : index
    %36 = vector.load %arg5[%c0_36, %c0_37] : memref<1x16xf32, #tpu.memory_space<vmem>>, vector<1x16xf32>
    %37 = vector.broadcast %36 : vector<1x16xf32> to vector<25x16xf32>
    %38 = arith.addf %35, %37 : vector<25x16xf32>
    %cst_38 = arith.constant 0.000000e+00 : f32
    %39 = vector.broadcast %cst_38 : f32 to vector<25x16xf32>
    %40 = arith.maximumf %38, %39 : vector<25x16xf32>
    %c0_39 = arith.constant 0 : index
    %c0_40 = arith.constant 0 : index
    %c0_41 = arith.constant 0 : index
    %41 = vector.load %arg6[%c0_39, %c0_40, %c0_41] : memref<1x25x16xf32, #tpu.memory_space<vmem>>, vector<1x25x16xf32>
    %42 = vector.shape_cast %41 : vector<1x25x16xf32> to vector<25x16xf32>
    %43 = vector.shape_cast %40 : vector<25x16xf32> to vector<1x25x16xf32>
    tpu.vector_store %arg6[%c0_39, %c0_40, %c0_41], %43 {strides = array<i32>} : memref<1x25x16xf32, #tpu.memory_space<vmem>>, vector<1x25x16xf32>,
    return
  }
  func.func @transform_0(%arg0: i32) -> (i32, i32, i32) {
    %c0_i32 = arith.constant 0 : i32
    %c0_i32_0 = arith.constant 0 : i32
    %c0_i32_1 = arith.constant 0 : i32
    return %arg0, %c0_i32, %c0_i32_0 : i32, i32, i32
  }
  func.func @transform_1(%arg0: i32) -> (i32, i32, i32) {
    %c0_i32 = arith.constant 0 : i32
    %c0_i32_0 = arith.constant 0 : i32
    %c0_i32_1 = arith.constant 0 : i32
    %c0_i32_2 = arith.constant 0 : i32
    return %c0_i32, %c0_i32_0, %c0_i32_1 : i32, i32, i32
  }
  func.func @transform_2(%arg0: i32) -> (i32, i32) {
    %c0_i32 = arith.constant 0 : i32
    %c0_i32_0 = arith.constant 0 : i32
    %c0_i32_1 = arith.constant 0 : i32
    return %c0_i32, %c0_i32_0 : i32, i32
  }
  func.func @transform_3(%arg0: i32) -> (i32, i32) {
    %c0_i32 = arith.constant 0 : i32
    %c0_i32_0 = arith.constant 0 : i32
    %c0_i32_1 = arith.constant 0 : i32
    return %c0_i32, %c0_i32_0 : i32, i32
  }
  func.func @transform_4(%arg0: i32) -> (i32, i32) {
    %c0_i32 = arith.constant 0 : i32
    %c0_i32_0 = arith.constant 0 : i32
    %c0_i32_1 = arith.constant 0 : i32
    return %c0_i32, %c0_i32_0 : i32, i32
  }
  func.func @transform_5(%arg0: i32) -> (i32, i32, i32) {
    %c0_i32 = arith.constant 0 : i32
    %c0_i32_0 = arith.constant 0 : i32
    %c0_i32_1 = arith.constant 0 : i32
    return %arg0, %c0_i32, %c0_i32_0 : i32, i32, i32
  }
}

</mosaic_0001>

<llo_original>
// kernel: stem_block_forward.3
$region0: #{stem_block_forward.3}
  #allocation0 [shape = 'u32[]', space=smem, size = 0x4, offset = 0x4, fixed_abs, tag = 'smem constant byte address 0x4 - core index']
  #allocation1 [shape = 'u32[144,128]{1,0:T(1,128)}', space=vmem, size = 0x12000, scoped, tag = 'internal scratch']
  #allocation2 [shape = 'f32[25,8]{1,0:T(8,128)}', space=vmem, size = 0x4000, scoped, tag = 'scratch operand']
  %s0 = inlined_call_operand.vmem [shape: bf16[2,25,64], index: 0, kind: input, shape index: {}]
  %s1 = inlined_call_operand.vmem [shape: bf16[4,64,8], index: 1, kind: input, shape index: {}]
  %s2 = inlined_call_operand.vmem [shape: f32[1,8], index: 2, kind: input, shape index: {}]
  %s3 = inlined_call_operand.vmem [shape: bf16[8,16], index: 3, kind: input, shape index: {}]
  %s4 = inlined_call_operand.vmem [shape: f32[1,16], index: 4, kind: input, shape index: {}]
  %s5 = inlined_call_operand.vmem [shape: f32[2,25,16], index: 5, kind: output, shape index: {}]
  %s6 = sld [smem:[#allocation0]]
  $region53: #{stem_block_forward.3} parent=0
    _
  %s8 = ssub.s32 1, %s6
  %s9 = scalar_select 0, %s8, %s6
  loop: start=0, step=1, limit=4
  $region2: #{stem_block_forward.3} parent=0 // loop_pre_header
    _
  $region3: #{stem_block_forward.3} parent=0 // loop_header
    %s11 = sphi 0, %s15
    %p12 = scmp.ge.s32.totalorder %s11, 4
    %s21 = sphi 0, %s23
    %s24 = sphi 0, %s21
    %s25 = sphi 0, %s24
    %s41 = sphi 0, %s25
    %s45 = sphi 0, %s45
    %s47 = sphi 0, %s45
    %s48 = sphi 0, %s47
    %s62 = sphi 0, %s48
    %s66 = sphi 0, %s66
    %s68 = sphi 0, %s66
    %s69 = sphi 0, %s68
    %s83 = sphi 0, %s69
    %s87 = sphi 0, %s87
    %s89 = sphi 0, %s87
    %s90 = sphi 0, %s89
    %s104 = sphi 0, %s90
    %s108 = sphi 0, %s108
    %s110 = sphi 0, %s108
    %s111 = sphi 0, %s110
    %s125 = sphi 0, %s111
    %s131 = sphi 0, %s133
    %s134 = sphi 0, %s131
    %s135 = sphi 0, %s134
    %s151 = sphi 0, %s135
  $region4: #{stem_block_forward.3} parent=0 // loop_header_branch
    %14 = sbr.rel (%p12) target = $region8
  $region5: #{stem_block_forward.3} parent=0 // loop_body
    %s16 = ssub.s32 %s11, 1
    %s17 = ssub.s32 %s11, 2
    %s18 = sadd.s32 %s11, 1
    %s19 = ssub.s32 %s11, %s18
    %p20 = scmp.eq.s32.totalorder %s19, 0
    %s22 = sadd.s32 %s21, 1
    %s23 = scalar_select %p20, %s21, %s22
    %p26 = pneg %p20
    %p27 = scmp.eq.s32.totalorder %s11, 1
    %p28 = por %p26, %p27
    %p29 = scmp.ne.s32.totalorder %s21, %s24
    %p30 = scmp.eq.s32.totalorder %s11, 0
    %p31 = por %p29, %p30
    %p32 = scmp.ne.s32.totalorder %s21, %s24
    %p33 = scmp.eq.s32.totalorder %s16, 1
    %p34 = por %p32, %p33
    %p35 = scmp.ne.s32.totalorder %s24, %s25
    %p36 = scmp.eq.s32.totalorder %s16, 0
    %p37 = por %p35, %p36
    %p38 = scmp.ne.s32.totalorder %s24, %s25
    %p39 = scmp.eq.s32.totalorder %s17, 1
    %p40 = por %p38, %p39
    %p42 = scmp.ne.s32.totalorder %s25, %s41
    %p43 = scmp.eq.s32.totalorder %s17, 0
    %p44 = por %p42, %p43
    %s46 = sadd.s32 %s45, 1
    %p49 = scmp.eq.s32.totalorder %s11, 1
    %p50 = scmp.ne.s32.totalorder %s45, %s47
    %p51 = scmp.eq.s32.totalorder %s11, 0
    %p52 = por %p50, %p51
    %p53 = scmp.ne.s32.totalorder %s45, %s47
    %p54 = scmp.eq.s32.totalorder %s16, 1
    %p55 = por %p53, %p54
    %p56 = scmp.ne.s32.totalorder %s47, %s48
    %p57 = scmp.eq.s32.totalorder %s16, 0
    %p58 = por %p56, %p57
    %p59 = scmp.ne.s32.totalorder %s47, %s48
    %p60 = scmp.eq.s32.totalorder %s17, 1
    %p61 = por %p59, %p60
    %p63 = scmp.ne.s32.totalorder %s48, %s62
    %p64 = scmp.eq.s32.totalorder %s17, 0
    %p65 = por %p63, %p64
    %s67 = sadd.s32 %s66, 1
    %p70 = scmp.eq.s32.totalorder %s11, 1
    %p71 = scmp.ne.s32.totalorder %s66, %s68
    %p72 = scmp.eq.s32.totalorder %s11, 0
    %p73 = por %p71, %p72
    %p74 = scmp.ne.s32.totalorder %s66, %s68
    %p75 = scmp.eq.s32.totalorder %s16, 1
    %p76 = por %p74, %p75
    %p77 = scmp.ne.s32.totalorder %s68, %s69
    %p78 = scmp.eq.s32.totalorder %s16, 0
    %p79 = por %p77, %p78
    %p80 = scmp.ne.s32.totalorder %s68, %s69
    %p81 = scmp.eq.s32.totalorder %s17, 1
    %p82 = por %p80, %p81
    %p84 = scmp.ne.s32.totalorder %s69, %s83
    %p85 = scmp.eq.s32.totalorder %s17, 0
    %p86 = por %p84, %p85
    %s88 = sadd.s32 %s87, 1
    %p91 = scmp.eq.s32.totalorder %s11, 1
    %p92 = scmp.ne.s32.totalorder %s87, %s89
    %p93 = scmp.eq.s32.totalorder %s11, 0
    %p94 = por %p92, %p93
    %p95 = scmp.ne.s32.totalorder %s87, %s89
    %p96 = scmp.eq.s32.totalorder %s16, 1
    %p97 = por %p95, %p96
    %p98 = scmp.ne.s32.totalorder %s89, %s90
    %p99 = scmp.eq.s32.totalorder %s16, 0
    %p100 = por %p98, %p99
    %p101 = scmp.ne.s32.totalorder %s89, %s90
    %p102 = scmp.eq.s32.totalorder %s17, 1
    %p103 = por %p101, %p102
    %p105 = scmp.ne.s32.totalorder %s90, %s104
    %p106 = scmp.eq.s32.totalorder %s17, 0
    %p107 = por %p105, %p106
    %s109 = sadd.s32 %s108, 1
    %p112 = scmp.eq.s32.totalorder %s11, 1
    %p113 = scmp.ne.s32.totalorder %s108, %s110
    %p114 = scmp.eq.s32.totalorder %s11, 0
    %p115 = por %p113, %p114
    %p116 = scmp.ne.s32.totalorder %s108, %s110
    %p117 = scmp.eq.s32.totalorder %s16, 1
    %p118 = por %p116, %p117
    %p119 = scmp.ne.s32.totalorder %s110, %s111
    %p120 = scmp.eq.s32.totalorder %s16, 0
    %p121 = por %p119, %p120
    %p122 = scmp.ne.s32.totalorder %s110, %s111
    %p123 = scmp.eq.s32.totalorder %s17, 1
    %p124 = por %p122, %p123
    %p126 = scmp.ne.s32.totalorder %s111, %s125
    %p127 = scmp.eq.s32.totalorder %s17, 0
    %p128 = por %p126, %p127
    %s129 = ssub.s32 %s11, %s18
    %p130 = scmp.eq.s32.totalorder %s129, 0
    %s132 = sadd.s32 %s131, 1
    %s133 = scalar_select %p130, %s131, %s132
    %p136 = pneg %p130
    %p137 = scmp.eq.s32.totalorder %s11, 1
    %p138 = por %p136, %p137
    %p139 = scmp.ne.s32.totalorder %s131, %s134
    %p140 = scmp.eq.s32.totalorder %s11, 0
    %p141 = por %p139, %p140
    %p142 = scmp.ne.s32.totalorder %s131, %s134
    %p143 = scmp.eq.s32.totalorder %s16, 1
    %p144 = por %p142, %p143
    %p145 = scmp.ne.s32.totalorder %s134, %s135
    %p146 = scmp.eq.s32.totalorder %s16, 0
    %p147 = por %p145, %p146
    %p148 = scmp.ne.s32.totalorder %s134, %s135
    %p149 = scmp.eq.s32.totalorder %s17, 1
    %p150 = por %p148, %p149
    %p152 = scmp.ne.s32.totalorder %s135, %s151
    %p153 = scmp.eq.s32.totalorder %s17, 0
    %p154 = por %p152, %p153
    %p155 = scmp.le.s32.totalorder 1, %s11
    %p156 = scmp.lt.s32.totalorder %s11, 3
    %p157 = pnand %p155, %p156
    %p158 = pneg %p157
    // Predicated region
    $region9: #{stem_block_forward.3} parent=5 // pred_check
      _
    $region10: #{stem_block_forward.3} parent=5 // pred_check_branch
      %160 = sbr.rel (%p157) target = $region12
    $region11: #{stem_block_forward.3} parent=5 // pred_region
      %s161 = ssub.s32 %s11, 1
      // Predicated region
      $region13: #{stem_block_forward.3} parent=11 // pred_check
        %p162 = pneg %p58
      $region14: #{stem_block_forward.3} parent=11 // pred_check_branch
        %164 = sbr.rel (%p162) target = $region16
      $region15: #{stem_block_forward.3} parent=11 // pred_region
        _
      $region16: #{stem_block_forward.3} parent=11 // pred_fallthru
        _
      // Predicated region
      $region17: #{stem_block_forward.3} parent=11 // pred_check
        %p165 = pneg %p79
      $region18: #{stem_block_forward.3} parent=11 // pred_check_branch
        %167 = sbr.rel (%p165) target = $region20
      $region19: #{stem_block_forward.3} parent=11 // pred_region
        _
      $region20: #{stem_block_forward.3} parent=11 // pred_fallthru
        _
      // Predicated region
      $region21: #{stem_block_forward.3} parent=11 // pred_check
        %p168 = pneg %p100
      $region22: #{stem_block_forward.3} parent=11 // pred_check_branch
        %170 = sbr.rel (%p168) target = $region24
      $region23: #{stem_block_forward.3} parent=11 // pred_region
        _
      $region24: #{stem_block_forward.3} parent=11 // pred_fallthru
        _
      // Predicated region
      $region25: #{stem_block_forward.3} parent=11 // pred_check
        %p171 = pneg %p121
      $region26: #{stem_block_forward.3} parent=11 // pred_check_branch
        %173 = sbr.rel (%p171) target = $region28
      $region27: #{stem_block_forward.3} parent=11 // pred_region
        _
      $region28: #{stem_block_forward.3} parent=11 // pred_fallthru
        _
    $region12: #{stem_block_forward.3} parent=5 // pred_fallthru
      _
    %p174 = scmp.lt.s32.totalorder %s11, 2
    // Predicated region
    $region29: #{stem_block_forward.3} parent=5 // pred_check
      %p175 = pneg %p174
    $region30: #{stem_block_forward.3} parent=5 // pred_check_branch
      %177 = sbr.rel (%p175) target = $region32
    $region31: #{stem_block_forward.3} parent=5 // pred_region
      // Predicated region
      $region33: #{stem_block_forward.3} parent=31 // pred_check
        %p178 = pneg %p31
      $region34: #{stem_block_forward.3} parent=31 // pred_check_branch
        %180 = sbr.rel (%p178) target = $region36
      $region35: #{stem_block_forward.3} parent=31 // pred_region
        %p181 = scmp.lt.s32.totalorder %s11, 1
        %s182 = scalar_select %p181, %s11, 1
        %s183 = smul.addr %s182, 4
        %s184 = smul.addr %s183, 4
        %s185 = scalar_lea.vmem %s0, %s184
      $region36: #{stem_block_forward.3} parent=31 // pred_fallthru
        _
    $region32: #{stem_block_forward.3} parent=5 // pred_fallthru
      _
    %p186 = scmp.le.s32.totalorder 1, %s11
    %p187 = scmp.lt.s32.totalorder %s11, 3
    %p188 = pnand %p186, %p187
    %p189 = pneg %p188
    // Predicated region
    $region37: #{stem_block_forward.3} parent=5 // pred_check
      _
    $region38: #{stem_block_forward.3} parent=5 // pred_check_branch
      %191 = sbr.rel (%p188) target = $region40
    $region39: #{stem_block_forward.3} parent=5 // pred_region
      %s192 = ssub.s32 %s11, 1
      %p193 = scmp.lt.s32.totalorder %s16, 1
      %s194 = scalar_select %p193, %s16, 1
      %s195 = smul.addr %s194, 4
      %s196 = smul.addr %s195, 4
      %s197 = scalar_lea.vmem %s0, %s196
      %p198 = pneg %p37
      %p199 = pneg %p34
      %p200 = pneg %p58
      %p201 = pneg %p55
      %p202 = pneg %p79
      %p203 = pneg %p76
      %p204 = pneg %p100
      %p205 = pneg %p97
      %p206 = pneg %p121
      %p207 = pneg %p118
      %p208 = pneg %p147
      %p209 = pneg %p144
      %p210 = scmp.lt.s32.totalorder %s16, 1
      %s211 = scalar_select %p210, %s16, 1
      %s212 = smul.addr %s211, 4
      %s213 = smul.addr %s212, 8
      %s214 = scalar_lea.vmem %s5, %s213
      %p215 = scmp.lt.s32.totalorder %s16, 1
      %s216 = scalar_select %p215, %s16, 1
      %s217 = smul.addr %s216, 4
      %s218 = smul.addr %s217, 4
      %s219 = scalar_lea.vmem %s0, %s218
      %p220 = scmp.lt.s32.totalorder %s16, 1
      %s221 = scalar_select %p220, %s16, 1
      %s222 = smul.addr %s221, 4
      %s223 = smul.addr %s222, 8
      %s224 = scalar_lea.vmem %s5, %s223
      %v226 = vld [vmem:[%s219] sm:$0xf]
      %v227 = vld [vmem:[%s219 + $0x4] sm:$0xf]
      %v228 = vld [vmem:[%s219 + $0x8] sm:$0xf]
      %v229 = vld [vmem:[%s219 + $0xc] sm:$0x1]
      %v230 = vld [vmem:[%s1] sm:$0xf]
      %v231 = vld [vmem:[%s1 + $0x4] sm:$0xf]
      %v232 = vld [vmem:[%s1 + $0x8] sm:$0xf]
      %v233 = vld [vmem:[%s1 + $0xc] sm:$0xf]
      %v234 = vld [vmem:[%s1 + $0x10] sm:$0xf]
      %v235 = vld [vmem:[%s1 + $0x14] sm:$0xf]
      %v236 = vld [vmem:[%s1 + $0x18] sm:$0xf]
      %v237 = vld [vmem:[%s1 + $0x1c] sm:$0xf]
      %v242 = vunpack.c.l.b16 %v226
      %v243 = vunpack.c.l.b16 %v227
      %v244 = vunpack.c.l.b16 %v228
      %v245 = vunpack.c.l.b16 %v229
      %v246 = vpack.c.b16 %v243, %v242
      %v247 = vpack.c.b16 %v245, %v244
      %v256 = vunpack.c.l.b16 %v230
      %v257 = vunpack.c.l.b16 %v231
      %v258 = vunpack.c.l.b16 %v232
      %v259 = vunpack.c.l.b16 %v233
      %v260 = vunpack.c.l.b16 %v234
      %v261 = vunpack.c.l.b16 %v235
      %v262 = vunpack.c.l.b16 %v236
      %v263 = vunpack.c.l.b16 %v237
      %v264 = vpack.c.b16 %v257, %v256
      %v265 = vpack.c.b16 %v259, %v258
      %v266 = vpack.c.b16 %v261, %v260
      %v267 = vpack.c.b16 %v263, %v262
      %vm272 = vcmask 523264
      %v274 = vsel %vm272, %v246, 0
      %v277 = vsel %vm272, %v247, 0
      %279 = vmatprep.subr.bf16.mxu0 0
      %280 = vmatpush1.bf16.msra.mxu0 0
      %281 = vmatprep.subr.bf16.mxu0 0
      %282 = vmatpush1.bf16.msra.mxu0 0
      %283 = vmatprep.subr.bf16.mxu0 0
      %284 = vmatpush1.bf16.msra.mxu0 0
      %285 = vmatprep.subr.bf16.mxu0 0
      %286 = vmatpush1.bf16.msra.mxu0 0
      %287 = vmatprep.subr.bf16.mxu0 0
      %288 = vmatpush1.bf16.msra.mxu0 %v267
      %289 = vmatprep.subr.bf16.mxu0 0
      %290 = vmatpush1.bf16.msra.mxu0 %v266
      %291 = vmatprep.subr.bf16.mxu0 0
      %292 = vmatpush1.bf16.msra.mxu0 %v265
      %293 = vmatprep.subr.bf16.mxu0 0
      %294 = vmatpush1.bf16.msra.mxu0 %v264
      %295 = vmatprep.subr.bf16.mxu0 0
      %296 = vmatpush2.bf16.msra.mxu0 0
      %297 = vmatprep.subr.bf16.mxu0 0
      %298 = vmatpush2.bf16.msra.mxu0 0
      %299 = vmatprep.subr.bf16.mxu0 0
      %300 = vmatpush2.bf16.msra.mxu0 0
      %301 = vmatprep.subr.bf16.mxu0 0
      %302 = vmatpush2.bf16.msra.mxu0 0
      %303 = vmatprep.subr.bf16.mxu0 0
      %304 = vmatpush2.bf16.msra.mxu0 0
      %305 = vmatprep.subr.bf16.mxu0 0
      %306 = vmatpush2.bf16.msra.mxu0 0
      %307 = vmatprep.subr.bf16.mxu0 0
      %308 = vmatpush2.bf16.msra.mxu0 0
      %309 = vmatprep.subr.bf16.mxu0 0
      %310 = vmatpush2.bf16.msra.mxu0 0
      %311 = vmatprep.mubr.bf16.mxu0 0
      %312 = vmatmul.mubr.bf16.gmra.mxu0 %v274
      %v313 = vpop.f32.mrf.mxu0
      %v314 = vadd.f32 0.0, %v313
      %v315 = vpop.f32.mrf.mxu0
      %v316 = vpop.f32.mrf.mxu0
      %v317 = vadd.f32 0.0, %v316
      %v318 = vpop.f32.mrf.mxu0
      %319 = vmatprep.mubr.bf16.mxu0 0
      %320 = vmatmul.mubr.bf16.gmra.mxu0 %v277
      %v321 = vpop.f32.mrf.mxu0
      %v322 = vadd.f32 0.0, %v321
      %v323 = vpop.f32.mrf.mxu0
      %v324 = vpop.f32.mrf.mxu0
      %v325 = vadd.f32 0.0, %v324
      %v326 = vpop.f32.mrf.mxu0
      %327 = vdwg.mxu0
      %vm328 = vcmask 64512
      %329 = vst.msk [vmem:[#allocation2] sm:$0xff] %vm328, %v314
      %330 = vst.msk [vmem:[#allocation2 + $0x8] sm:$0xff] %vm328, %v317
      %331 = vst.msk [vmem:[#allocation2 + $0x10] sm:$0xff] %vm328, %v322
      %vm332 = vcmask 57344
      %333 = vst.msk [vmem:[#allocation2 + $0x18] sm:$0x1] %vm332, %v325
      %s334 = scalar_lea.vmem %s1, 32
      %v335 = vld [vmem:[%s334] sm:$0xf]
      %v336 = vld [vmem:[%s334 + $0x4] sm:$0xf]
      %v337 = vld [vmem:[%s334 + $0x8] sm:$0xf]
      %v338 = vld [vmem:[%s334 + $0xc] sm:$0xf]
      %v339 = vld [vmem:[%s334 + $0x10] sm:$0xf]
      %v340 = vld [vmem:[%s334 + $0x14] sm:$0xf]
      %v341 = vld [vmem:[%s334 + $0x18] sm:$0xf]
      %v342 = vld [vmem:[%s334 + $0x1c] sm:$0xf]
      %v351 = vunpack.c.l.b16 %v335
      %v352 = vunpack.c.l.b16 %v336
      %v353 = vunpack.c.l.b16 %v337
      %v354 = vunpack.c.l.b16 %v338
      %v355 = vunpack.c.l.b16 %v339
      %v356 = vunpack.c.l.b16 %v340
      %v357 = vunpack.c.l.b16 %v341
      %v358 = vunpack.c.l.b16 %v342
      %v359 = vpack.c.b16 %v352, %v351
      %v360 = vpack.c.b16 %v354, %v353
      %v361 = vpack.c.b16 %v356, %v355
      %v362 = vpack.c.b16 %v358, %v357
      %367 = vmatprep.subr.bf16.mxu0 0
      %368 = vmatpush1.bf16.msra.mxu0 0
      %369 = vmatprep.subr.bf16.mxu0 0
      %370 = vmatpush1.bf16.msra.mxu0 0
      %371 = vmatprep.subr.bf16.mxu0 0
      %372 = vmatpush1.bf16.msra.mxu0 0
      %373 = vmatprep.subr.bf16.mxu0 0
      %374 = vmatpush1.bf16.msra.mxu0 0
      %375 = vmatprep.subr.bf16.mxu0 0
      %376 = vmatpush1.bf16.msra.mxu0 %v362
      %377 = vmatprep.subr.bf16.mxu0 0
      %378 = vmatpush1.bf16.msra.mxu0 %v361
      %379 = vmatprep.subr.bf16.mxu0 0
      %380 = vmatpush1.bf16.msra.mxu0 %v360
      %381 = vmatprep.subr.bf16.mxu0 0
      %382 = vmatpush1.bf16.msra.mxu0 %v359
      %383 = vmatprep.subr.bf16.mxu0 0
      %384 = vmatpush2.bf16.msra.mxu0 0
      %385 = vmatprep.subr.bf16.mxu0 0
      %386 = vmatpush2.bf16.msra.mxu0 0
      %387 = vmatprep.subr.bf16.mxu0 0
      %388 = vmatpush2.bf16.msra.mxu0 0
      %389 = vmatprep.subr.bf16.mxu0 0
      %390 = vmatpush2.bf16.msra.mxu0 0
      %391 = vmatprep.subr.bf16.mxu0 0
      %392 = vmatpush2.bf16.msra.mxu0 0
      %393 = vmatprep.subr.bf16.mxu0 0
      %394 = vmatpush2.bf16.msra.mxu0 0
      %395 = vmatprep.subr.bf16.mxu0 0
      %396 = vmatpush2.bf16.msra.mxu0 0
      %397 = vmatprep.subr.bf16.mxu0 0
      %398 = vmatpush2.bf16.msra.mxu0 0
      %399 = vmatprep.mubr.bf16.mxu0 0
      %400 = vmatmul.mubr.bf16.gmra.mxu0 %v274
      %v401 = vpop.f32.mrf.mxu0
      %v402 = vadd.f32 0.0, %v401
      %v403 = vpop.f32.mrf.mxu0
      %v404 = vpop.f32.mrf.mxu0
      %v405 = vadd.f32 0.0, %v404
      %v406 = vpop.f32.mrf.mxu0
      %407 = vmatprep.mubr.bf16.mxu0 0
      %408 = vmatmul.mubr.bf16.gmra.mxu0 %v277
      %v409 = vpop.f32.mrf.mxu0
      %v410 = vadd.f32 0.0, %v409
      %v411 = vpop.f32.mrf.mxu0
      %v412 = vpop.f32.mrf.mxu0
      %v413 = vadd.f32 0.0, %v412
      %v414 = vpop.f32.mrf.mxu0
      %415 = vdwg.mxu0
      %v416 = vld [vmem:[#allocation2] sm:$0xff]
      %v417 = vld [vmem:[#allocation2 + $0x8] sm:$0xff]
      %v418 = vld [vmem:[#allocation2 + $0x10] sm:$0xff]
      %vm423 = vcmask 1046528
      %v424 = vrot.slane %v402, 1
      %v425 = vrot.slane %v405, 1
      %v426 = vsel %vm423, %v424, %v425
      %v427 = vrot.slane %v410, 1
      %v428 = vsel %vm423, %v425, %v427
      %v429 = vrot.slane %v413, 1
      %v430 = vsel %vm423, %v427, %v429
      %v434 = vadd.f32 %v416, %v426
      %v435 = vadd.f32 %v417, %v428
      %v436 = vadd.f32 %v418, %v430
      %437 = vst.msk [vmem:[#allocation2] sm:$0xff] %vm328, %v434
      %438 = vst.msk [vmem:[#allocation2 + $0x8] sm:$0xff] %vm328, %v435
      %439 = vst.msk [vmem:[#allocation2 + $0x10] sm:$0xff] %vm328, %v436
      %s440 = scalar_lea.vmem %s1, 64
      %v441 = vld [vmem:[%s440] sm:$0xf]
      %v442 = vld [vmem:[%s440 + $0x4] sm:$0xf]
      %v443 = vld [vmem:[%s440 + $0x8] sm:$0xf]
      %v444 = vld [vmem:[%s440 + $0xc] sm:$0xf]
      %v445 = vld [vmem:[%s440 + $0x10] sm:$0xf]
      %v446 = vld [vmem:[%s440 + $0x14] sm:$0xf]
      %v447 = vld [vmem:[%s440 + $0x18] sm:$0xf]
      %v448 = vld [vmem:[%s440 + $0x1c] sm:$0xf]
      %v457 = vunpack.c.l.b16 %v441
      %v458 = vunpack.c.l.b16 %v442
      %v459 = vunpack.c.l.b16 %v443
      %v460 = vunpack.c.l.b16 %v444
      %v461 = vunpack.c.l.b16 %v445
      %v462 = vunpack.c.l.b16 %v446
      %v463 = vunpack.c.l.b16 %v447
      %v464 = vunpack.c.l.b16 %v448
      %v465 = vpack.c.b16 %v458, %v457
      %v466 = vpack.c.b16 %v460, %v459
      %v467 = vpack.c.b16 %v462, %v461
      %v468 = vpack.c.b16 %v464, %v463
      %473 = vmatprep.subr.bf16.mxu0 0
      %474 = vmatpush1.bf16.msra.mxu0 0
      %475 = vmatprep.subr.bf16.mxu0 0
      %476 = vmatpush1.bf16.msra.mxu0 0
      %477 = vmatprep.subr.bf16.mxu0 0
      %478 = vmatpush1.bf16.msra.mxu0 0
      %479 = vmatprep.subr.bf16.mxu0 0
      %480 = vmatpush1.bf16.msra.mxu0 0
      %481 = vmatprep.subr.bf16.mxu0 0
      %482 = vmatpush1.bf16.msra.mxu0 %v468
      %483 = vmatprep.subr.bf16.mxu0 0
      %484 = vmatpush1.bf16.msra.mxu0 %v467
      %485 = vmatprep.subr.bf16.mxu0 0
      %486 = vmatpush1.bf16.msra.mxu0 %v466
      %487 = vmatprep.subr.bf16.mxu0 0
      %488 = vmatpush1.bf16.msra.mxu0 %v465
      %489 = vmatprep.subr.bf16.mxu0 0
      %490 = vmatpush2.bf16.msra.mxu0 0
      %491 = vmatprep.subr.bf16.mxu0 0
      %492 = vmatpush2.bf16.msra.mxu0 0
      %493 = vmatprep.subr.bf16.mxu0 0
      %494 = vmatpush2.bf16.msra.mxu0 0
      %495 = vmatprep.subr.bf16.mxu0 0
      %496 = vmatpush2.bf16.msra.mxu0 0
      %497 = vmatprep.subr.bf16.mxu0 0
      %498 = vmatpush2.bf16.msra.mxu0 0
      %499 = vmatprep.subr.bf16.mxu0 0
      %500 = vmatpush2.bf16.msra.mxu0 0
      %501 = vmatprep.subr.bf16.mxu0 0
      %502 = vmatpush2.bf16.msra.mxu0 0
      %503 = vmatprep.subr.bf16.mxu0 0
      %504 = vmatpush2.bf16.msra.mxu0 0
      %505 = vmatprep.mubr.bf16.mxu0 0
      %506 = vmatmul.mubr.bf16.gmra.mxu0 %v274
      %v507 = vpop.f32.mrf.mxu0
      %v508 = vadd.f32 0.0, %v507
      %v509 = vpop.f32.mrf.mxu0
      %v510 = vpop.f32.mrf.mxu0
      %v511 = vadd.f32 0.0, %v510
      %v512 = vpop.f32.mrf.mxu0
      %513 = vmatprep.mubr.bf16.mxu0 0
      %514 = vmatmul.mubr.bf16.gmra.mxu0 %v277
      %v515 = vpop.f32.mrf.mxu0
      %v516 = vadd.f32 0.0, %v515
      %v517 = vpop.f32.mrf.mxu0
      %v518 = vpop.f32.mrf.mxu0
      %v519 = vadd.f32 0.0, %v518
      %v520 = vpop.f32.mrf.mxu0
      %521 = vdwg.mxu0
      %v522 = vld [vmem:[#allocation2] sm:$0xff]
      %v523 = vld [vmem:[#allocation2 + $0x8] sm:$0xff]
      %v524 = vld [vmem:[#allocation2 + $0x10] sm:$0xf]
      %vm529 = vcmask 1042432
      %v530 = vrot.slane %v508, 5
      %v531 = vrot.slane %v511, 5
      %v532 = vsel %vm529, %v530, %v531
      %v533 = vrot.slane %v516, 5
      %v534 = vsel %vm529, %v531, %v533
      %v535 = vrot.slane %v519, 5
      %v536 = vsel %vm529, %v533, %v535
      %v540 = vadd.f32 %v522, %v532
      %v541 = vadd.f32 %v523, %v534
      %v542 = vadd.f32 %v524, %v536
      %543 = vst.msk [vmem:[#allocation2] sm:$0xff] %vm328, %v540
      %544 = vst.msk [vmem:[#allocation2 + $0x8] sm:$0xff] %vm328, %v541
      %vm545 = vcmask 60416
      %546 = vst.msk [vmem:[#allocation2 + $0x10] sm:$0xf] %vm545, %v542
      %s547 = scalar_lea.vmem %s1, 96
      %v548 = vld [vmem:[%s547] sm:$0xf]
      %v549 = vld [vmem:[%s547 + $0x4] sm:$0xf]
      %v550 = vld [vmem:[%s547 + $0x8] sm:$0xf]
      %v551 = vld [vmem:[%s547 + $0xc] sm:$0xf]
      %v552 = vld [vmem:[%s547 + $0x10] sm:$0xf]
      %v553 = vld [vmem:[%s547 + $0x14] sm:$0xf]
      %v554 = vld [vmem:[%s547 + $0x18] sm:$0xf]
      %v555 = vld [vmem:[%s547 + $0x1c] sm:$0xf]
      %v564 = vunpack.c.l.b16 %v548
      %v565 = vunpack.c.l.b16 %v549
      %v566 = vunpack.c.l.b16 %v550
      %v567 = vunpack.c.l.b16 %v551
      %v568 = vunpack.c.l.b16 %v552
      %v569 = vunpack.c.l.b16 %v553
      %v570 = vunpack.c.l.b16 %v554
      %v571 = vunpack.c.l.b16 %v555
      %v572 = vpack.c.b16 %v565, %v564
      %v573 = vpack.c.b16 %v567, %v566
      %v574 = vpack.c.b16 %v569, %v568
      %v575 = vpack.c.b16 %v571, %v570
      %580 = vmatprep.subr.bf16.mxu0 0
      %581 = vmatpush1.bf16.msra.mxu0 0
      %582 = vmatprep.subr.bf16.mxu0 0
      %583 = vmatpush1.bf16.msra.mxu0 0
      %584 = vmatprep.subr.bf16.mxu0 0
      %585 = vmatpush1.bf16.msra.mxu0 0
      %586 = vmatprep.subr.bf16.mxu0 0
      %587 = vmatpush1.bf16.msra.mxu0 0
      %588 = vmatprep.subr.bf16.mxu0 0
      %589 = vmatpush1.bf16.msra.mxu0 %v575
      %590 = vmatprep.subr.bf16.mxu0 0
      %591 = vmatpush1.bf16.msra.mxu0 %v574
      %592 = vmatprep.subr.bf16.mxu0 0
      %593 = vmatpush1.bf16.msra.mxu0 %v573
      %594 = vmatprep.subr.bf16.mxu0 0
      %595 = vmatpush1.bf16.msra.mxu0 %v572
      %596 = vmatprep.subr.bf16.mxu0 0
      %597 = vmatpush2.bf16.msra.mxu0 0
      %598 = vmatprep.subr.bf16.mxu0 0
      %599 = vmatpush2.bf16.msra.mxu0 0
      %600 = vmatprep.subr.bf16.mxu0 0
      %601 = vmatpush2.bf16.msra.mxu0 0
      %602 = vmatprep.subr.bf16.mxu0 0
      %603 = vmatpush2.bf16.msra.mxu0 0
      %604 = vmatprep.subr.bf16.mxu0 0
      %605 = vmatpush2.bf16.msra.mxu0 0
      %606 = vmatprep.subr.bf16.mxu0 0
      %607 = vmatpush2.bf16.msra.mxu0 0
      %608 = vmatprep.subr.bf16.mxu0 0
      %609 = vmatpush2.bf16.msra.mxu0 0
      %610 = vmatprep.subr.bf16.mxu0 0
      %611 = vmatpush2.bf16.msra.mxu0 0
      %612 = vmatprep.mubr.bf16.mxu0 0
      %613 = vmatmul.mubr.bf16.gmra.mxu0 %v274
      %v614 = vpop.f32.mrf.mxu0
      %v615 = vadd.f32 0.0, %v614
      %v616 = vpop.f32.mrf.mxu0
      %v617 = vpop.f32.mrf.mxu0
      %v618 = vadd.f32 0.0, %v617
      %v619 = vpop.f32.mrf.mxu0
      %620 = vmatprep.mubr.bf16.mxu0 0
      %621 = vmatmul.mubr.bf16.gmra.mxu0 %v277
      %v622 = vpop.f32.mrf.mxu0
      %v623 = vadd.f32 0.0, %v622
      %v624 = vpop.f32.mrf.mxu0
      %v625 = vpop.f32.mrf.mxu0
      %v626 = vadd.f32 0.0, %v625
      %v627 = vpop.f32.mrf.mxu0
      %628 = vdwg.mxu0
      %v629 = vld [vmem:[#allocation2] sm:$0xff]
      %v630 = vld [vmem:[#allocation2 + $0x8] sm:$0xff]
      %v631 = vld [vmem:[#allocation2 + $0x10] sm:$0x7]
      %vm636 = vcmask 1041408
      %v637 = vrot.slane %v615, 6
      %v638 = vrot.slane %v618, 6
      %v639 = vsel %vm636, %v637, %v638
      %v640 = vrot.slane %v623, 6
      %v641 = vsel %vm636, %v638, %v640
      %v642 = vrot.slane %v626, 6
      %v643 = vsel %vm636, %v640, %v642
      %v647 = vadd.f32 %v629, %v639
      %v648 = vadd.f32 %v630, %v641
      %v649 = vadd.f32 %v631, %v643
      %650 = vst.msk [vmem:[#allocation2] sm:$0xff] %vm328, %v647
      %651 = vst.msk [vmem:[#allocation2 + $0x8] sm:$0xff] %vm328, %v648
      %vm652 = vcmask 59392
      %653 = vst.msk [vmem:[#allocation2 + $0x10] sm:$0x7] %vm652, %v649
      %v654 = vld [vmem:[#allocation2] sm:$0xff]
      %v655 = vld [vmem:[#allocation2 + $0x8] sm:$0xff]
      %v656 = vld [vmem:[#allocation2 + $0x10] sm:$0xff]
      %v657 = vld [vmem:[#allocation2 + $0x18] sm:$0x1]
      %v658 = vld [vmem:[%s2] sm:$0x1]
      %v660 = vlaneseq
      %v661 = vshrl.u32 %v660, 7
      %v662 = vsub.s32 0, %v661
      %v663 = vrot.slane %v658, %v662
      %v665 = vadd.f32 %v654, %v663
      %v666 = vadd.f32 %v655, %v663
      %v667 = vadd.f32 %v656, %v663
      %v668 = vadd.f32 %v657, %v663
      %v669 = vmax.f32 %v665, 0.0
      %v670 = vmax.f32 %v666, 0.0
      %v671 = vmax.f32 %v667, 0.0
      %v672 = vmax.f32 %v668, 0.0
      %v673 = vpack.c.bf16 %v670, %v669
      %v674 = vpack.c.bf16 %v672, %v671
      %v675 = vld [vmem:[%s3] sm:$0xf]
      %v676 = vld [vmem:[%s4] sm:$0x1]
      %v678 = vlaneseq
      %v679 = vshrl.u32 %v678, 7
      %v680 = vsub.s32 0, %v679
      %v681 = vrot.slane %v676, %v680
      %v684 = vsel %vm328, %v673, 0
      %v687 = vsel %vm328, %v674, 0
      %vm689 = vcmask 1043456
      %v691 = vsel %vm689, %v675, 0
      %693 = vmatprep.subr.bf16.mxu0 0
      %694 = vmatpush1.bf16.msra.mxu0 0
      %695 = vmatprep.subr.bf16.mxu0 0
      %696 = vmatpush1.bf16.msra.mxu0 0
      %697 = vmatprep.subr.bf16.mxu0 0
      %698 = vmatpush1.bf16.msra.mxu0 0
      %699 = vmatprep.subr.bf16.mxu0 0
      %700 = vmatpush1.bf16.msra.mxu0 0
      %701 = vmatprep.subr.bf16.mxu0 0
      %702 = vmatpush1.bf16.msra.mxu0 0
      %703 = vmatprep.subr.bf16.mxu0 0
      %704 = vmatpush1.bf16.msra.mxu0 0
      %705 = vmatprep.subr.bf16.mxu0 0
      %706 = vmatpush1.bf16.msra.mxu0 0
      %707 = vmatprep.subr.bf16.mxu0 0
      %708 = vmatpush1.bf16.msra.mxu0 %v691
      %709 = vmatprep.subr.bf16.mxu0 0
      %710 = vmatpush2.bf16.msra.mxu0 0
      %711 = vmatprep.subr.bf16.mxu0 0
      %712 = vmatpush2.bf16.msra.mxu0 0
      %713 = vmatprep.subr.bf16.mxu0 0
      %714 = vmatpush2.bf16.msra.mxu0 0
      %715 = vmatprep.subr.bf16.mxu0 0
      %716 = vmatpush2.bf16.msra.mxu0 0
      %717 = vmatprep.subr.bf16.mxu0 0
      %718 = vmatpush2.bf16.msra.mxu0 0
      %719 = vmatprep.subr.bf16.mxu0 0
      %720 = vmatpush2.bf16.msra.mxu0 0
      %721 = vmatprep.subr.bf16.mxu0 0
      %722 = vmatpush2.bf16.msra.mxu0 0
      %723 = vmatprep.subr.bf16.mxu0 0
      %724 = vmatpush2.bf16.msra.mxu0 0
      %725 = vmatprep.mubr.bf16.mxu0 0
      %726 = vmatmul.mubr.bf16.gmra.mxu0 %v684
      %v727 = vpop.f32.mrf.mxu0
      %v728 = vadd.f32 %v681, %v727
      %v729 = vpop.f32.mrf.mxu0
      %v730 = vpop.f32.mrf.mxu0
      %v731 = vadd.f32 %v681, %v730
      %v732 = vpop.f32.mrf.mxu0
      %733 = vmatprep.mubr.bf16.mxu0 0
      %734 = vmatmul.mubr.bf16.gmra.mxu0 %v687
      %v735 = vpop.f32.mrf.mxu0
      %v736 = vadd.f32 %v681, %v735
      %v737 = vpop.f32.mrf.mxu0
      %v738 = vpop.f32.mrf.mxu0
      %v739 = vadd.f32 %v681, %v738
      %v740 = vpop.f32.mrf.mxu0
      %741 = vdwg.mxu0
      %v742 = vmax.f32 %v728, 0.0
      %v743 = vmax.f32 %v731, 0.0
      %v744 = vmax.f32 %v736, 0.0
      %v745 = vmax.f32 %v739, 0.0
      %vm746 = vcmask 130048
      %747 = vst.msk [vmem:[%s224] sm:$0xff] %vm746, %v742
      %748 = vst.msk [vmem:[%s224 + $0x8] sm:$0xff] %vm746, %v743
      %749 = vst.msk [vmem:[%s224 + $0x10] sm:$0xff] %vm746, %v744
      %vm750 = vcmask 122880
      %751 = vst.msk [vmem:[%s224 + $0x18] sm:$0x1] %vm750, %v745
      %p752 = scmp.lt.s32.totalorder %s16, 1
      %s753 = scalar_select %p752, %s16, 1
      %s754 = smul.addr %s753, 4
      %s755 = smul.addr %s754, 8
      %s756 = scalar_lea.vmem %s5, %s755
      // Predicated region
      $region41: #{stem_block_forward.3} parent=39 // pred_check
        %p757 = pneg %p144
      $region42: #{stem_block_forward.3} parent=39 // pred_check_branch
        %759 = sbr.rel (%p757) target = $region44
      $region43: #{stem_block_forward.3} parent=39 // pred_region
        _
      $region44: #{stem_block_forward.3} parent=39 // pred_fallthru
        _
    $region40: #{stem_block_forward.3} parent=5 // pred_fallthru
      _
    %p760 = scmp.le.s32.totalorder 2, %s11
    // Predicated region
    $region45: #{stem_block_forward.3} parent=5 // pred_check
      %p761 = pneg %p760
    $region46: #{stem_block_forward.3} parent=5 // pred_check_branch
      %763 = sbr.rel (%p761) target = $region48
    $region47: #{stem_block_forward.3} parent=5 // pred_region
      %s764 = ssub.s32 %s11, 2
      // Predicated region
      $region49: #{stem_block_forward.3} parent=47 // pred_check
        %p765 = pneg %p150
      $region50: #{stem_block_forward.3} parent=47 // pred_check_branch
        %767 = sbr.rel (%p765) target = $region52
      $region51: #{stem_block_forward.3} parent=47 // pred_region
        %p768 = scmp.lt.s32.totalorder %s17, 1
        %s769 = scalar_select %p768, %s17, 1
        %s770 = smul.addr %s769, 4
        %s771 = smul.addr %s770, 8
        %s772 = scalar_lea.vmem %s5, %s771
      $region52: #{stem_block_forward.3} parent=47 // pred_fallthru
        _
    $region48: #{stem_block_forward.3} parent=5 // pred_fallthru
      _
  $region6: #{stem_block_forward.3} parent=0 // loop_footer
    %s15 = sadd.s32 1, %s11
  $region7: #{stem_block_forward.3} parent=0 // loop_footer_branch
    %10 = sbr.rel target = $region3
  $region8: #{stem_block_forward.3} parent=0 // loop_exit
    _

// kernel: stem_block_forward.2
$region0: #{stem_block_forward.2}
  #allocation0 [shape = 'u32[]', space=smem, size = 0x4, offset = 0x4, fixed_abs, tag = 'smem constant byte address 0x4 - core index']
  #allocation1 [shape = 'u32[144,128]{1,0:T(1,128)}', space=vmem, size = 0x12000, scoped, tag = 'internal scratch']
  #allocation2 [shape = 'f32[81,8]{1,0:T(8,128)}', space=vmem, size = 0xb000, scoped, tag = 'scratch operand']
  #allocation3 [shape = 'f32[81,4]{1,0:T(8,128)}', space=vmem, size = 0xb000, scoped, tag = 'scratch operand']
  %s0 = inlined_call_operand.vmem [shape: bf16[2,81,16], index: 0, kind: input, shape index: {}]
  %s1 = inlined_call_operand.vmem [shape: f32[81,1], index: 1, kind: input, shape index: {}]
  %s2 = inlined_call_operand.vmem [shape: bf16[4,16,8], index: 2, kind: input, shape index: {}]
  %s3 = inlined_call_operand.vmem [shape: f32[1,8], index: 3, kind: input, shape index: {}]
  %s4 = inlined_call_operand.vmem [shape: bf16[4,8,4], index: 4, kind: input, shape index: {}]
  %s5 = inlined_call_operand.vmem [shape: f32[1,4], index: 5, kind: input, shape index: {}]
  %s6 = inlined_call_operand.vmem [shape: bf16[4,4,8], index: 6, kind: input, shape index: {}]
  %s7 = inlined_call_operand.vmem [shape: f32[1,8], index: 7, kind: input, shape index: {}]
  %s8 = inlined_call_operand.vmem [shape: bf16[2,81,16], index: 8, kind: output, shape index: {}]
  %s9 = sld [smem:[#allocation0]]
  $region65: #{stem_block_forward.2} parent=0
    _
  %s11 = ssub.s32 1, %s9
  %s12 = scalar_select 0, %s11, %s9
  loop: start=0, step=1, limit=4
  $region2: #{stem_block_forward.2} parent=0 // loop_pre_header
    _
  $region3: #{stem_block_forward.2} parent=0 // loop_header
    %s14 = sphi 0, %s18
    %p15 = scmp.ge.s32.totalorder %s14, 4
    %s24 = sphi 0, %s26
    %s27 = sphi 0, %s24
    %s28 = sphi 0, %s27
    %s44 = sphi 0, %s28
    %s48 = sphi 0, %s48
    %s50 = sphi 0, %s48
    %s51 = sphi 0, %s50
    %s65 = sphi 0, %s51
    %s69 = sphi 0, %s69
    %s71 = sphi 0, %s69
    %s72 = sphi 0, %s71
    %s86 = sphi 0, %s72
    %s90 = sphi 0, %s90
    %s92 = sphi 0, %s90
    %s93 = sphi 0, %s92
    %s107 = sphi 0, %s93
    %s111 = sphi 0, %s111
    %s113 = sphi 0, %s111
    %s114 = sphi 0, %s113
    %s128 = sphi 0, %s114
    %s132 = sphi 0, %s132
    %s134 = sphi 0, %s132
    %s135 = sphi 0, %s134
    %s149 = sphi 0, %s135
    %s153 = sphi 0, %s153
    %s155 = sphi 0, %s153
    %s156 = sphi 0, %s155
    %s170 = sphi 0, %s156
    %s174 = sphi 0, %s174
    %s176 = sphi 0, %s174
    %s177 = sphi 0, %s176
    %s191 = sphi 0, %s177
    %s197 = sphi 0, %s199
    %s200 = sphi 0, %s197
    %s201 = sphi 0, %s200
    %s217 = sphi 0, %s201
  $region4: #{stem_block_forward.2} parent=0 // loop_header_branch
    %17 = sbr.rel (%p15) target = $region8
  $region5: #{stem_block_forward.2} parent=0 // loop_body
    %s19 = ssub.s32 %s14, 1
    %s20 = ssub.s32 %s14, 2
    %s21 = sadd.s32 %s14, 1
    %s22 = ssub.s32 %s14, %s21
    %p23 = scmp.eq.s32.totalorder %s22, 0
    %s25 = sadd.s32 %s24, 1
    %s26 = scalar_select %p23, %s24, %s25
    %p29 = pneg %p23
    %p30 = scmp.eq.s32.totalorder %s14, 1
    %p31 = por %p29, %p30
    %p32 = scmp.ne.s32.totalorder %s24, %s27
    %p33 = scmp.eq.s32.totalorder %s14, 0
    %p34 = por %p32, %p33
    %p35 = scmp.ne.s32.totalorder %s24, %s27
    %p36 = scmp.eq.s32.totalorder %s19, 1
    %p37 = por %p35, %p36
    %p38 = scmp.ne.s32.totalorder %s27, %s28
    %p39 = scmp.eq.s32.totalorder %s19, 0
    %p40 = por %p38, %p39
    %p41 = scmp.ne.s32.totalorder %s27, %s28
    %p42 = scmp.eq.s32.totalorder %s20, 1
    %p43 = por %p41, %p42
    %p45 = scmp.ne.s32.totalorder %s28, %s44
    %p46 = scmp.eq.s32.totalorder %s20, 0
    %p47 = por %p45, %p46
    %s49 = sadd.s32 %s48, 1
    %p52 = scmp.eq.s32.totalorder %s14, 1
    %p53 = scmp.ne.s32.totalorder %s48, %s50
    %p54 = scmp.eq.s32.totalorder %s14, 0
    %p55 = por %p53, %p54
    %p56 = scmp.ne.s32.totalorder %s48, %s50
    %p57 = scmp.eq.s32.totalorder %s19, 1
    %p58 = por %p56, %p57
    %p59 = scmp.ne.s32.totalorder %s50, %s51
    %p60 = scmp.eq.s32.totalorder %s19, 0
    %p61 = por %p59, %p60
    %p62 = scmp.ne.s32.totalorder %s50, %s51
    %p63 = scmp.eq.s32.totalorder %s20, 1
    %p64 = por %p62, %p63
    %p66 = scmp.ne.s32.totalorder %s51, %s65
    %p67 = scmp.eq.s32.totalorder %s20, 0
    %p68 = por %p66, %p67
    %s70 = sadd.s32 %s69, 1
    %p73 = scmp.eq.s32.totalorder %s14, 1
    %p74 = scmp.ne.s32.totalorder %s69, %s71
    %p75 = scmp.eq.s32.totalorder %s14, 0
    %p76 = por %p74, %p75
    %p77 = scmp.ne.s32.totalorder %s69, %s71
    %p78 = scmp.eq.s32.totalorder %s19, 1
    %p79 = por %p77, %p78
    %p80 = scmp.ne.s32.totalorder %s71, %s72
    %p81 = scmp.eq.s32.totalorder %s19, 0
    %p82 = por %p80, %p81
    %p83 = scmp.ne.s32.totalorder %s71, %s72
    %p84 = scmp.eq.s32.totalorder %s20, 1
    %p85 = por %p83, %p84
    %p87 = scmp.ne.s32.totalorder %s72, %s86
    %p88 = scmp.eq.s32.totalorder %s20, 0
    %p89 = por %p87, %p88
    %s91 = sadd.s32 %s90, 1
    %p94 = scmp.eq.s32.totalorder %s14, 1
    %p95 = scmp.ne.s32.totalorder %s90, %s92
    %p96 = scmp.eq.s32.totalorder %s14, 0
    %p97 = por %p95, %p96
    %p98 = scmp.ne.s32.totalorder %s90, %s92
    %p99 = scmp.eq.s32.totalorder %s19, 1
    %p100 = por %p98, %p99
    %p101 = scmp.ne.s32.totalorder %s92, %s93
    %p102 = scmp.eq.s32.totalorder %s19, 0
    %p103 = por %p101, %p102
    %p104 = scmp.ne.s32.totalorder %s92, %s93
    %p105 = scmp.eq.s32.totalorder %s20, 1
    %p106 = por %p104, %p105
    %p108 = scmp.ne.s32.totalorder %s93, %s107
    %p109 = scmp.eq.s32.totalorder %s20, 0
    %p110 = por %p108, %p109
    %s112 = sadd.s32 %s111, 1
    %p115 = scmp.eq.s32.totalorder %s14, 1
    %p116 = scmp.ne.s32.totalorder %s111, %s113
    %p117 = scmp.eq.s32.totalorder %s14, 0
    %p118 = por %p116, %p117
    %p119 = scmp.ne.s32.totalorder %s111, %s113
    %p120 = scmp.eq.s32.totalorder %s19, 1
    %p121 = por %p119, %p120
    %p122 = scmp.ne.s32.totalorder %s113, %s114
    %p123 = scmp.eq.s32.totalorder %s19, 0
    %p124 = por %p122, %p123
    %p125 = scmp.ne.s32.totalorder %s113, %s114
    %p126 = scmp.eq.s32.totalorder %s20, 1
    %p127 = por %p125, %p126
    %p129 = scmp.ne.s32.totalorder %s114, %s128
    %p130 = scmp.eq.s32.totalorder %s20, 0
    %p131 = por %p129, %p130
    %s133 = sadd.s32 %s132, 1
    %p136 = scmp.eq.s32.totalorder %s14, 1
    %p137 = scmp.ne.s32.totalorder %s132, %s134
    %p138 = scmp.eq.s32.totalorder %s14, 0
    %p139 = por %p137, %p138
    %p140 = scmp.ne.s32.totalorder %s132, %s134
    %p141 = scmp.eq.s32.totalorder %s19, 1
    %p142 = por %p140, %p141
    %p143 = scmp.ne.s32.totalorder %s134, %s135
    %p144 = scmp.eq.s32.totalorder %s19, 0
    %p145 = por %p143, %p144
    %p146 = scmp.ne.s32.totalorder %s134, %s135
    %p147 = scmp.eq.s32.totalorder %s20, 1
    %p148 = por %p146, %p147
    %p150 = scmp.ne.s32.totalorder %s135, %s149
    %p151 = scmp.eq.s32.totalorder %s20, 0
    %p152 = por %p150, %p151
    %s154 = sadd.s32 %s153, 1
    %p157 = scmp.eq.s32.totalorder %s14, 1
    %p158 = scmp.ne.s32.totalorder %s153, %s155
    %p159 = scmp.eq.s32.totalorder %s14, 0
    %p160 = por %p158, %p159
    %p161 = scmp.ne.s32.totalorder %s153, %s155
    %p162 = scmp.eq.s32.totalorder %s19, 1
    %p163 = por %p161, %p162
    %p164 = scmp.ne.s32.totalorder %s155, %s156
    %p165 = scmp.eq.s32.totalorder %s19, 0
    %p166 = por %p164, %p165
    %p167 = scmp.ne.s32.totalorder %s155, %s156
    %p168 = scmp.eq.s32.totalorder %s20, 1
    %p169 = por %p167, %p168
    %p171 = scmp.ne.s32.totalorder %s156, %s170
    %p172 = scmp.eq.s32.totalorder %s20, 0
    %p173 = por %p171, %p172
    %s175 = sadd.s32 %s174, 1
    %p178 = scmp.eq.s32.totalorder %s14, 1
    %p179 = scmp.ne.s32.totalorder %s174, %s176
    %p180 = scmp.eq.s32.totalorder %s14, 0
    %p181 = por %p179, %p180
    %p182 = scmp.ne.s32.totalorder %s174, %s176
    %p183 = scmp.eq.s32.totalorder %s19, 1
    %p184 = por %p182, %p183
    %p185 = scmp.ne.s32.totalorder %s176, %s177
    %p186 = scmp.eq.s32.totalorder %s19, 0
    %p187 = por %p185, %p186
    %p188 = scmp.ne.s32.totalorder %s176, %s177
    %p189 = scmp.eq.s32.totalorder %s20, 1
    %p190 = por %p188, %p189
    %p192 = scmp.ne.s32.totalorder %s177, %s191
    %p193 = scmp.eq.s32.totalorder %s20, 0
    %p194 = por %p192, %p193
    %s195 = ssub.s32 %s14, %s21
    %p196 = scmp.eq.s32.totalorder %s195, 0
    %s198 = sadd.s32 %s197, 1
    %s199 = scalar_select %p196, %s197, %s198
    %p202 = pneg %p196
    %p203 = scmp.eq.s32.totalorder %s14, 1
    %p204 = por %p202, %p203
    %p205 = scmp.ne.s32.totalorder %s197, %s200
    %p206 = scmp.eq.s32.totalorder %s14, 0
    %p207 = por %p205, %p206
    %p208 = scmp.ne.s32.totalorder %s197, %s200
    %p209 = scmp.eq.s32.totalorder %s19, 1
    %p210 = por %p208, %p209
    %p211 = scmp.ne.s32.totalorder %s200, %s201
    %p212 = scmp.eq.s32.totalorder %s19, 0
    %p213 = por %p211, %p212
    %p214 = scmp.ne.s32.totalorder %s200, %s201
    %p215 = scmp.eq.s32.totalorder %s20, 1
    %p216 = por %p214, %p215
    %p218 = scmp.ne.s32.totalorder %s201, %s217
    %p219 = scmp.eq.s32.totalorder %s20, 0
    %p220 = por %p218, %p219
    %p221 = scmp.le.s32.totalorder 1, %s14
    %p222 = scmp.lt.s32.totalorder %s14, 3
    %p223 = pnand %p221, %p222
    %p224 = pneg %p223
    // Predicated region
    $region9: #{stem_block_forward.2} parent=5 // pred_check
      _
    $region10: #{stem_block_forward.2} parent=5 // pred_check_branch
      %226 = sbr.rel (%p223) target = $region12
    $region11: #{stem_block_forward.2} parent=5 // pred_region
      %s227 = ssub.s32 %s14, 1
      // Predicated region
      $region13: #{stem_block_forward.2} parent=11 // pred_check
        %p228 = pneg %p61
      $region14: #{stem_block_forward.2} parent=11 // pred_check_branch
        %230 = sbr.rel (%p228) target = $region16
      $region15: #{stem_block_forward.2} parent=11 // pred_region
        _
      $region16: #{stem_block_forward.2} parent=11 // pred_fallthru
        _
      // Predicated region
      $region17: #{stem_block_forward.2} parent=11 // pred_check
        %p231 = pneg %p82
      $region18: #{stem_block_forward.2} parent=11 // pred_check_branch
        %233 = sbr.rel (%p231) target = $region20
      $region19: #{stem_block_forward.2} parent=11 // pred_region
        _
      $region20: #{stem_block_forward.2} parent=11 // pred_fallthru
        _
      // Predicated region
      $region21: #{stem_block_forward.2} parent=11 // pred_check
        %p234 = pneg %p103
      $region22: #{stem_block_forward.2} parent=11 // pred_check_branch
        %236 = sbr.rel (%p234) target = $region24
      $region23: #{stem_block_forward.2} parent=11 // pred_region
        _
      $region24: #{stem_block_forward.2} parent=11 // pred_fallthru
        _
      // Predicated region
      $region25: #{stem_block_forward.2} parent=11 // pred_check
        %p237 = pneg %p124
      $region26: #{stem_block_forward.2} parent=11 // pred_check_branch
        %239 = sbr.rel (%p237) target = $region28
      $region27: #{stem_block_forward.2} parent=11 // pred_region
        _
      $region28: #{stem_block_forward.2} parent=11 // pred_fallthru
        _
      // Predicated region
      $region29: #{stem_block_forward.2} parent=11 // pred_check
        %p240 = pneg %p145
      $region30: #{stem_block_forward.2} parent=11 // pred_check_branch
        %242 = sbr.rel (%p240) target = $region32
      $region31: #{stem_block_forward.2} parent=11 // pred_region
        _
      $region32: #{stem_block_forward.2} parent=11 // pred_fallthru
        _
      // Predicated region
      $region33: #{stem_block_forward.2} parent=11 // pred_check
        %p243 = pneg %p166
      $region34: #{stem_block_forward.2} parent=11 // pred_check_branch
        %245 = sbr.rel (%p243) target = $region36
      $region35: #{stem_block_forward.2} parent=11 // pred_region
        _
      $region36: #{stem_block_forward.2} parent=11 // pred_fallthru
        _
      // Predicated region
      $region37: #{stem_block_forward.2} parent=11 // pred_check
        %p246 = pneg %p187
      $region38: #{stem_block_forward.2} parent=11 // pred_check_branch
        %248 = sbr.rel (%p246) target = $region40
      $region39: #{stem_block_forward.2} parent=11 // pred_region
        _
      $region40: #{stem_block_forward.2} parent=11 // pred_fallthru
        _
    $region12: #{stem_block_forward.2} parent=5 // pred_fallthru
      _
    %p249 = scmp.lt.s32.totalorder %s14, 2
    // Predicated region
    $region41: #{stem_block_forward.2} parent=5 // pred_check
      %p250 = pneg %p249
    $region42: #{stem_block_forward.2} parent=5 // pred_check_branch
      %252 = sbr.rel (%p250) target = $region44
    $region43: #{stem_block_forward.2} parent=5 // pred_region
      // Predicated region
      $region45: #{stem_block_forward.2} parent=43 // pred_check
        %p253 = pneg %p34
      $region46: #{stem_block_forward.2} parent=43 // pred_check_branch
        %255 = sbr.rel (%p253) target = $region48
      $region47: #{stem_block_forward.2} parent=43 // pred_region
        %p256 = scmp.lt.s32.totalorder %s14, 1
        %s257 = scalar_select %p256, %s14, 1
        %s258 = smul.addr %s257, 11
        %s259 = smul.addr %s258, 4
        %s260 = scalar_lea.vmem %s0, %s259
      $region48: #{stem_block_forward.2} parent=43 // pred_fallthru
        _
    $region44: #{stem_block_forward.2} parent=5 // pred_fallthru
      _
    %p261 = scmp.le.s32.totalorder 1, %s14
    %p262 = scmp.lt.s32.totalorder %s14, 3
    %p263 = pnand %p261, %p262
    %p264 = pneg %p263
    // Predicated region
    $region49: #{stem_block_forward.2} parent=5 // pred_check
      _
    $region50: #{stem_block_forward.2} parent=5 // pred_check_branch
      %266 = sbr.rel (%p263) target = $region52
    $region51: #{stem_block_forward.2} parent=5 // pred_region
      %s267 = ssub.s32 %s14, 1
      %p268 = scmp.lt.s32.totalorder %s19, 1
      %s269 = scalar_select %p268, %s19, 1
      %s270 = smul.addr %s269, 11
      %s271 = smul.addr %s270, 4
      %s272 = scalar_lea.vmem %s0, %s271
      %p273 = pneg %p40
      %p274 = pneg %p37
      %p275 = pneg %p61
      %p276 = pneg %p58
      %p277 = pneg %p82
      %p278 = pneg %p79
      %p279 = pneg %p103
      %p280 = pneg %p100
      %p281 = pneg %p124
      %p282 = pneg %p121
      %p283 = pneg %p145
      %p284 = pneg %p142
      %p285 = pneg %p166
      %p286 = pneg %p163
      %p287 = pneg %p187
      %p288 = pneg %p184
      %p289 = pneg %p213
      %p290 = pneg %p210
      %p291 = scmp.lt.s32.totalorder %s19, 1
      %s292 = scalar_select %p291, %s19, 1
      %s293 = smul.addr %s292, 11
      %s294 = smul.addr %s293, 4
      %s295 = scalar_lea.vmem %s8, %s294
      %p296 = scmp.lt.s32.totalorder %s19, 1
      %s297 = scalar_select %p296, %s19, 1
      %s298 = smul.addr %s297, 11
      %s299 = smul.addr %s298, 4
      %s300 = scalar_lea.vmem %s0, %s299
      %p301 = scmp.lt.s32.totalorder %s19, 1
      %s302 = scalar_select %p301, %s19, 1
      %s303 = smul.addr %s302, 11
      %s304 = smul.addr %s303, 4
      %s305 = scalar_lea.vmem %s8, %s304
      %v307 = vld [vmem:[%s300] sm:$0xf]
      %v308 = vld [vmem:[%s300 + $0x4] sm:$0xf]
      %v309 = vld [vmem:[%s300 + $0x8] sm:$0xf]
      %v310 = vld [vmem:[%s300 + $0xc] sm:$0xf]
      %v311 = vld [vmem:[%s300 + $0x10] sm:$0xf]
      %v312 = vld [vmem:[%s300 + $0x14] sm:$0xf]
      %v313 = vld [vmem:[%s300 + $0x18] sm:$0xf]
      %v314 = vld [vmem:[%s300 + $0x1c] sm:$0xf]
      %v315 = vld [vmem:[%s300 + $0x20] sm:$0xf]
      %v316 = vld [vmem:[%s300 + $0x24] sm:$0xf]
      %v317 = vld [vmem:[%s300 + $0x28] sm:$0x1]
      %v318 = vld [vmem:[%s1] sm:$0xff]
      %v319 = vld [vmem:[%s1 + $0x8] sm:$0xff]
      %v320 = vld [vmem:[%s1 + $0x10] sm:$0xff]
      %v321 = vld [vmem:[%s1 + $0x18] sm:$0xff]
      %v322 = vld [vmem:[%s1 + $0x20] sm:$0xff]
      %v323 = vld [vmem:[%s1 + $0x28] sm:$0xff]
      %v324 = vld [vmem:[%s1 + $0x30] sm:$0xff]
      %v325 = vld [vmem:[%s1 + $0x38] sm:$0xff]
      %v326 = vld [vmem:[%s1 + $0x40] sm:$0xff]
      %v327 = vld [vmem:[%s1 + $0x48] sm:$0xff]
      %v328 = vld [vmem:[%s1 + $0x50] sm:$0x1]
      %v329 = vld [vmem:[%s2] sm:$0xf]
      %v330 = vld [vmem:[%s2 + $0x4] sm:$0xf]
      %v342 = vunpack.c.l.b16 %v307
      %v343 = vunpack.c.l.b16 %v308
      %v344 = vunpack.c.l.b16 %v309
      %v345 = vunpack.c.l.b16 %v310
      %v346 = vunpack.c.l.b16 %v311
      %v347 = vunpack.c.l.b16 %v312
      %v348 = vunpack.c.l.b16 %v313
      %v349 = vunpack.c.l.b16 %v314
      %v350 = vunpack.c.l.b16 %v315
      %v351 = vunpack.c.l.b16 %v316
      %v352 = vunpack.c.l.b16 %v317
      %v353 = vpack.c.b16 %v343, %v342
      %v354 = vpack.c.b16 %v345, %v344
      %v355 = vpack.c.b16 %v347, %v346
      %v356 = vpack.c.b16 %v349, %v348
      %v357 = vpack.c.b16 %v351, %v350
      %v358 = vpack.c.b16 %v352, %v352
      %v361 = vunpack.c.l.b16 %v329
      %v362 = vunpack.c.l.b16 %v330
      %v363 = vpack.c.b16 %v362, %v361
      %vm365 = vcmask 130048
      %v367 = vsel %vm365, %v353, 0
      %v370 = vsel %vm365, %v354, 0
      %v373 = vsel %vm365, %v355, 0
      %v376 = vsel %vm365, %v356, 0
      %v379 = vsel %vm365, %v357, 0
      %v382 = vsel %vm365, %v358, 0
      %384 = vmatprep.subr.bf16.mxu0 0
      %385 = vmatpush1.bf16.msra.mxu0 0
      %386 = vmatprep.subr.bf16.mxu0 0
      %387 = vmatpush1.bf16.msra.mxu0 0
      %388 = vmatprep.subr.bf16.mxu0 0
      %389 = vmatpush1.bf16.msra.mxu0 0
      %390 = vmatprep.subr.bf16.mxu0 0
      %391 = vmatpush1.bf16.msra.mxu0 0
      %392 = vmatprep.subr.bf16.mxu0 0
      %393 = vmatpush1.bf16.msra.mxu0 0
      %394 = vmatprep.subr.bf16.mxu0 0
      %395 = vmatpush1.bf16.msra.mxu0 0
      %396 = vmatprep.subr.bf16.mxu0 0
      %397 = vmatpush1.bf16.msra.mxu0 0
      %398 = vmatprep.subr.bf16.mxu0 0
      %399 = vmatpush1.bf16.msra.mxu0 %v363
      %400 = vmatprep.subr.bf16.mxu0 0
      %401 = vmatpush2.bf16.msra.mxu0 0
      %402 = vmatprep.subr.bf16.mxu0 0
      %403 = vmatpush2.bf16.msra.mxu0 0
      %404 = vmatprep.subr.bf16.mxu0 0
      %405 = vmatpush2.bf16.msra.mxu0 0
      %406 = vmatprep.subr.bf16.mxu0 0
      %407 = vmatpush2.bf16.msra.mxu0 0
      %408 = vmatprep.subr.bf16.mxu0 0
      %409 = vmatpush2.bf16.msra.mxu0 0
      %410 = vmatprep.subr.bf16.mxu0 0
      %411 = vmatpush2.bf16.msra.mxu0 0
      %412 = vmatprep.subr.bf16.mxu0 0
      %413 = vmatpush2.bf16.msra.mxu0 0
      %414 = vmatprep.subr.bf16.mxu0 0
      %415 = vmatpush2.bf16.msra.mxu0 0
      %416 = vmatprep.mubr.bf16.mxu0 0
      %417 = vmatmul.mubr.bf16.gmra.mxu0 %v367
      %v418 = vpop.f32.mrf.mxu0
      %v419 = vadd.f32 0.0, %v418
      %v420 = vpop.f32.mrf.mxu0
      %v421 = vpop.f32.mrf.mxu0
      %v422 = vadd.f32 0.0, %v421
      %v423 = vpop.f32.mrf.mxu0
      %424 = vmatprep.mubr.bf16.mxu0 0
      %425 = vmatmul.mubr.bf16.gmra.mxu0 %v370
      %v426 = vpop.f32.mrf.mxu0
      %v427 = vadd.f32 0.0, %v426
      %v428 = vpop.f32.mrf.mxu0
      %v429 = vpop.f32.mrf.mxu0
      %v430 = vadd.f32 0.0, %v429
      %v431 = vpop.f32.mrf.mxu0
      %432 = vmatprep.mubr.bf16.mxu0 0
      %433 = vmatmul.mubr.bf16.gmra.mxu0 %v373
      %v434 = vpop.f32.mrf.mxu0
      %v435 = vadd.f32 0.0, %v434
      %v436 = vpop.f32.mrf.mxu0
      %v437 = vpop.f32.mrf.mxu0
      %v438 = vadd.f32 0.0, %v437
      %v439 = vpop.f32.mrf.mxu0
      %440 = vmatprep.mubr.bf16.mxu0 0
      %441 = vmatmul.mubr.bf16.gmra.mxu0 %v376
      %v442 = vpop.f32.mrf.mxu0
      %v443 = vadd.f32 0.0, %v442
      %v444 = vpop.f32.mrf.mxu0
      %v445 = vpop.f32.mrf.mxu0
      %v446 = vadd.f32 0.0, %v445
      %v447 = vpop.f32.mrf.mxu0
      %448 = vmatprep.mubr.bf16.mxu0 0
      %449 = vmatmul.mubr.bf16.gmra.mxu0 %v379
      %v450 = vpop.f32.mrf.mxu0
      %v451 = vadd.f32 0.0, %v450
      %v452 = vpop.f32.mrf.mxu0
      %v453 = vpop.f32.mrf.mxu0
      %v454 = vadd.f32 0.0, %v453
      %v455 = vpop.f32.mrf.mxu0
      %456 = vmatprep.mubr.bf16.mxu0 0
      %457 = vmatmul.mubr.bf16.gmra.mxu0 %v382
      %v458 = vpop.f32.mrf.mxu0
      %v459 = vadd.f32 0.0, %v458
      %v460 = vpop.f32.mrf.mxu0
      %v461 = vpop.f32.mrf.mxu0
      %v462 = vpop.f32.mrf.mxu0
      %463 = vdwg.mxu0
      %vm464 = vcmask 64512
      %465 = vst.msk [vmem:[#allocation2] sm:$0xff] %vm464, %v419
      %466 = vst.msk [vmem:[#allocation2 + $0x8] sm:$0xff] %vm464, %v422
      %467 = vst.msk [vmem:[#allocation2 + $0x10] sm:$0xff] %vm464, %v427
      %468 = vst.msk [vmem:[#allocation2 + $0x18] sm:$0xff] %vm464, %v430
      %469 = vst.msk [vmem:[#allocation2 + $0x20] sm:$0xff] %vm464, %v435
      %470 = vst.msk [vmem:[#allocation2 + $0x28] sm:$0xff] %vm464, %v438
      %471 = vst.msk [vmem:[#allocation2 + $0x30] sm:$0xff] %vm464, %v443
      %472 = vst.msk [vmem:[#allocation2 + $0x38] sm:$0xff] %vm464, %v446
      %473 = vst.msk [vmem:[#allocation2 + $0x40] sm:$0xff] %vm464, %v451
      %474 = vst.msk [vmem:[#allocation2 + $0x48] sm:$0xff] %vm464, %v454
      %vm475 = vcmask 57344
      %476 = vst.msk [vmem:[#allocation2 + $0x50] sm:$0x1] %vm475, %v459
      %s477 = scalar_lea.vmem %s2, 8
      %v478 = vld [vmem:[%s477] sm:$0xf]
      %v479 = vld [vmem:[%s477 + $0x4] sm:$0xf]
      %v482 = vunpack.c.l.b16 %v478
      %v483 = vunpack.c.l.b16 %v479
      %v484 = vpack.c.b16 %v483, %v482
      %486 = vmatprep.subr.bf16.mxu0 0
      %487 = vmatpush1.bf16.msra.mxu0 0
      %488 = vmatprep.subr.bf16.mxu0 0
      %489 = vmatpush1.bf16.msra.mxu0 0
      %490 = vmatprep.subr.bf16.mxu0 0
      %491 = vmatpush1.bf16.msra.mxu0 0
      %492 = vmatprep.subr.bf16.mxu0 0
      %493 = vmatpush1.bf16.msra.mxu0 0
      %494 = vmatprep.subr.bf16.mxu0 0
      %495 = vmatpush1.bf16.msra.mxu0 0
      %496 = vmatprep.subr.bf16.mxu0 0
      %497 = vmatpush1.bf16.msra.mxu0 0
      %498 = vmatprep.subr.bf16.mxu0 0
      %499 = vmatpush1.bf16.msra.mxu0 0
      %500 = vmatprep.subr.bf16.mxu0 0
      %501 = vmatpush1.bf16.msra.mxu0 %v484
      %502 = vmatprep.subr.bf16.mxu0 0
      %503 = vmatpush2.bf16.msra.mxu0 0
      %504 = vmatprep.subr.bf16.mxu0 0
      %505 = vmatpush2.bf16.msra.mxu0 0
      %506 = vmatprep.subr.bf16.mxu0 0
      %507 = vmatpush2.bf16.msra.mxu0 0
      %508 = vmatprep.subr.bf16.mxu0 0
      %509 = vmatpush2.bf16.msra.mxu0 0
      %510 = vmatprep.subr.bf16.mxu0 0
      %511 = vmatpush2.bf16.msra.mxu0 0
      %512 = vmatprep.subr.bf16.mxu0 0
      %513 = vmatpush2.bf16.msra.mxu0 0
      %514 = vmatprep.subr.bf16.mxu0 0
      %515 = vmatpush2.bf16.msra.mxu0 0
      %516 = vmatprep.subr.bf16.mxu0 0
      %517 = vmatpush2.bf16.msra.mxu0 0
      %518 = vmatprep.mubr.bf16.mxu0 0
      %519 = vmatmul.mubr.bf16.gmra.mxu0 %v367
      %v520 = vpop.f32.mrf.mxu0
      %v521 = vadd.f32 0.0, %v520
      %v522 = vpop.f32.mrf.mxu0
      %v523 = vpop.f32.mrf.mxu0
      %v524 = vadd.f32 0.0, %v523
      %v525 = vpop.f32.mrf.mxu0
      %526 = vmatprep.mubr.bf16.mxu0 0
      %527 = vmatmul.mubr.bf16.gmra.mxu0 %v370
      %v528 = vpop.f32.mrf.mxu0
      %v529 = vadd.f32 0.0, %v528
      %v530 = vpop.f32.mrf.mxu0
      %v531 = vpop.f32.mrf.mxu0
      %v532 = vadd.f32 0.0, %v531
      %v533 = vpop.f32.mrf.mxu0
      %534 = vmatprep.mubr.bf16.mxu0 0
      %535 = vmatmul.mubr.bf16.gmra.mxu0 %v373
      %v536 = vpop.f32.mrf.mxu0
      %v537 = vadd.f32 0.0, %v536
      %v538 = vpop.f32.mrf.mxu0
      %v539 = vpop.f32.mrf.mxu0
      %v540 = vadd.f32 0.0, %v539
      %v541 = vpop.f32.mrf.mxu0
      %542 = vmatprep.mubr.bf16.mxu0 0
      %543 = vmatmul.mubr.bf16.gmra.mxu0 %v376
      %v544 = vpop.f32.mrf.mxu0
      %v545 = vadd.f32 0.0, %v544
      %v546 = vpop.f32.mrf.mxu0
      %v547 = vpop.f32.mrf.mxu0
      %v548 = vadd.f32 0.0, %v547
      %v549 = vpop.f32.mrf.mxu0
      %550 = vmatprep.mubr.bf16.mxu0 0
      %551 = vmatmul.mubr.bf16.gmra.mxu0 %v379
      %v552 = vpop.f32.mrf.mxu0
      %v553 = vadd.f32 0.0, %v552
      %v554 = vpop.f32.mrf.mxu0
      %v555 = vpop.f32.mrf.mxu0
      %v556 = vadd.f32 0.0, %v555
      %v557 = vpop.f32.mrf.mxu0
      %558 = vmatprep.mubr.bf16.mxu0 0
      %559 = vmatmul.mubr.bf16.gmra.mxu0 %v382
      %v560 = vpop.f32.mrf.mxu0
      %v561 = vadd.f32 0.0, %v560
      %v562 = vpop.f32.mrf.mxu0
      %v563 = vpop.f32.mrf.mxu0
      %v564 = vpop.f32.mrf.mxu0
      %565 = vdwg.mxu0
      %v566 = vld [vmem:[#allocation2] sm:$0xff]
      %v567 = vld [vmem:[#allocation2 + $0x8] sm:$0xff]
      %v568 = vld [vmem:[#allocation2 + $0x10] sm:$0xff]
      %v569 = vld [vmem:[#allocation2 + $0x18] sm:$0xff]
      %v570 = vld [vmem:[#allocation2 + $0x20] sm:$0xff]
      %v571 = vld [vmem:[#allocation2 + $0x28] sm:$0xff]
      %v572 = vld [vmem:[#allocation2 + $0x30] sm:$0xff]
      %v573 = vld [vmem:[#allocation2 + $0x38] sm:$0xff]
      %v574 = vld [vmem:[#allocation2 + $0x40] sm:$0xff]
      %v575 = vld [vmem:[#allocation2 + $0x48] sm:$0xff]
      %vm587 = vcmask 1046528
      %v588 = vrot.slane %v521, 1
      %v589 = vrot.slane %v524, 1
      %v590 = vsel %vm587, %v588, %v589
      %v591 = vrot.slane %v529, 1
      %v592 = vsel %vm587, %v589, %v591
      %v593 = vrot.slane %v532, 1
      %v594 = vsel %vm587, %v591, %v593
      %v595 = vrot.slane %v537, 1
      %v596 = vsel %vm587, %v593, %v595
      %v597 = vrot.slane %v540, 1
      %v598 = vsel %vm587, %v595, %v597
      %v599 = vrot.slane %v545, 1
      %v600 = vsel %vm587, %v597, %v599
      %v601 = vrot.slane %v548, 1
      %v602 = vsel %vm587, %v599, %v601
      %v603 = vrot.slane %v553, 1
      %v604 = vsel %vm587, %v601, %v603
      %v605 = vrot.slane %v556, 1
      %v606 = vsel %vm587, %v603, %v605
      %v607 = vrot.slane %v561, 1
      %v608 = vsel %vm587, %v605, %v607
      %v619 = vadd.f32 %v566, %v590
      %v620 = vadd.f32 %v567, %v592
      %v621 = vadd.f32 %v568, %v594
      %v622 = vadd.f32 %v569, %v596
      %v623 = vadd.f32 %v570, %v598
      %v624 = vadd.f32 %v571, %v600
      %v625 = vadd.f32 %v572, %v602
      %v626 = vadd.f32 %v573, %v604
      %v627 = vadd.f32 %v574, %v606
      %v628 = vadd.f32 %v575, %v608
      %629 = vst.msk [vmem:[#allocation2] sm:$0xff] %vm464, %v619
      %630 = vst.msk [vmem:[#allocation2 + $0x8] sm:$0xff] %vm464, %v620
      %631 = vst.msk [vmem:[#allocation2 + $0x10] sm:$0xff] %vm464, %v621
      %632 = vst.msk [vmem:[#allocation2 + $0x18] sm:$0xff] %vm464, %v622
      %633 = vst.msk [vmem:[#allocation2 + $0x20] sm:$0xff] %vm464, %v623
      %634 = vst.msk [vmem:[#allocation2 + $0x28] sm:$0xff] %vm464, %v624
      %635 = vst.msk [vmem:[#allocation2 + $0x30] sm:$0xff] %vm464, %v625
      %636 = vst.msk [vmem:[#allocation2 + $0x38] sm:$0xff] %vm464, %v626
      %637 = vst.msk [vmem:[#allocation2 + $0x40] sm:$0xff] %vm464, %v627
      %638 = vst.msk [vmem:[#allocation2 + $0x48] sm:$0xff] %vm464, %v628
      %s639 = scalar_lea.vmem %s2, 16
      %v640 = vld [vmem:[%s639] sm:$0xf]
      %v641 = vld [vmem:[%s639 + $0x4] sm:$0xf]
      %v644 = vunpack.c.l.b16 %v640
      %v645 = vunpack.c.l.b16 %v641
      %v646 = vpack.c.b16 %v645, %v644
      %648 = vmatprep.subr.bf16.mxu0 0
      %649 = vmatpush1.bf16.msra.mxu0 0
      %650 = vmatprep.subr.bf16.mxu0 0
      %651 = vmatpush1.bf16.msra.mxu0 0
      %652 = vmatprep.subr.bf16.mxu0 0
      %653 = vmatpush1.bf16.msra.mxu0 0
      %654 = vmatprep.subr.bf16.mxu0 0
      %655 = vmatpush1.bf16.msra.mxu0 0
      %656 = vmatprep.subr.bf16.mxu0 0
      %657 = vmatpush1.bf16.msra.mxu0 0
      %658 = vmatprep.subr.bf16.mxu0 0
      %659 = vmatpush1.bf16.msra.mxu0 0
      %660 = vmatprep.subr.bf16.mxu0 0
      %661 = vmatpush1.bf16.msra.mxu0 0
      %662 = vmatprep.subr.bf16.mxu0 0
      %663 = vmatpush1.bf16.msra.mxu0 %v646
      %664 = vmatprep.subr.bf16.mxu0 0
      %665 = vmatpush2.bf16.msra.mxu0 0
      %666 = vmatprep.subr.bf16.mxu0 0
      %667 = vmatpush2.bf16.msra.mxu0 0
      %668 = vmatprep.subr.bf16.mxu0 0
      %669 = vmatpush2.bf16.msra.mxu0 0
      %670 = vmatprep.subr.bf16.mxu0 0
      %671 = vmatpush2.bf16.msra.mxu0 0
      %672 = vmatprep.subr.bf16.mxu0 0
      %673 = vmatpush2.bf16.msra.mxu0 0
      %674 = vmatprep.subr.bf16.mxu0 0
      %675 = vmatpush2.bf16.msra.mxu0 0
      %676 = vmatprep.subr.bf16.mxu0 0
      %677 = vmatpush2.bf16.msra.mxu0 0
      %678 = vmatprep.subr.bf16.mxu0 0
      %679 = vmatpush2.bf16.msra.mxu0 0
      %680 = vmatprep.mubr.bf16.mxu0 0
      %681 = vmatmul.mubr.bf16.gmra.mxu0 %v367
      %v682 = vpop.f32.mrf.mxu0
      %v683 = vpop.f32.mrf.mxu0
      %v684 = vpop.f32.mrf.mxu0
      %v685 = vadd.f32 0.0, %v684
      %v686 = vpop.f32.mrf.mxu0
      %687 = vmatprep.mubr.bf16.mxu0 0
      %688 = vmatmul.mubr.bf16.gmra.mxu0 %v370
      %v689 = vpop.f32.mrf.mxu0
      %v690 = vadd.f32 0.0, %v689
      %v691 = vpop.f32.mrf.mxu0
      %v692 = vpop.f32.mrf.mxu0
      %v693 = vadd.f32 0.0, %v692
      %v694 = vpop.f32.mrf.mxu0
      %695 = vmatprep.mubr.bf16.mxu0 0
      %696 = vmatmul.mubr.bf16.gmra.mxu0 %v373
      %v697 = vpop.f32.mrf.mxu0
      %v698 = vadd.f32 0.0, %v697
      %v699 = vpop.f32.mrf.mxu0
      %v700 = vpop.f32.mrf.mxu0
      %v701 = vadd.f32 0.0, %v700
      %v702 = vpop.f32.mrf.mxu0
      %703 = vmatprep.mubr.bf16.mxu0 0
      %704 = vmatmul.mubr.bf16.gmra.mxu0 %v376
      %v705 = vpop.f32.mrf.mxu0
      %v706 = vadd.f32 0.0, %v705
      %v707 = vpop.f32.mrf.mxu0
      %v708 = vpop.f32.mrf.mxu0
      %v709 = vadd.f32 0.0, %v708
      %v710 = vpop.f32.mrf.mxu0
      %711 = vmatprep.mubr.bf16.mxu0 0
      %712 = vmatmul.mubr.bf16.gmra.mxu0 %v379
      %v713 = vpop.f32.mrf.mxu0
      %v714 = vadd.f32 0.0, %v713
      %v715 = vpop.f32.mrf.mxu0
      %v716 = vpop.f32.mrf.mxu0
      %v717 = vadd.f32 0.0, %v716
      %v718 = vpop.f32.mrf.mxu0
      %719 = vmatprep.mubr.bf16.mxu0 0
      %720 = vmatmul.mubr.bf16.gmra.mxu0 %v382
      %v721 = vpop.f32.mrf.mxu0
      %v722 = vadd.f32 0.0, %v721
      %v723 = vpop.f32.mrf.mxu0
      %v724 = vpop.f32.mrf.mxu0
      %v725 = vpop.f32.mrf.mxu0
      %726 = vdwg.mxu0
      %v727 = vld [vmem:[#allocation2] sm:$0xff]
      %v728 = vld [vmem:[#allocation2 + $0x8] sm:$0xff]
      %v729 = vld [vmem:[#allocation2 + $0x10] sm:$0xff]
      %v730 = vld [vmem:[#allocation2 + $0x18] sm:$0xff]
      %v731 = vld [vmem:[#allocation2 + $0x20] sm:$0xff]
      %v732 = vld [vmem:[#allocation2 + $0x28] sm:$0xff]
      %v733 = vld [vmem:[#allocation2 + $0x30] sm:$0xff]
      %v734 = vld [vmem:[#allocation2 + $0x38] sm:$0xff]
      %v735 = vld [vmem:[#allocation2 + $0x40] sm:$0xff]
      %v746 = vrot.slane %v685, 1
      %v747 = vrot.slane %v690, 1
      %v748 = vsel %vm587, %v746, %v747
      %v749 = vrot.slane %v693, 1
      %v750 = vsel %vm587, %v747, %v749
      %v751 = vrot.slane %v698, 1
      %v752 = vsel %vm587, %v749, %v751
      %v753 = vrot.slane %v701, 1
      %v754 = vsel %vm587, %v751, %v753
      %v755 = vrot.slane %v706, 1
      %v756 = vsel %vm587, %v753, %v755
      %v757 = vrot.slane %v709, 1
      %v758 = vsel %vm587, %v755, %v757
      %v759 = vrot.slane %v714, 1
      %v760 = vsel %vm587, %v757, %v759
      %v761 = vrot.slane %v717, 1
      %v762 = vsel %vm587, %v759, %v761
      %v763 = vrot.slane %v722, 1
      %v764 = vsel %vm587, %v761, %v763
      %v774 = vadd.f32 %v727, %v748
      %v775 = vadd.f32 %v728, %v750
      %v776 = vadd.f32 %v729, %v752
      %v777 = vadd.f32 %v730, %v754
      %v778 = vadd.f32 %v731, %v756
      %v779 = vadd.f32 %v732, %v758
      %v780 = vadd.f32 %v733, %v760
      %v781 = vadd.f32 %v734, %v762
      %v782 = vadd.f32 %v735, %v764
      %783 = vst.msk [vmem:[#allocation2] sm:$0xff] %vm464, %v774
      %784 = vst.msk [vmem:[#allocation2 + $0x8] sm:$0xff] %vm464, %v775
      %785 = vst.msk [vmem:[#allocation2 + $0x10] sm:$0xff] %vm464, %v776
      %786 = vst.msk [vmem:[#allocation2 + $0x18] sm:$0xff] %vm464, %v777
      %787 = vst.msk [vmem:[#allocation2 + $0x20] sm:$0xff] %vm464, %v778
      %788 = vst.msk [vmem:[#allocation2 + $0x28] sm:$0xff] %vm464, %v779
      %789 = vst.msk [vmem:[#allocation2 + $0x30] sm:$0xff] %vm464, %v780
      %790 = vst.msk [vmem:[#allocation2 + $0x38] sm:$0xff] %vm464, %v781
      %791 = vst.msk [vmem:[#allocation2 + $0x40] sm:$0xff] %vm464, %v782
      %s792 = scalar_lea.vmem %s2, 24
      %v793 = vld [vmem:[%s792] sm:$0xf]
      %v794 = vld [vmem:[%s792 + $0x4] sm:$0xf]
      %v797 = vunpack.c.l.b16 %v793
      %v798 = vunpack.c.l.b16 %v794
      %v799 = vpack.c.b16 %v798, %v797
      %801 = vmatprep.subr.bf16.mxu0 0
      %802 = vmatpush1.bf16.msra.mxu0 0
      %803 = vmatprep.subr.bf16.mxu0 0
      %804 = vmatpush1.bf16.msra.mxu0 0
      %805 = vmatprep.subr.bf16.mxu0 0
      %806 = vmatpush1.bf16.msra.mxu0 0
      %807 = vmatprep.subr.bf16.mxu0 0
      %808 = vmatpush1.bf16.msra.mxu0 0
      %809 = vmatprep.subr.bf16.mxu0 0
      %810 = vmatpush1.bf16.msra.mxu0 0
      %811 = vmatprep.subr.bf16.mxu0 0
      %812 = vmatpush1.bf16.msra.mxu0 0
      %813 = vmatprep.subr.bf16.mxu0 0
      %814 = vmatpush1.bf16.msra.mxu0 0
      %815 = vmatprep.subr.bf16.mxu0 0
      %816 = vmatpush1.bf16.msra.mxu0 %v799
      %817 = vmatprep.subr.bf16.mxu0 0
      %818 = vmatpush2.bf16.msra.mxu0 0
      %819 = vmatprep.subr.bf16.mxu0 0
      %820 = vmatpush2.bf16.msra.mxu0 0
      %821 = vmatprep.subr.bf16.mxu0 0
      %822 = vmatpush2.bf16.msra.mxu0 0
      %823 = vmatprep.subr.bf16.mxu0 0
      %824 = vmatpush2.bf16.msra.mxu0 0
      %825 = vmatprep.subr.bf16.mxu0 0
      %826 = vmatpush2.bf16.msra.mxu0 0
      %827 = vmatprep.subr.bf16.mxu0 0
      %828 = vmatpush2.bf16.msra.mxu0 0
      %829 = vmatprep.subr.bf16.mxu0 0
      %830 = vmatpush2.bf16.msra.mxu0 0
      %831 = vmatprep.subr.bf16.mxu0 0
      %832 = vmatpush2.bf16.msra.mxu0 0
      %833 = vmatprep.mubr.bf16.mxu0 0
      %834 = vmatmul.mubr.bf16.gmra.mxu0 %v367
      %v835 = vpop.f32.mrf.mxu0
      %v836 = vpop.f32.mrf.mxu0
      %v837 = vpop.f32.mrf.mxu0
      %v838 = vadd.f32 0.0, %v837
      %v839 = vpop.f32.mrf.mxu0
      %840 = vmatprep.mubr.bf16.mxu0 0
      %841 = vmatmul.mubr.bf16.gmra.mxu0 %v370
      %v842 = vpop.f32.mrf.mxu0
      %v843 = vadd.f32 0.0, %v842
      %v844 = vpop.f32.mrf.mxu0
      %v845 = vpop.f32.mrf.mxu0
      %v846 = vadd.f32 0.0, %v845
      %v847 = vpop.f32.mrf.mxu0
      %848 = vmatprep.mubr.bf16.mxu0 0
      %849 = vmatmul.mubr.bf16.gmra.mxu0 %v373
      %v850 = vpop.f32.mrf.mxu0
      %v851 = vadd.f32 0.0, %v850
      %v852 = vpop.f32.mrf.mxu0
      %v853 = vpop.f32.mrf.mxu0
      %v854 = vadd.f32 0.0, %v853
      %v855 = vpop.f32.mrf.mxu0
      %856 = vmatprep.mubr.bf16.mxu0 0
      %857 = vmatmul.mubr.bf16.gmra.mxu0 %v376
      %v858 = vpop.f32.mrf.mxu0
      %v859 = vadd.f32 0.0, %v858
      %v860 = vpop.f32.mrf.mxu0
      %v861 = vpop.f32.mrf.mxu0
      %v862 = vadd.f32 0.0, %v861
      %v863 = vpop.f32.mrf.mxu0
      %864 = vmatprep.mubr.bf16.mxu0 0
      %865 = vmatmul.mubr.bf16.gmra.mxu0 %v379
      %v866 = vpop.f32.mrf.mxu0
      %v867 = vadd.f32 0.0, %v866
      %v868 = vpop.f32.mrf.mxu0
      %v869 = vpop.f32.mrf.mxu0
      %v870 = vadd.f32 0.0, %v869
      %v871 = vpop.f32.mrf.mxu0
      %872 = vmatprep.mubr.bf16.mxu0 0
      %873 = vmatmul.mubr.bf16.gmra.mxu0 %v382
      %v874 = vpop.f32.mrf.mxu0
      %v875 = vadd.f32 0.0, %v874
      %v876 = vpop.f32.mrf.mxu0
      %v877 = vpop.f32.mrf.mxu0
      %v878 = vpop.f32.mrf.mxu0
      %879 = vdwg.mxu0
      %v880 = vld [vmem:[#allocation2] sm:$0xff]
      %v881 = vld [vmem:[#allocation2 + $0x8] sm:$0xff]
      %v882 = vld [vmem:[#allocation2 + $0x10] sm:$0xff]
      %v883 = vld [vmem:[#allocation2 + $0x18] sm:$0xff]
      %v884 = vld [vmem:[#allocation2 + $0x20] sm:$0xff]
      %v885 = vld [vmem:[#allocation2 + $0x28] sm:$0xff]
      %v886 = vld [vmem:[#allocation2 + $0x30] sm:$0xff]
      %v887 = vld [vmem:[#allocation2 + $0x38] sm:$0xff]
      %v888 = vld [vmem:[#allocation2 + $0x40] sm:$0x7f]
      %vm899 = vcmask 1045504
      %v900 = vrot.slane %v838, 2
      %v901 = vrot.slane %v843, 2
      %v902 = vsel %vm899, %v900, %v901
      %v903 = vrot.slane %v846, 2
      %v904 = vsel %vm899, %v901, %v903
      %v905 = vrot.slane %v851, 2
      %v906 = vsel %vm899, %v903, %v905
      %v907 = vrot.slane %v854, 2
      %v908 = vsel %vm899, %v905, %v907
      %v909 = vrot.slane %v859, 2
      %v910 = vsel %vm899, %v907, %v909
      %v911 = vrot.slane %v862, 2
      %v912 = vsel %vm899, %v909, %v911
      %v913 = vrot.slane %v867, 2
      %v914 = vsel %vm899, %v911, %v913
      %v915 = vrot.slane %v870, 2
      %v916 = vsel %vm899, %v913, %v915
      %v917 = vrot.slane %v875, 2
      %v918 = vsel %vm899, %v915, %v917
      %v928 = vadd.f32 %v880, %v902
      %v929 = vadd.f32 %v881, %v904
      %v930 = vadd.f32 %v882, %v906
      %v931 = vadd.f32 %v883, %v908
      %v932 = vadd.f32 %v884, %v910
      %v933 = vadd.f32 %v885, %v912
      %v934 = vadd.f32 %v886, %v914
      %v935 = vadd.f32 %v887, %v916
      %v936 = vadd.f32 %v888, %v918
      %937 = vst.msk [vmem:[#allocation2] sm:$0xff] %vm464, %v928
      %938 = vst.msk [vmem:[#allocation2 + $0x8] sm:$0xff] %vm464, %v929
      %939 = vst.msk [vmem:[#allocation2 + $0x10] sm:$0xff] %vm464, %v930
      %940 = vst.msk [vmem:[#allocation2 + $0x18] sm:$0xff] %vm464, %v931
      %941 = vst.msk [vmem:[#allocation2 + $0x20] sm:$0xff] %vm464, %v932
      %942 = vst.msk [vmem:[#allocation2 + $0x28] sm:$0xff] %vm464, %v933
      %943 = vst.msk [vmem:[#allocation2 + $0x30] sm:$0xff] %vm464, %v934
      %944 = vst.msk [vmem:[#allocation2 + $0x38] sm:$0xff] %vm464, %v935
      %vm945 = vcmask 63488
      %946 = vst.msk [vmem:[#allocation2 + $0x40] sm:$0x7f] %vm945, %v936
      %v947 = vld [vmem:[#allocation2] sm:$0xff]
      %v948 = vld [vmem:[#allocation2 + $0x8] sm:$0xff]
      %v949 = vld [vmem:[#allocation2 + $0x10] sm:$0xff]
      %v950 = vld [vmem:[#allocation2 + $0x18] sm:$0xff]
      %v951 = vld [vmem:[#allocation2 + $0x20] sm:$0xff]
      %v952 = vld [vmem:[#allocation2 + $0x28] sm:$0xff]
      %v953 = vld [vmem:[#allocation2 + $0x30] sm:$0xff]
      %v954 = vld [vmem:[#allocation2 + $0x38] sm:$0xff]
      %v955 = vld [vmem:[#allocation2 + $0x40] sm:$0xff]
      %v956 = vld [vmem:[#allocation2 + $0x48] sm:$0xff]
      %v957 = vld [vmem:[#allocation2 + $0x50] sm:$0x1]
      %v958 = vld [vmem:[%s3] sm:$0x1]
      %v960 = vlaneseq
      %v961 = vshrl.u32 %v960, 7
      %v962 = vsub.s32 0, %v961
      %v963 = vrot.slane %v958, %v962
      %v965 = vadd.f32 %v947, %v963
      %v966 = vadd.f32 %v948, %v963
      %v967 = vadd.f32 %v949, %v963
      %v968 = vadd.f32 %v950, %v963
      %v969 = vadd.f32 %v951, %v963
      %v970 = vadd.f32 %v952, %v963
      %v971 = vadd.f32 %v953, %v963
      %v972 = vadd.f32 %v954, %v963
      %v973 = vadd.f32 %v955, %v963
      %v974 = vadd.f32 %v956, %v963
      %v975 = vadd.f32 %v957, %v963
      %v976 = vmax.f32 %v965, 0.0
      %v977 = vmax.f32 %v966, 0.0
      %v978 = vmax.f32 %v967, 0.0
      %v979 = vmax.f32 %v968, 0.0
      %v980 = vmax.f32 %v969, 0.0
      %v981 = vmax.f32 %v970, 0.0
      %v982 = vmax.f32 %v971, 0.0
      %v983 = vmax.f32 %v972, 0.0
      %v984 = vmax.f32 %v973, 0.0
      %v985 = vmax.f32 %v974, 0.0
      %v986 = vmax.f32 %v975, 0.0
      %988 = vset.pattern.permute.xlu0 0
      %989 = vperm.xlu0 %988, %v318
      %v990 = vpop.permute.xlu0 %989
      %993 = vset.pattern.permute.xlu0 0
      %994 = vperm.xlu0 %993, %v319
      %v995 = vpop.permute.xlu0 %994
      %998 = vset.pattern.permute.xlu0 0
      %999 = vperm.xlu0 %998, %v320
      %v1000 = vpop.permute.xlu0 %999
      %1003 = vset.pattern.permute.xlu0 0
      %1004 = vperm.xlu0 %1003, %v321
      %v1005 = vpop.permute.xlu0 %1004
      %1008 = vset.pattern.permute.xlu0 0
      %1009 = vperm.xlu0 %1008, %v322
      %v1010 = vpop.permute.xlu0 %1009
      %1013 = vset.pattern.permute.xlu0 0
      %1014 = vperm.xlu0 %1013, %v323
      %v1015 = vpop.permute.xlu0 %1014
      %1018 = vset.pattern.permute.xlu0 0
      %1019 = vperm.xlu0 %1018, %v324
      %v1020 = vpop.permute.xlu0 %1019
      %1023 = vset.pattern.permute.xlu0 0
      %1024 = vperm.xlu0 %1023, %v325
      %v1025 = vpop.permute.xlu0 %1024
      %1028 = vset.pattern.permute.xlu0 0
      %1029 = vperm.xlu0 %1028, %v326
      %v1030 = vpop.permute.xlu0 %1029
      %1033 = vset.pattern.permute.xlu0 0
      %1034 = vperm.xlu0 %1033, %v327
      %v1035 = vpop.permute.xlu0 %1034
      %1038 = vset.pattern.permute.xlu0 0
      %1039 = vperm.xlu0 %1038, %v328
      %v1040 = vpop.permute.xlu0 %1039
      %v1042 = vmul.f32 %v976, %v990
      %v1043 = vmul.f32 %v977, %v995
      %v1044 = vmul.f32 %v978, %v1000
      %v1045 = vmul.f32 %v979, %v1005
      %v1046 = vmul.f32 %v980, %v1010
      %v1047 = vmul.f32 %v981, %v1015
      %v1048 = vmul.f32 %v982, %v1020
      %v1049 = vmul.f32 %v983, %v1025
      %v1050 = vmul.f32 %v984, %v1030
      %v1051 = vmul.f32 %v985, %v1035
      %v1052 = vmul.f32 %v986, %v1040
      %v1053 = vpack.c.bf16 %v1043, %v1042
      %v1054 = vpack.c.bf16 %v1045, %v1044
      %v1055 = vpack.c.bf16 %v1047, %v1046
      %v1056 = vpack.c.bf16 %v1049, %v1048
      %v1057 = vpack.c.bf16 %v1051, %v1050
      %v1058 = vpack.c.bf16 %v1052, %v1052
      %v1059 = vld [vmem:[%s4] sm:$0xf]
      %v1061 = vsel %vm464, %v1053, 0
      %v1064 = vsel %vm464, %v1054, 0
      %v1067 = vsel %vm464, %v1055, 0
      %v1070 = vsel %vm464, %v1056, 0
      %v1073 = vsel %vm464, %v1057, 0
      %v1076 = vsel %vm464, %v1058, 0
      %vm1078 = vcmask 1043456
      %v1080 = vsel %vm1078, %v1059, 0
      %1082 = vmatprep.subr.bf16.mxu0 0
      %1083 = vmatpush1.bf16.msra.mxu0 0
      %1084 = vmatprep.subr.bf16.mxu0 0
      %1085 = vmatpush1.bf16.msra.mxu0 0
      %1086 = vmatprep.subr.bf16.mxu0 0
      %1087 = vmatpush1.bf16.msra.mxu0 0
      %1088 = vmatprep.subr.bf16.mxu0 0
      %1089 = vmatpush1.bf16.msra.mxu0 0
      %1090 = vmatprep.subr.bf16.mxu0 0
      %1091 = vmatpush1.bf16.msra.mxu0 0
      %1092 = vmatprep.subr.bf16.mxu0 0
      %1093 = vmatpush1.bf16.msra.mxu0 0
      %1094 = vmatprep.subr.bf16.mxu0 0
      %1095 = vmatpush1.bf16.msra.mxu0 0
      %1096 = vmatprep.subr.bf16.mxu0 0
      %1097 = vmatpush1.bf16.msra.mxu0 %v1080
      %1098 = vmatprep.subr.bf16.mxu0 0
      %1099 = vmatpush2.bf16.msra.mxu0 0
      %1100 = vmatprep.subr.bf16.mxu0 0
      %1101 = vmatpush2.bf16.msra.mxu0 0
      %1102 = vmatprep.subr.bf16.mxu0 0
      %1103 = vmatpush2.bf16.msra.mxu0 0
      %1104 = vmatprep.subr.bf16.mxu0 0
      %1105 = vmatpush2.bf16.msra.mxu0 0
      %1106 = vmatprep.subr.bf16.mxu0 0
      %1107 = vmatpush2.bf16.msra.mxu0 0
      %1108 = vmatprep.subr.bf16.mxu0 0
      %1109 = vmatpush2.bf16.msra.mxu0 0
      %1110 = vmatprep.subr.bf16.mxu0 0
      %1111 = vmatpush2.bf16.msra.mxu0 0
      %1112 = vmatprep.subr.bf16.mxu0 0
      %1113 = vmatpush2.bf16.msra.mxu0 0
      %1114 = vmatprep.mubr.bf16.mxu0 0
      %1115 = vmatmul.mubr.bf16.gmra.mxu0 %v1061
      %v1116 = vpop.f32.mrf.mxu0
      %v1117 = vadd.f32 0.0, %v1116
      %v1118 = vpop.f32.mrf.mxu0
      %v1119 = vpop.f32.mrf.mxu0
      %v1120 = vadd.f32 0.0, %v1119
      %v1121 = vpop.f32.mrf.mxu0
      %1122 = vmatprep.mubr.bf16.mxu0 0
      %1123 = vmatmul.mubr.bf16.gmra.mxu0 %v1064
      %v1124 = vpop.f32.mrf.mxu0
      %v1125 = vadd.f32 0.0, %v1124
      %v1126 = vpop.f32.mrf.mxu0
      %v1127 = vpop.f32.mrf.mxu0
      %v1128 = vadd.f32 0.0, %v1127
      %v1129 = vpop.f32.mrf.mxu0
      %1130 = vmatprep.mubr.bf16.mxu0 0
      %1131 = vmatmul.mubr.bf16.gmra.mxu0 %v1067
      %v1132 = vpop.f32.mrf.mxu0
      %v1133 = vadd.f32 0.0, %v1132
      %v1134 = vpop.f32.mrf.mxu0
      %v1135 = vpop.f32.mrf.mxu0
      %v1136 = vadd.f32 0.0, %v1135
      %v1137 = vpop.f32.mrf.mxu0
      %1138 = vmatprep.mubr.bf16.mxu0 0
      %1139 = vmatmul.mubr.bf16.gmra.mxu0 %v1070
      %v1140 = vpop.f32.mrf.mxu0
      %v1141 = vadd.f32 0.0, %v1140
      %v1142 = vpop.f32.mrf.mxu0
      %v1143 = vpop.f32.mrf.mxu0
      %v1144 = vadd.f32 0.0, %v1143
      %v1145 = vpop.f32.mrf.mxu0
      %1146 = vmatprep.mubr.bf16.mxu0 0
      %1147 = vmatmul.mubr.bf16.gmra.mxu0 %v1073
      %v1148 = vpop.f32.mrf.mxu0
      %v1149 = vadd.f32 0.0, %v1148
      %v1150 = vpop.f32.mrf.mxu0
      %v1151 = vpop.f32.mrf.mxu0
      %v1152 = vadd.f32 0.0, %v1151
      %v1153 = vpop.f32.mrf.mxu0
      %1154 = vmatprep.mubr.bf16.mxu0 0
      %1155 = vmatmul.mubr.bf16.gmra.mxu0 %v1076
      %v1156 = vpop.f32.mrf.mxu0
      %v1157 = vadd.f32 0.0, %v1156
      %v1158 = vpop.f32.mrf.mxu0
      %v1159 = vpop.f32.mrf.mxu0
      %v1160 = vpop.f32.mrf.mxu0
      %1161 = vdwg.mxu0
      %vm1162 = vcmask 31744
      %1163 = vst.msk [vmem:[#allocation3] sm:$0xff] %vm1162, %v1117
      %1164 = vst.msk [vmem:[#allocation3 + $0x8] sm:$0xff] %vm1162, %v1120
      %1165 = vst.msk [vmem:[#allocation3 + $0x10] sm:$0xff] %vm1162, %v1125
      %1166 = vst.msk [vmem:[#allocation3 + $0x18] sm:$0xff] %vm1162, %v1128
      %1167 = vst.msk [vmem:[#allocation3 + $0x20] sm:$0xff] %vm1162, %v1133
      %1168 = vst.msk [vmem:[#allocation3 + $0x28] sm:$0xff] %vm1162, %v1136
      %1169 = vst.msk [vmem:[#allocation3 + $0x30] sm:$0xff] %vm1162, %v1141
      %1170 = vst.msk [vmem:[#allocation3 + $0x38] sm:$0xff] %vm1162, %v1144
      %1171 = vst.msk [vmem:[#allocation3 + $0x40] sm:$0xff] %vm1162, %v1149
      %1172 = vst.msk [vmem:[#allocation3 + $0x48] sm:$0xff] %vm1162, %v1152
      %vm1173 = vcmask 24576
      %1174 = vst.msk [vmem:[#allocation3 + $0x50] sm:$0x1] %vm1173, %v1157
      %s1175 = scalar_lea.vmem %s4, 4
      %v1176 = vld [vmem:[%s1175] sm:$0xf]
      %v1178 = vsel %vm1078, %v1176, 0
      %1180 = vmatprep.subr.bf16.mxu0 0
      %1181 = vmatpush1.bf16.msra.mxu0 0
      %1182 = vmatprep.subr.bf16.mxu0 0
      %1183 = vmatpush1.bf16.msra.mxu0 0
      %1184 = vmatprep.subr.bf16.mxu0 0
      %1185 = vmatpush1.bf16.msra.mxu0 0
      %1186 = vmatprep.subr.bf16.mxu0 0
      %1187 = vmatpush1.bf16.msra.mxu0 0
      %1188 = vmatprep.subr.bf16.mxu0 0
      %1189 = vmatpush1.bf16.msra.mxu0 0
      %1190 = vmatprep.subr.bf16.mxu0 0
      %1191 = vmatpush1.bf16.msra.mxu0 0
      %1192 = vmatprep.subr.bf16.mxu0 0
      %1193 = vmatpush1.bf16.msra.mxu0 0
      %1194 = vmatprep.subr.bf16.mxu0 0
      %1195 = vmatpush1.bf16.msra.mxu0 %v1178
      %1196 = vmatprep.subr.bf16.mxu0 0
      %1197 = vmatpush2.bf16.msra.mxu0 0
      %1198 = vmatprep.subr.bf16.mxu0 0
      %1199 = vmatpush2.bf16.msra.mxu0 0
      %1200 = vmatprep.subr.bf16.mxu0 0
      %1201 = vmatpush2.bf16.msra.mxu0 0
      %1202 = vmatprep.subr.bf16.mxu0 0
      %1203 = vmatpush2.bf16.msra.mxu0 0
      %1204 = vmatprep.subr.bf16.mxu0 0
      %1205 = vmatpush2.bf16.msra.mxu0 0
      %1206 = vmatprep.subr.bf16.mxu0 0
      %1207 = vmatpush2.bf16.msra.mxu0 0
      %1208 = vmatprep.subr.bf16.mxu0 0
      %1209 = vmatpush2.bf16.msra.mxu0 0
      %1210 = vmatprep.subr.bf16.mxu0 0
      %1211 = vmatpush2.bf16.msra.mxu0 0
      %1212 = vmatprep.mubr.bf16.mxu0 0
      %1213 = vmatmul.mubr.bf16.gmra.mxu0 %v1061
      %v1214 = vpop.f32.mrf.mxu0
      %v1215 = vadd.f32 0.0, %v1214
      %v1216 = vpop.f32.mrf.mxu0
      %v1217 = vpop.f32.mrf.mxu0
      %v1218 = vadd.f32 0.0, %v1217
      %v1219 = vpop.f32.mrf.mxu0
      %1220 = vmatprep.mubr.bf16.mxu0 0
      %1221 = vmatmul.mubr.bf16.gmra.mxu0 %v1064
      %v1222 = vpop.f32.mrf.mxu0
      %v1223 = vadd.f32 0.0, %v1222
      %v1224 = vpop.f32.mrf.mxu0
      %v1225 = vpop.f32.mrf.mxu0
      %v1226 = vadd.f32 0.0, %v1225
      %v1227 = vpop.f32.mrf.mxu0
      %1228 = vmatprep.mubr.bf16.mxu0 0
      %1229 = vmatmul.mubr.bf16.gmra.mxu0 %v1067
      %v1230 = vpop.f32.mrf.mxu0
      %v1231 = vadd.f32 0.0, %v1230
      %v1232 = vpop.f32.mrf.mxu0
      %v1233 = vpop.f32.mrf.mxu0
      %v1234 = vadd.f32 0.0, %v1233
      %v1235 = vpop.f32.mrf.mxu0
      %1236 = vmatprep.mubr.bf16.mxu0 0
      %1237 = vmatmul.mubr.bf16.gmra.mxu0 %v1070
      %v1238 = vpop.f32.mrf.mxu0
      %v1239 = vadd.f32 0.0, %v1238
      %v1240 = vpop.f32.mrf.mxu0
      %v1241 = vpop.f32.mrf.mxu0
      %v1242 = vadd.f32 0.0, %v1241
      %v1243 = vpop.f32.mrf.mxu0
      %1244 = vmatprep.mubr.bf16.mxu0 0
      %1245 = vmatmul.mubr.bf16.gmra.mxu0 %v1073
      %v1246 = vpop.f32.mrf.mxu0
      %v1247 = vadd.f32 0.0, %v1246
      %v1248 = vpop.f32.mrf.mxu0
      %v1249 = vpop.f32.mrf.mxu0
      %v1250 = vadd.f32 0.0, %v1249
      %v1251 = vpop.f32.mrf.mxu0
      %1252 = vmatprep.mubr.bf16.mxu0 0
      %1253 = vmatmul.mubr.bf16.gmra.mxu0 %v1076
      %v1254 = vpop.f32.mrf.mxu0
      %v1255 = vadd.f32 0.0, %v1254
      %v1256 = vpop.f32.mrf.mxu0
      %v1257 = vpop.f32.mrf.mxu0
      %v1258 = vpop.f32.mrf.mxu0
      %1259 = vdwg.mxu0
      %v1260 = vld [vmem:[#allocation3] sm:$0xff]
      %v1261 = vld [vmem:[#allocation3 + $0x8] sm:$0xff]
      %v1262 = vld [vmem:[#allocation3 + $0x10] sm:$0xff]
      %v1263 = vld [vmem:[#allocation3 + $0x18] sm:$0xff]
      %v1264 = vld [vmem:[#allocation3 + $0x20] sm:$0xff]
      %v1265 = vld [vmem:[#allocation3 + $0x28] sm:$0xff]
      %v1266 = vld [vmem:[#allocation3 + $0x30] sm:$0xff]
      %v1267 = vld [vmem:[#allocation3 + $0x38] sm:$0xff]
      %v1268 = vld [vmem:[#allocation3 + $0x40] sm:$0xff]
      %v1269 = vld [vmem:[#allocation3 + $0x48] sm:$0xff]
      %v1281 = vrot.slane %v1215, 1
      %v1282 = vrot.slane %v1218, 1
      %v1283 = vsel %vm587, %v1281, %v1282
      %v1284 = vrot.slane %v1223, 1
      %v1285 = vsel %vm587, %v1282, %v1284
      %v1286 = vrot.slane %v1226, 1
      %v1287 = vsel %vm587, %v1284, %v1286
      %v1288 = vrot.slane %v1231, 1
      %v1289 = vsel %vm587, %v1286, %v1288
      %v1290 = vrot.slane %v1234, 1
      %v1291 = vsel %vm587, %v1288, %v1290
      %v1292 = vrot.slane %v1239, 1
      %v1293 = vsel %vm587, %v1290, %v1292
      %v1294 = vrot.slane %v1242, 1
      %v1295 = vsel %vm587, %v1292, %v1294
      %v1296 = vrot.slane %v1247, 1
      %v1297 = vsel %vm587, %v1294, %v1296
      %v1298 = vrot.slane %v1250, 1
      %v1299 = vsel %vm587, %v1296, %v1298
      %v1300 = vrot.slane %v1255, 1
      %v1301 = vsel %vm587, %v1298, %v1300
      %v1312 = vadd.f32 %v1260, %v1283
      %v1313 = vadd.f32 %v1261, %v1285
      %v1314 = vadd.f32 %v1262, %v1287
      %v1315 = vadd.f32 %v1263, %v1289
      %v1316 = vadd.f32 %v1264, %v1291
      %v1317 = vadd.f32 %v1265, %v1293
      %v1318 = vadd.f32 %v1266, %v1295
      %v1319 = vadd.f32 %v1267, %v1297
      %v1320 = vadd.f32 %v1268, %v1299
      %v1321 = vadd.f32 %v1269, %v1301
      %1322 = vst.msk [vmem:[#allocation3] sm:$0xff] %vm1162, %v1312
      %1323 = vst.msk [vmem:[#allocation3 + $0x8] sm:$0xff] %vm1162, %v1313
      %1324 = vst.msk [vmem:[#allocation3 + $0x10] sm:$0xff] %vm1162, %v1314
      %1325 = vst.msk [vmem:[#allocation3 + $0x18] sm:$0xff] %vm1162, %v1315
      %1326 = vst.msk [vmem:[#allocation3 + $0x20] sm:$0xff] %vm1162, %v1316
      %1327 = vst.msk [vmem:[#allocation3 + $0x28] sm:$0xff] %vm1162, %v1317
      %1328 = vst.msk [vmem:[#allocation3 + $0x30] sm:$0xff] %vm1162, %v1318
      %1329 = vst.msk [vmem:[#allocation3 + $0x38] sm:$0xff] %vm1162, %v1319
      %1330 = vst.msk [vmem:[#allocation3 + $0x40] sm:$0xff] %vm1162, %v1320
      %1331 = vst.msk [vmem:[#allocation3 + $0x48] sm:$0xff] %vm1162, %v1321
      %s1332 = scalar_lea.vmem %s4, 8
      %v1333 = vld [vmem:[%s1332] sm:$0xf]
      %v1335 = vsel %vm1078, %v1333, 0
      %1337 = vmatprep.subr.bf16.mxu0 0
      %1338 = vmatpush1.bf16.msra.mxu0 0
      %1339 = vmatprep.subr.bf16.mxu0 0
      %1340 = vmatpush1.bf16.msra.mxu0 0
      %1341 = vmatprep.subr.bf16.mxu0 0
      %1342 = vmatpush1.bf16.msra.mxu0 0
      %1343 = vmatprep.subr.bf16.mxu0 0
      %1344 = vmatpush1.bf16.msra.mxu0 0
      %1345 = vmatprep.subr.bf16.mxu0 0
      %1346 = vmatpush1.bf16.msra.mxu0 0
      %1347 = vmatprep.subr.bf16.mxu0 0
      %1348 = vmatpush1.bf16.msra.mxu0 0
      %1349 = vmatprep.subr.bf16.mxu0 0
      %1350 = vmatpush1.bf16.msra.mxu0 0
      %1351 = vmatprep.subr.bf16.mxu0 0
      %1352 = vmatpush1.bf16.msra.mxu0 %v1335
      %1353 = vmatprep.subr.bf16.mxu0 0
      %1354 = vmatpush2.bf16.msra.mxu0 0
      %1355 = vmatprep.subr.bf16.mxu0 0
      %1356 = vmatpush2.bf16.msra.mxu0 0
      %1357 = vmatprep.subr.bf16.mxu0 0
      %1358 = vmatpush2.bf16.msra.mxu0 0
      %1359 = vmatprep.subr.bf16.mxu0 0
      %1360 = vmatpush2.bf16.msra.mxu0 0
      %1361 = vmatprep.subr.bf16.mxu0 0
      %1362 = vmatpush2.bf16.msra.mxu0 0
      %1363 = vmatprep.subr.bf16.mxu0 0
      %1364 = vmatpush2.bf16.msra.mxu0 0
      %1365 = vmatprep.subr.bf16.mxu0 0
      %1366 = vmatpush2.bf16.msra.mxu0 0
      %1367 = vmatprep.subr.bf16.mxu0 0
      %1368 = vmatpush2.bf16.msra.mxu0 0
      %1369 = vmatprep.mubr.bf16.mxu0 0
      %1370 = vmatmul.mubr.bf16.gmra.mxu0 %v1061
      %v1371 = vpop.f32.mrf.mxu0
      %v1372 = vpop.f32.mrf.mxu0
      %v1373 = vpop.f32.mrf.mxu0
      %v1374 = vadd.f32 0.0, %v1373
      %v1375 = vpop.f32.mrf.mxu0
      %1376 = vmatprep.mubr.bf16.mxu0 0
      %1377 = vmatmul.mubr.bf16.gmra.mxu0 %v1064
      %v1378 = vpop.f32.mrf.mxu0
      %v1379 = vadd.f32 0.0, %v1378
      %v1380 = vpop.f32.mrf.mxu0
      %v1381 = vpop.f32.mrf.mxu0
      %v1382 = vadd.f32 0.0, %v1381
      %v1383 = vpop.f32.mrf.mxu0
      %1384 = vmatprep.mubr.bf16.mxu0 0
      %1385 = vmatmul.mubr.bf16.gmra.mxu0 %v1067
      %v1386 = vpop.f32.mrf.mxu0
      %v1387 = vadd.f32 0.0, %v1386
      %v1388 = vpop.f32.mrf.mxu0
      %v1389 = vpop.f32.mrf.mxu0
      %v1390 = vadd.f32 0.0, %v1389
      %v1391 = vpop.f32.mrf.mxu0
      %1392 = vmatprep.mubr.bf16.mxu0 0
      %1393 = vmatmul.mubr.bf16.gmra.mxu0 %v1070
      %v1394 = vpop.f32.mrf.mxu0
      %v1395 = vadd.f32 0.0, %v1394
      %v1396 = vpop.f32.mrf.mxu0
      %v1397 = vpop.f32.mrf.mxu0
      %v1398 = vadd.f32 0.0, %v1397
      %v1399 = vpop.f32.mrf.mxu0
      %1400 = vmatprep.mubr.bf16.mxu0 0
      %1401 = vmatmul.mubr.bf16.gmra.mxu0 %v1073
      %v1402 = vpop.f32.mrf.mxu0
      %v1403 = vadd.f32 0.0, %v1402
      %v1404 = vpop.f32.mrf.mxu0
      %v1405 = vpop.f32.mrf.mxu0
      %v1406 = vadd.f32 0.0, %v1405
      %v1407 = vpop.f32.mrf.mxu0
      %1408 = vmatprep.mubr.bf16.mxu0 0
      %1409 = vmatmul.mubr.bf16.gmra.mxu0 %v1076
      %v1410 = vpop.f32.mrf.mxu0
      %v1411 = vadd.f32 0.0, %v1410
      %v1412 = vpop.f32.mrf.mxu0
      %v1413 = vpop.f32.mrf.mxu0
      %v1414 = vpop.f32.mrf.mxu0
      %1415 = vdwg.mxu0
      %v1416 = vld [vmem:[#allocation3] sm:$0xff]
      %v1417 = vld [vmem:[#allocation3 + $0x8] sm:$0xff]
      %v1418 = vld [vmem:[#allocation3 + $0x10] sm:$0xff]
      %v1419 = vld [vmem:[#allocation3 + $0x18] sm:$0xff]
      %v1420 = vld [vmem:[#allocation3 + $0x20] sm:$0xff]
      %v1421 = vld [vmem:[#allocation3 + $0x28] sm:$0xff]
      %v1422 = vld [vmem:[#allocation3 + $0x30] sm:$0xff]
      %v1423 = vld [vmem:[#allocation3 + $0x38] sm:$0xff]
      %v1424 = vld [vmem:[#allocation3 + $0x40] sm:$0xff]
      %v1435 = vrot.slane %v1374, 1
      %v1436 = vrot.slane %v1379, 1
      %v1437 = vsel %vm587, %v1435, %v1436
      %v1438 = vrot.slane %v1382, 1
      %v1439 = vsel %vm587, %v1436, %v1438
      %v1440 = vrot.slane %v1387, 1
      %v1441 = vsel %vm587, %v1438, %v1440
      %v1442 = vrot.slane %v1390, 1
      %v1443 = vsel %vm587, %v1440, %v1442
      %v1444 = vrot.slane %v1395, 1
      %v1445 = vsel %vm587, %v1442, %v1444
      %v1446 = vrot.slane %v1398, 1
      %v1447 = vsel %vm587, %v1444, %v1446
      %v1448 = vrot.slane %v1403, 1
      %v1449 = vsel %vm587, %v1446, %v1448
      %v1450 = vrot.slane %v1406, 1
      %v1451 = vsel %vm587, %v1448, %v1450
      %v1452 = vrot.slane %v1411, 1
      %v1453 = vsel %vm587, %v1450, %v1452
      %v1463 = vadd.f32 %v1416, %v1437
      %v1464 = vadd.f32 %v1417, %v1439
      %v1465 = vadd.f32 %v1418, %v1441
      %v1466 = vadd.f32 %v1419, %v1443
      %v1467 = vadd.f32 %v1420, %v1445
      %v1468 = vadd.f32 %v1421, %v1447
      %v1469 = vadd.f32 %v1422, %v1449
      %v1470 = vadd.f32 %v1423, %v1451
      %v1471 = vadd.f32 %v1424, %v1453
      %1472 = vst.msk [vmem:[#allocation3] sm:$0xff] %vm1162, %v1463
      %1473 = vst.msk [vmem:[#allocation3 + $0x8] sm:$0xff] %vm1162, %v1464
      %1474 = vst.msk [vmem:[#allocation3 + $0x10] sm:$0xff] %vm1162, %v1465
      %1475 = vst.msk [vmem:[#allocation3 + $0x18] sm:$0xff] %vm1162, %v1466
      %1476 = vst.msk [vmem:[#allocation3 + $0x20] sm:$0xff] %vm1162, %v1467
      %1477 = vst.msk [vmem:[#allocation3 + $0x28] sm:$0xff] %vm1162, %v1468
      %1478 = vst.msk [vmem:[#allocation3 + $0x30] sm:$0xff] %vm1162, %v1469
      %1479 = vst.msk [vmem:[#allocation3 + $0x38] sm:$0xff] %vm1162, %v1470
      %1480 = vst.msk [vmem:[#allocation3 + $0x40] sm:$0xff] %vm1162, %v1471
      %s1481 = scalar_lea.vmem %s4, 12
      %v1482 = vld [vmem:[%s1481] sm:$0xf]
      %v1484 = vsel %vm1078, %v1482, 0
      %1486 = vmatprep.subr.bf16.mxu0 0
      %1487 = vmatpush1.bf16.msra.mxu0 0
      %1488 = vmatprep.subr.bf16.mxu0 0
      %1489 = vmatpush1.bf16.msra.mxu0 0
      %1490 = vmatprep.subr.bf16.mxu0 0
      %1491 = vmatpush1.bf16.msra.mxu0 0
      %1492 = vmatprep.subr.bf16.mxu0 0
      %1493 = vmatpush1.bf16.msra.mxu0 0
      %1494 = vmatprep.subr.bf16.mxu0 0
      %1495 = vmatpush1.bf16.msra.mxu0 0
      %1496 = vmatprep.subr.bf16.mxu0 0
      %1497 = vmatpush1.bf16.msra.mxu0 0
      %1498 = vmatprep.subr.bf16.mxu0 0
      %1499 = vmatpush1.bf16.msra.mxu0 0
      %1500 = vmatprep.subr.bf16.mxu0 0
      %1501 = vmatpush1.bf16.msra.mxu0 %v1484
      %1502 = vmatprep.subr.bf16.mxu0 0
      %1503 = vmatpush2.bf16.msra.mxu0 0
      %1504 = vmatprep.subr.bf16.mxu0 0
      %1505 = vmatpush2.bf16.msra.mxu0 0
      %1506 = vmatprep.subr.bf16.mxu0 0
      %1507 = vmatpush2.bf16.msra.mxu0 0
      %1508 = vmatprep.subr.bf16.mxu0 0
      %1509 = vmatpush2.bf16.msra.mxu0 0
      %1510 = vmatprep.subr.bf16.mxu0 0
      %1511 = vmatpush2.bf16.msra.mxu0 0
      %1512 = vmatprep.subr.bf16.mxu0 0
      %1513 = vmatpush2.bf16.msra.mxu0 0
      %1514 = vmatprep.subr.bf16.mxu0 0
      %1515 = vmatpush2.bf16.msra.mxu0 0
      %1516 = vmatprep.subr.bf16.mxu0 0
      %1517 = vmatpush2.bf16.msra.mxu0 0
      %1518 = vmatprep.mubr.bf16.mxu0 0
      %1519 = vmatmul.mubr.bf16.gmra.mxu0 %v1061
      %v1520 = vpop.f32.mrf.mxu0
      %v1521 = vpop.f32.mrf.mxu0
      %v1522 = vpop.f32.mrf.mxu0
      %v1523 = vadd.f32 0.0, %v1522
      %v1524 = vpop.f32.mrf.mxu0
      %1525 = vmatprep.mubr.bf16.mxu0 0
      %1526 = vmatmul.mubr.bf16.gmra.mxu0 %v1064
      %v1527 = vpop.f32.mrf.mxu0
      %v1528 = vadd.f32 0.0, %v1527
      %v1529 = vpop.f32.mrf.mxu0
      %v1530 = vpop.f32.mrf.mxu0
      %v1531 = vadd.f32 0.0, %v1530
      %v1532 = vpop.f32.mrf.mxu0
      %1533 = vmatprep.mubr.bf16.mxu0 0
      %1534 = vmatmul.mubr.bf16.gmra.mxu0 %v1067
      %v1535 = vpop.f32.mrf.mxu0
      %v1536 = vadd.f32 0.0, %v1535
      %v1537 = vpop.f32.mrf.mxu0
      %v1538 = vpop.f32.mrf.mxu0
      %v1539 = vadd.f32 0.0, %v1538
      %v1540 = vpop.f32.mrf.mxu0
      %1541 = vmatprep.mubr.bf16.mxu0 0
      %1542 = vmatmul.mubr.bf16.gmra.mxu0 %v1070
      %v1543 = vpop.f32.mrf.mxu0
      %v1544 = vadd.f32 0.0, %v1543
      %v1545 = vpop.f32.mrf.mxu0
      %v1546 = vpop.f32.mrf.mxu0
      %v1547 = vadd.f32 0.0, %v1546
      %v1548 = vpop.f32.mrf.mxu0
      %1549 = vmatprep.mubr.bf16.mxu0 0
      %1550 = vmatmul.mubr.bf16.gmra.mxu0 %v1073
      %v1551 = vpop.f32.mrf.mxu0
      %v1552 = vadd.f32 0.0, %v1551
      %v1553 = vpop.f32.mrf.mxu0
      %v1554 = vpop.f32.mrf.mxu0
      %v1555 = vadd.f32 0.0, %v1554
      %v1556 = vpop.f32.mrf.mxu0
      %1557 = vmatprep.mubr.bf16.mxu0 0
      %1558 = vmatmul.mubr.bf16.gmra.mxu0 %v1076
      %v1559 = vpop.f32.mrf.mxu0
      %v1560 = vadd.f32 0.0, %v1559
      %v1561 = vpop.f32.mrf.mxu0
      %v1562 = vpop.f32.mrf.mxu0
      %v1563 = vpop.f32.mrf.mxu0
      %1564 = vdwg.mxu0
      %v1565 = vld [vmem:[#allocation3] sm:$0xff]
      %v1566 = vld [vmem:[#allocation3 + $0x8] sm:$0xff]
      %v1567 = vld [vmem:[#allocation3 + $0x10] sm:$0xff]
      %v1568 = vld [vmem:[#allocation3 + $0x18] sm:$0xff]
      %v1569 = vld [vmem:[#allocation3 + $0x20] sm:$0xff]
      %v1570 = vld [vmem:[#allocation3 + $0x28] sm:$0xff]
      %v1571 = vld [vmem:[#allocation3 + $0x30] sm:$0xff]
      %v1572 = vld [vmem:[#allocation3 + $0x38] sm:$0xff]
      %v1573 = vld [vmem:[#allocation3 + $0x40] sm:$0x7f]
      %v1584 = vrot.slane %v1523, 2
      %v1585 = vrot.slane %v1528, 2
      %v1586 = vsel %vm899, %v1584, %v1585
      %v1587 = vrot.slane %v1531, 2
      %v1588 = vsel %vm899, %v1585, %v1587
      %v1589 = vrot.slane %v1536, 2
      %v1590 = vsel %vm899, %v1587, %v1589
      %v1591 = vrot.slane %v1539, 2
      %v1592 = vsel %vm899, %v1589, %v1591
      %v1593 = vrot.slane %v1544, 2
      %v1594 = vsel %vm899, %v1591, %v1593
      %v1595 = vrot.slane %v1547, 2
      %v1596 = vsel %vm899, %v1593, %v1595
      %v1597 = vrot.slane %v1552, 2
      %v1598 = vsel %vm899, %v1595, %v1597
      %v1599 = vrot.slane %v1555, 2
      %v1600 = vsel %vm899, %v1597, %v1599
      %v1601 = vrot.slane %v1560, 2
      %v1602 = vsel %vm899, %v1599, %v1601
      %v1612 = vadd.f32 %v1565, %v1586
      %v1613 = vadd.f32 %v1566, %v1588
      %v1614 = vadd.f32 %v1567, %v1590
      %v1615 = vadd.f32 %v1568, %v1592
      %v1616 = vadd.f32 %v1569, %v1594
      %v1617 = vadd.f32 %v1570, %v1596
      %v1618 = vadd.f32 %v1571, %v1598
      %v1619 = vadd.f32 %v1572, %v1600
      %v1620 = vadd.f32 %v1573, %v1602
      %1621 = vst.msk [vmem:[#allocation3] sm:$0xff] %vm1162, %v1612
      %1622 = vst.msk [vmem:[#allocation3 + $0x8] sm:$0xff] %vm1162, %v1613
      %1623 = vst.msk [vmem:[#allocation3 + $0x10] sm:$0xff] %vm1162, %v1614
      %1624 = vst.msk [vmem:[#allocation3 + $0x18] sm:$0xff] %vm1162, %v1615
      %1625 = vst.msk [vmem:[#allocation3 + $0x20] sm:$0xff] %vm1162, %v1616
      %1626 = vst.msk [vmem:[#allocation3 + $0x28] sm:$0xff] %vm1162, %v1617
      %1627 = vst.msk [vmem:[#allocation3 + $0x30] sm:$0xff] %vm1162, %v1618
      %1628 = vst.msk [vmem:[#allocation3 + $0x38] sm:$0xff] %vm1162, %v1619
      %vm1629 = vcmask 30720
      %1630 = vst.msk [vmem:[#allocation3 + $0x40] sm:$0x7f] %vm1629, %v1620
      %v1631 = vld [vmem:[#allocation3] sm:$0xff]
      %v1632 = vld [vmem:[#allocation3 + $0x8] sm:$0xff]
      %v1633 = vld [vmem:[#allocation3 + $0x10] sm:$0xff]
      %v1634 = vld [vmem:[#allocation3 + $0x18] sm:$0xff]
      %v1635 = vld [vmem:[#allocation3 + $0x20] sm:$0xff]
      %v1636 = vld [vmem:[#allocation3 + $0x28] sm:$0xff]
      %v1637 = vld [vmem:[#allocation3 + $0x30] sm:$0xff]
      %v1638 = vld [vmem:[#allocation3 + $0x38] sm:$0xff]
      %v1639 = vld [vmem:[#allocation3 + $0x40] sm:$0xff]
      %v1640 = vld [vmem:[#allocation3 + $0x48] sm:$0xff]
      %v1641 = vld [vmem:[#allocation3 + $0x50] sm:$0x1]
      %v1642 = vld [vmem:[%s5] sm:$0x1]
      %v1644 = vlaneseq
      %v1645 = vshrl.u32 %v1644, 7
      %v1646 = vsub.s32 0, %v1645
      %v1647 = vrot.slane %v1642, %v1646
      %v1649 = vadd.f32 %v1631, %v1647
      %v1650 = vadd.f32 %v1632, %v1647
      %v1651 = vadd.f32 %v1633, %v1647
      %v1652 = vadd.f32 %v1634, %v1647
      %v1653 = vadd.f32 %v1635, %v1647
      %v1654 = vadd.f32 %v1636, %v1647
      %v1655 = vadd.f32 %v1637, %v1647
      %v1656 = vadd.f32 %v1638, %v1647
      %v1657 = vadd.f32 %v1639, %v1647
      %v1658 = vadd.f32 %v1640, %v1647
      %v1659 = vadd.f32 %v1641, %v1647
      %v1660 = vmax.f32 %v1649, 0.0
      %v1661 = vmax.f32 %v1650, 0.0
      %v1662 = vmax.f32 %v1651, 0.0
      %v1663 = vmax.f32 %v1652, 0.0
      %v1664 = vmax.f32 %v1653, 0.0
      %v1665 = vmax.f32 %v1654, 0.0
      %v1666 = vmax.f32 %v1655, 0.0
      %v1667 = vmax.f32 %v1656, 0.0
      %v1668 = vmax.f32 %v1657, 0.0
      %v1669 = vmax.f32 %v1658, 0.0
      %v1670 = vmax.f32 %v1659, 0.0
      %v1671 = vmul.f32 %v1660, %v990
      %v1672 = vmul.f32 %v1661, %v995
      %v1673 = vmul.f32 %v1662, %v1000
      %v1674 = vmul.f32 %v1663, %v1005
      %v1675 = vmul.f32 %v1664, %v1010
      %v1676 = vmul.f32 %v1665, %v1015
      %v1677 = vmul.f32 %v1666, %v1020
      %v1678 = vmul.f32 %v1667, %v1025
      %v1679 = vmul.f32 %v1668, %v1030
      %v1680 = vmul.f32 %v1669, %v1035
      %v1681 = vmul.f32 %v1670, %v1040
      %v1682 = vpack.c.bf16 %v1672, %v1671
      %v1683 = vpack.c.bf16 %v1674, %v1673
      %v1684 = vpack.c.bf16 %v1676, %v1675
      %v1685 = vpack.c.bf16 %v1678, %v1677
      %v1686 = vpack.c.bf16 %v1680, %v1679
      %v1687 = vpack.c.bf16 %v1681, %v1681
      %v1688 = vld [vmem:[%s6] sm:$0x3]
      %v1690 = vsel %vm1162, %v1682, 0
      %v1693 = vsel %vm1162, %v1683, 0
      %v1696 = vsel %vm1162, %v1684, 0
      %v1699 = vsel %vm1162, %v1685, 0
      %v1702 = vsel %vm1162, %v1686, 0
      %v1705 = vsel %vm1162, %v1687, 0
      %vm1707 = vcmask 1041408
      %v1709 = vsel %vm1707, %v1688, 0
      %1711 = vmatprep.subr.bf16.mxu0 0
      %1712 = vmatpush1.bf16.msra.mxu0 0
      %1713 = vmatprep.subr.bf16.mxu0 0
      %1714 = vmatpush1.bf16.msra.mxu0 0
      %1715 = vmatprep.subr.bf16.mxu0 0
      %1716 = vmatpush1.bf16.msra.mxu0 0
      %1717 = vmatprep.subr.bf16.mxu0 0
      %1718 = vmatpush1.bf16.msra.mxu0 0
      %1719 = vmatprep.subr.bf16.mxu0 0
      %1720 = vmatpush1.bf16.msra.mxu0 0
      %1721 = vmatprep.subr.bf16.mxu0 0
      %1722 = vmatpush1.bf16.msra.mxu0 0
      %1723 = vmatprep.subr.bf16.mxu0 0
      %1724 = vmatpush1.bf16.msra.mxu0 0
      %1725 = vmatprep.subr.bf16.mxu0 0
      %1726 = vmatpush1.bf16.msra.mxu0 %v1709
      %1727 = vmatprep.subr.bf16.mxu0 0
      %1728 = vmatpush2.bf16.msra.mxu0 0
      %1729 = vmatprep.subr.bf16.mxu0 0
      %1730 = vmatpush2.bf16.msra.mxu0 0
      %1731 = vmatprep.subr.bf16.mxu0 0
      %1732 = vmatpush2.bf16.msra.mxu0 0
      %1733 = vmatprep.subr.bf16.mxu0 0
      %1734 = vmatpush2.bf16.msra.mxu0 0
      %1735 = vmatprep.subr.bf16.mxu0 0
      %1736 = vmatpush2.bf16.msra.mxu0 0
      %1737 = vmatprep.subr.bf16.mxu0 0
      %1738 = vmatpush2.bf16.msra.mxu0 0
      %1739 = vmatprep.subr.bf16.mxu0 0
      %1740 = vmatpush2.bf16.msra.mxu0 0
      %1741 = vmatprep.subr.bf16.mxu0 0
      %1742 = vmatpush2.bf16.msra.mxu0 0
      %1743 = vmatprep.mubr.bf16.mxu0 0
      %1744 = vmatmul.mubr.bf16.gmra.mxu0 %v1690
      %v1745 = vpop.f32.mrf.mxu0
      %v1746 = vadd.f32 0.0, %v1745
      %v1747 = vpop.f32.mrf.mxu0
      %v1748 = vpop.f32.mrf.mxu0
      %v1749 = vadd.f32 0.0, %v1748
      %v1750 = vpop.f32.mrf.mxu0
      %1751 = vmatprep.mubr.bf16.mxu0 0
      %1752 = vmatmul.mubr.bf16.gmra.mxu0 %v1693
      %v1753 = vpop.f32.mrf.mxu0
      %v1754 = vadd.f32 0.0, %v1753
      %v1755 = vpop.f32.mrf.mxu0
      %v1756 = vpop.f32.mrf.mxu0
      %v1757 = vadd.f32 0.0, %v1756
      %v1758 = vpop.f32.mrf.mxu0
      %1759 = vmatprep.mubr.bf16.mxu0 0
      %1760 = vmatmul.mubr.bf16.gmra.mxu0 %v1696
      %v1761 = vpop.f32.mrf.mxu0
      %v1762 = vadd.f32 0.0, %v1761
      %v1763 = vpop.f32.mrf.mxu0
      %v1764 = vpop.f32.mrf.mxu0
      %v1765 = vadd.f32 0.0, %v1764
      %v1766 = vpop.f32.mrf.mxu0
      %1767 = vmatprep.mubr.bf16.mxu0 0
      %1768 = vmatmul.mubr.bf16.gmra.mxu0 %v1699
      %v1769 = vpop.f32.mrf.mxu0
      %v1770 = vadd.f32 0.0, %v1769
      %v1771 = vpop.f32.mrf.mxu0
      %v1772 = vpop.f32.mrf.mxu0
      %v1773 = vadd.f32 0.0, %v1772
      %v1774 = vpop.f32.mrf.mxu0
      %1775 = vmatprep.mubr.bf16.mxu0 0
      %1776 = vmatmul.mubr.bf16.gmra.mxu0 %v1702
      %v1777 = vpop.f32.mrf.mxu0
      %v1778 = vadd.f32 0.0, %v1777
      %v1779 = vpop.f32.mrf.mxu0
      %v1780 = vpop.f32.mrf.mxu0
      %v1781 = vadd.f32 0.0, %v1780
      %v1782 = vpop.f32.mrf.mxu0
      %1783 = vmatprep.mubr.bf16.mxu0 0
      %1784 = vmatmul.mubr.bf16.gmra.mxu0 %v1705
      %v1785 = vpop.f32.mrf.mxu0
      %v1786 = vadd.f32 0.0, %v1785
      %v1787 = vpop.f32.mrf.mxu0
      %v1788 = vpop.f32.mrf.mxu0
      %v1789 = vpop.f32.mrf.mxu0
      %1790 = vdwg.mxu0
      %1791 = vst.msk [vmem:[#allocation2] sm:$0xff] %vm464, %v1746
      %1792 = vst.msk [vmem:[#allocation2 + $0x8] sm:$0xff] %vm464, %v1749
      %1793 = vst.msk [vmem:[#allocation2 + $0x10] sm:$0xff] %vm464, %v1754
      %1794 = vst.msk [vmem:[#allocation2 + $0x18] sm:$0xff] %vm464, %v1757
      %1795 = vst.msk [vmem:[#allocation2 + $0x20] sm:$0xff] %vm464, %v1762
      %1796 = vst.msk [vmem:[#allocation2 + $0x28] sm:$0xff] %vm464, %v1765
      %1797 = vst.msk [vmem:[#allocation2 + $0x30] sm:$0xff] %vm464, %v1770
      %1798 = vst.msk [vmem:[#allocation2 + $0x38] sm:$0xff] %vm464, %v1773
      %1799 = vst.msk [vmem:[#allocation2 + $0x40] sm:$0xff] %vm464, %v1778
      %1800 = vst.msk [vmem:[#allocation2 + $0x48] sm:$0xff] %vm464, %v1781
      %1801 = vst.msk [vmem:[#allocation2 + $0x50] sm:$0x1] %vm475, %v1786
      %s1802 = scalar_lea.vmem %s6, 2
      %v1803 = vld [vmem:[%s1802] sm:$0x3]
      %v1805 = vsel %vm1707, %v1803, 0
      %1807 = vmatprep.subr.bf16.mxu0 0
      %1808 = vmatpush1.bf16.msra.mxu0 0
      %1809 = vmatprep.subr.bf16.mxu0 0
      %1810 = vmatpush1.bf16.msra.mxu0 0
      %1811 = vmatprep.subr.bf16.mxu0 0
      %1812 = vmatpush1.bf16.msra.mxu0 0
      %1813 = vmatprep.subr.bf16.mxu0 0
      %1814 = vmatpush1.bf16.msra.mxu0 0
      %1815 = vmatprep.subr.bf16.mxu0 0
      %1816 = vmatpush1.bf16.msra.mxu0 0
      %1817 = vmatprep.subr.bf16.mxu0 0
      %1818 = vmatpush1.bf16.msra.mxu0 0
      %1819 = vmatprep.subr.bf16.mxu0 0
      %1820 = vmatpush1.bf16.msra.mxu0 0
      %1821 = vmatprep.subr.bf16.mxu0 0
      %1822 = vmatpush1.bf16.msra.mxu0 %v1805
      %1823 = vmatprep.subr.bf16.mxu0 0
      %1824 = vmatpush2.bf16.msra.mxu0 0
      %1825 = vmatprep.subr.bf16.mxu0 0
      %1826 = vmatpush2.bf16.msra.mxu0 0
      %1827 = vmatprep.subr.bf16.mxu0 0
      %1828 = vmatpush2.bf16.msra.mxu0 0
      %1829 = vmatprep.subr.bf16.mxu0 0
      %1830 = vmatpush2.bf16.msra.mxu0 0
      %1831 = vmatprep.subr.bf16.mxu0 0
      %1832 = vmatpush2.bf16.msra.mxu0 0
      %1833 = vmatprep.subr.bf16.mxu0 0
      %1834 = vmatpush2.bf16.msra.mxu0 0
      %1835 = vmatprep.subr.bf16.mxu0 0
      %1836 = vmatpush2.bf16.msra.mxu0 0
      %1837 = vmatprep.subr.bf16.mxu0 0
      %1838 = vmatpush2.bf16.msra.mxu0 0
      %1839 = vmatprep.mubr.bf16.mxu0 0
      %1840 = vmatmul.mubr.bf16.gmra.mxu0 %v1690
      %v1841 = vpop.f32.mrf.mxu0
      %v1842 = vadd.f32 0.0, %v1841
      %v1843 = vpop.f32.mrf.mxu0
      %v1844 = vpop.f32.mrf.mxu0
      %v1845 = vadd.f32 0.0, %v1844
      %v1846 = vpop.f32.mrf.mxu0
      %1847 = vmatprep.mubr.bf16.mxu0 0
      %1848 = vmatmul.mubr.bf16.gmra.mxu0 %v1693
      %v1849 = vpop.f32.mrf.mxu0
      %v1850 = vadd.f32 0.0, %v1849
      %v1851 = vpop.f32.mrf.mxu0
      %v1852 = vpop.f32.mrf.mxu0
      %v1853 = vadd.f32 0.0, %v1852
      %v1854 = vpop.f32.mrf.mxu0
      %1855 = vmatprep.mubr.bf16.mxu0 0
      %1856 = vmatmul.mubr.bf16.gmra.mxu0 %v1696
      %v1857 = vpop.f32.mrf.mxu0
      %v1858 = vadd.f32 0.0, %v1857
      %v1859 = vpop.f32.mrf.mxu0
      %v1860 = vpop.f32.mrf.mxu0
      %v1861 = vadd.f32 0.0, %v1860
      %v1862 = vpop.f32.mrf.mxu0
      %1863 = vmatprep.mubr.bf16.mxu0 0
      %1864 = vmatmul.mubr.bf16.gmra.mxu0 %v1699
      %v1865 = vpop.f32.mrf.mxu0
      %v1866 = vadd.f32 0.0, %v1865
      %v1867 = vpop.f32.mrf.mxu0
      %v1868 = vpop.f32.mrf.mxu0
      %v1869 = vadd.f32 0.0, %v1868
      %v1870 = vpop.f32.mrf.mxu0
      %1871 = vmatprep.mubr.bf16.mxu0 0
      %1872 = vmatmul.mubr.bf16.gmra.mxu0 %v1702
      %v1873 = vpop.f32.mrf.mxu0
      %v1874 = vadd.f32 0.0, %v1873
      %v1875 = vpop.f32.mrf.mxu0
      %v1876 = vpop.f32.mrf.mxu0
      %v1877 = vadd.f32 0.0, %v1876
      %v1878 = vpop.f32.mrf.mxu0
      %1879 = vmatprep.mubr.bf16.mxu0 0
      %1880 = vmatmul.mubr.bf16.gmra.mxu0 %v1705
      %v1881 = vpop.f32.mrf.mxu0
      %v1882 = vadd.f32 0.0, %v1881
      %v1883 = vpop.f32.mrf.mxu0
      %v1884 = vpop.f32.mrf.mxu0
      %v1885 = vpop.f32.mrf.mxu0
      %1886 = vdwg.mxu0
      %v1887 = vld [vmem:[#allocation2] sm:$0xff]
      %v1888 = vld [vmem:[#allocation2 + $0x8] sm:$0xff]
      %v1889 = vld [vmem:[#allocation2 + $0x10] sm:$0xff]
      %v1890 = vld [vmem:[#allocation2 + $0x18] sm:$0xff]
      %v1891 = vld [vmem:[#allocation2 + $0x20] sm:$0xff]
      %v1892 = vld [vmem:[#allocation2 + $0x28] sm:$0xff]
      %v1893 = vld [vmem:[#allocation2 + $0x30] sm:$0xff]
      %v1894 = vld [vmem:[#allocation2 + $0x38] sm:$0xff]
      %v1895 = vld [vmem:[#allocation2 + $0x40] sm:$0xff]
      %v1896 = vld [vmem:[#allocation2 + $0x48] sm:$0xff]
      %v1908 = vrot.slane %v1842, 1
      %v1909 = vrot.slane %v1845, 1
      %v1910 = vsel %vm587, %v1908, %v1909
      %v1911 = vrot.slane %v1850, 1
      %v1912 = vsel %vm587, %v1909, %v1911
      %v1913 = vrot.slane %v1853, 1
      %v1914 = vsel %vm587, %v1911, %v1913
      %v1915 = vrot.slane %v1858, 1
      %v1916 = vsel %vm587, %v1913, %v1915
      %v1917 = vrot.slane %v1861, 1
      %v1918 = vsel %vm587, %v1915, %v1917
      %v1919 = vrot.slane %v1866, 1
      %v1920 = vsel %vm587, %v1917, %v1919
      %v1921 = vrot.slane %v1869, 1
      %v1922 = vsel %vm587, %v1919, %v1921
      %v1923 = vrot.slane %v1874, 1
      %v1924 = vsel %vm587, %v1921, %v1923
      %v1925 = vrot.slane %v1877, 1
      %v1926 = vsel %vm587, %v1923, %v1925
      %v1927 = vrot.slane %v1882, 1
      %v1928 = vsel %vm587, %v1925, %v1927
      %v1939 = vadd.f32 %v1887, %v1910
      %v1940 = vadd.f32 %v1888, %v1912
      %v1941 = vadd.f32 %v1889, %v1914
      %v1942 = vadd.f32 %v1890, %v1916
      %v1943 = vadd.f32 %v1891, %v1918
      %v1944 = vadd.f32 %v1892, %v1920
      %v1945 = vadd.f32 %v1893, %v1922
      %v1946 = vadd.f32 %v1894, %v1924
      %v1947 = vadd.f32 %v1895, %v1926
      %v1948 = vadd.f32 %v1896, %v1928
      %1949 = vst.msk [vmem:[#allocation2] sm:$0xff] %vm464, %v1939
      %1950 = vst.msk [vmem:[#allocation2 + $0x8] sm:$0xff] %vm464, %v1940
      %1951 = vst.msk [vmem:[#allocation2 + $0x10] sm:$0xff] %vm464, %v1941
      %1952 = vst.msk [vmem:[#allocation2 + $0x18] sm:$0xff] %vm464, %v1942
      %1953 = vst.msk [vmem:[#allocation2 + $0x20] sm:$0xff] %vm464, %v1943
      %1954 = vst.msk [vmem:[#allocation2 + $0x28] sm:$0xff] %vm464, %v1944
      %1955 = vst.msk [vmem:[#allocation2 + $0x30] sm:$0xff] %vm464, %v1945
      %1956 = vst.msk [vmem:[#allocation2 + $0x38] sm:$0xff] %vm464, %v1946
      %1957 = vst.msk [vmem:[#allocation2 + $0x40] sm:$0xff] %vm464, %v1947
      %1958 = vst.msk [vmem:[#allocation2 + $0x48] sm:$0xff] %vm464, %v1948
      %s1959 = scalar_lea.vmem %s6, 4
      %v1960 = vld [vmem:[%s1959] sm:$0x3]
      %v1962 = vsel %vm1707, %v1960, 0
      %1964 = vmatprep.subr.bf16.mxu0 0
      %1965 = vmatpush1.bf16.msra.mxu0 0
      %1966 = vmatprep.subr.bf16.mxu0 0
      %1967 = vmatpush1.bf16.msra.mxu0 0
      %1968 = vmatprep.subr.bf16.mxu0 0
      %1969 = vmatpush1.bf16.msra.mxu0 0
      %1970 = vmatprep.subr.bf16.mxu0 0
      %1971 = vmatpush1.bf16.msra.mxu0 0
      %1972 = vmatprep.subr.bf16.mxu0 0
      %1973 = vmatpush1.bf16.msra.mxu0 0
      %1974 = vmatprep.subr.bf16.mxu0 0
      %1975 = vmatpush1.bf16.msra.mxu0 0
      %1976 = vmatprep.subr.bf16.mxu0 0
      %1977 = vmatpush1.bf16.msra.mxu0 0
      %1978 = vmatprep.subr.bf16.mxu0 0
      %1979 = vmatpush1.bf16.msra.mxu0 %v1962
      %1980 = vmatprep.subr.bf16.mxu0 0
      %1981 = vmatpush2.bf16.msra.mxu0 0
      %1982 = vmatprep.subr.bf16.mxu0 0
      %1983 = vmatpush2.bf16.msra.mxu0 0
      %1984 = vmatprep.subr.bf16.mxu0 0
      %1985 = vmatpush2.bf16.msra.mxu0 0
      %1986 = vmatprep.subr.bf16.mxu0 0
      %1987 = vmatpush2.bf16.msra.mxu0 0
      %1988 = vmatprep.subr.bf16.mxu0 0
      %1989 = vmatpush2.bf16.msra.mxu0 0
      %1990 = vmatprep.subr.bf16.mxu0 0
      %1991 = vmatpush2.bf16.msra.mxu0 0
      %1992 = vmatprep.subr.bf16.mxu0 0
      %1993 = vmatpush2.bf16.msra.mxu0 0
      %1994 = vmatprep.subr.bf16.mxu0 0
      %1995 = vmatpush2.bf16.msra.mxu0 0
      %1996 = vmatprep.mubr.bf16.mxu0 0
      %1997 = vmatmul.mubr.bf16.gmra.mxu0 %v1690
      %v1998 = vpop.f32.mrf.mxu0
      %v1999 = vpop.f32.mrf.mxu0
      %v2000 = vpop.f32.mrf.mxu0
      %v2001 = vadd.f32 0.0, %v2000
      %v2002 = vpop.f32.mrf.mxu0
      %2003 = vmatprep.mubr.bf16.mxu0 0
      %2004 = vmatmul.mubr.bf16.gmra.mxu0 %v1693
      %v2005 = vpop.f32.mrf.mxu0
      %v2006 = vadd.f32 0.0, %v2005
      %v2007 = vpop.f32.mrf.mxu0
      %v2008 = vpop.f32.mrf.mxu0
      %v2009 = vadd.f32 0.0, %v2008
      %v2010 = vpop.f32.mrf.mxu0
      %2011 = vmatprep.mubr.bf16.mxu0 0
      %2012 = vmatmul.mubr.bf16.gmra.mxu0 %v1696
      %v2013 = vpop.f32.mrf.mxu0
      %v2014 = vadd.f32 0.0, %v2013
      %v2015 = vpop.f32.mrf.mxu0
      %v2016 = vpop.f32.mrf.mxu0
      %v2017 = vadd.f32 0.0, %v2016
      %v2018 = vpop.f32.mrf.mxu0
      %2019 = vmatprep.mubr.bf16.mxu0 0
      %2020 = vmatmul.mubr.bf16.gmra.mxu0 %v1699
      %v2021 = vpop.f32.mrf.mxu0
      %v2022 = vadd.f32 0.0, %v2021
      %v2023 = vpop.f32.mrf.mxu0
      %v2024 = vpop.f32.mrf.mxu0
      %v2025 = vadd.f32 0.0, %v2024
      %v2026 = vpop.f32.mrf.mxu0
      %2027 = vmatprep.mubr.bf16.mxu0 0
      %2028 = vmatmul.mubr.bf16.gmra.mxu0 %v1702
      %v2029 = vpop.f32.mrf.mxu0
      %v2030 = vadd.f32 0.0, %v2029
      %v2031 = vpop.f32.mrf.mxu0
      %v2032 = vpop.f32.mrf.mxu0
      %v2033 = vadd.f32 0.0, %v2032
      %v2034 = vpop.f32.mrf.mxu0
      %2035 = vmatprep.mubr.bf16.mxu0 0
      %2036 = vmatmul.mubr.bf16.gmra.mxu0 %v1705
      %v2037 = vpop.f32.mrf.mxu0
      %v2038 = vadd.f32 0.0, %v2037
      %v2039 = vpop.f32.mrf.mxu0
      %v2040 = vpop.f32.mrf.mxu0
      %v2041 = vpop.f32.mrf.mxu0
      %2042 = vdwg.mxu0
      %v2043 = vld [vmem:[#allocation2] sm:$0xff]
      %v2044 = vld [vmem:[#allocation2 + $0x8] sm:$0xff]
      %v2045 = vld [vmem:[#allocation2 + $0x10] sm:$0xff]
      %v2046 = vld [vmem:[#allocation2 + $0x18] sm:$0xff]
      %v2047 = vld [vmem:[#allocation2 + $0x20] sm:$0xff]
      %v2048 = vld [vmem:[#allocation2 + $0x28] sm:$0xff]
      %v2049 = vld [vmem:[#allocation2 + $0x30] sm:$0xff]
      %v2050 = vld [vmem:[#allocation2 + $0x38] sm:$0xff]
      %v2051 = vld [vmem:[#allocation2 + $0x40] sm:$0xff]
      %v2062 = vrot.slane %v2001, 1
      %v2063 = vrot.slane %v2006, 1
      %v2064 = vsel %vm587, %v2062, %v2063
      %v2065 = vrot.slane %v2009, 1
      %v2066 = vsel %vm587, %v2063, %v2065
      %v2067 = vrot.slane %v2014, 1
      %v2068 = vsel %vm587, %v2065, %v2067
      %v2069 = vrot.slane %v2017, 1
      %v2070 = vsel %vm587, %v2067, %v2069
      %v2071 = vrot.slane %v2022, 1
      %v2072 = vsel %vm587, %v2069, %v2071
      %v2073 = vrot.slane %v2025, 1
      %v2074 = vsel %vm587, %v2071, %v2073
      %v2075 = vrot.slane %v2030, 1
      %v2076 = vsel %vm587, %v2073, %v2075
      %v2077 = vrot.slane %v2033, 1
      %v2078 = vsel %vm587, %v2075, %v2077
      %v2079 = vrot.slane %v2038, 1
      %v2080 = vsel %vm587, %v2077, %v2079
      %v2090 = vadd.f32 %v2043, %v2064
      %v2091 = vadd.f32 %v2044, %v2066
      %v2092 = vadd.f32 %v2045, %v2068
      %v2093 = vadd.f32 %v2046, %v2070
      %v2094 = vadd.f32 %v2047, %v2072
      %v2095 = vadd.f32 %v2048, %v2074
      %v2096 = vadd.f32 %v2049, %v2076
      %v2097 = vadd.f32 %v2050, %v2078
      %v2098 = vadd.f32 %v2051, %v2080
      %2099 = vst.msk [vmem:[#allocation2] sm:$0xff] %vm464, %v2090
      %2100 = vst.msk [vmem:[#allocation2 + $0x8] sm:$0xff] %vm464, %v2091
      %2101 = vst.msk [vmem:[#allocation2 + $0x10] sm:$0xff] %vm464, %v2092
      %2102 = vst.msk [vmem:[#allocation2 + $0x18] sm:$0xff] %vm464, %v2093
      %2103 = vst.msk [vmem:[#allocation2 + $0x20] sm:$0xff] %vm464, %v2094
      %2104 = vst.msk [vmem:[#allocation2 + $0x28] sm:$0xff] %vm464, %v2095
      %2105 = vst.msk [vmem:[#allocation2 + $0x30] sm:$0xff] %vm464, %v2096
      %2106 = vst.msk [vmem:[#allocation2 + $0x38] sm:$0xff] %vm464, %v2097
      %2107 = vst.msk [vmem:[#allocation2 + $0x40] sm:$0xff] %vm464, %v2098
      %s2108 = scalar_lea.vmem %s6, 6
      %v2109 = vld [vmem:[%s2108] sm:$0x3]
      %v2111 = vsel %vm1707, %v2109, 0
      %2113 = vmatprep.subr.bf16.mxu0 0
      %2114 = vmatpush1.bf16.msra.mxu0 0
      %2115 = vmatprep.subr.bf16.mxu0 0
      %2116 = vmatpush1.bf16.msra.mxu0 0
      %2117 = vmatprep.subr.bf16.mxu0 0
      %2118 = vmatpush1.bf16.msra.mxu0 0
      %2119 = vmatprep.subr.bf16.mxu0 0
      %2120 = vmatpush1.bf16.msra.mxu0 0
      %2121 = vmatprep.subr.bf16.mxu0 0
      %2122 = vmatpush1.bf16.msra.mxu0 0
      %2123 = vmatprep.subr.bf16.mxu0 0
      %2124 = vmatpush1.bf16.msra.mxu0 0
      %2125 = vmatprep.subr.bf16.mxu0 0
      %2126 = vmatpush1.bf16.msra.mxu0 0
      %2127 = vmatprep.subr.bf16.mxu0 0
      %2128 = vmatpush1.bf16.msra.mxu0 %v2111
      %2129 = vmatprep.subr.bf16.mxu0 0
      %2130 = vmatpush2.bf16.msra.mxu0 0
      %2131 = vmatprep.subr.bf16.mxu0 0
      %2132 = vmatpush2.bf16.msra.mxu0 0
      %2133 = vmatprep.subr.bf16.mxu0 0
      %2134 = vmatpush2.bf16.msra.mxu0 0
      %2135 = vmatprep.subr.bf16.mxu0 0
      %2136 = vmatpush2.bf16.msra.mxu0 0
      %2137 = vmatprep.subr.bf16.mxu0 0
      %2138 = vmatpush2.bf16.msra.mxu0 0
      %2139 = vmatprep.subr.bf16.mxu0 0
      %2140 = vmatpush2.bf16.msra.mxu0 0
      %2141 = vmatprep.subr.bf16.mxu0 0
      %2142 = vmatpush2.bf16.msra.mxu0 0
      %2143 = vmatprep.subr.bf16.mxu0 0
      %2144 = vmatpush2.bf16.msra.mxu0 0
      %2145 = vmatprep.mubr.bf16.mxu0 0
      %2146 = vmatmul.mubr.bf16.gmra.mxu0 %v1690
      %v2147 = vpop.f32.mrf.mxu0
      %v2148 = vpop.f32.mrf.mxu0
      %v2149 = vpop.f32.mrf.mxu0
      %v2150 = vadd.f32 0.0, %v2149
      %v2151 = vpop.f32.mrf.mxu0
      %2152 = vmatprep.mubr.bf16.mxu0 0
      %2153 = vmatmul.mubr.bf16.gmra.mxu0 %v1693
      %v2154 = vpop.f32.mrf.mxu0
      %v2155 = vadd.f32 0.0, %v2154
      %v2156 = vpop.f32.mrf.mxu0
      %v2157 = vpop.f32.mrf.mxu0
      %v2158 = vadd.f32 0.0, %v2157
      %v2159 = vpop.f32.mrf.mxu0
      %2160 = vmatprep.mubr.bf16.mxu0 0
      %2161 = vmatmul.mubr.bf16.gmra.mxu0 %v1696
      %v2162 = vpop.f32.mrf.mxu0
      %v2163 = vadd.f32 0.0, %v2162
      %v2164 = vpop.f32.mrf.mxu0
      %v2165 = vpop.f32.mrf.mxu0
      %v2166 = vadd.f32 0.0, %v2165
      %v2167 = vpop.f32.mrf.mxu0
      %2168 = vmatprep.mubr.bf16.mxu0 0
      %2169 = vmatmul.mubr.bf16.gmra.mxu0 %v1699
      %v2170 = vpop.f32.mrf.mxu0
      %v2171 = vadd.f32 0.0, %v2170
      %v2172 = vpop.f32.mrf.mxu0
      %v2173 = vpop.f32.mrf.mxu0
      %v2174 = vadd.f32 0.0, %v2173
      %v2175 = vpop.f32.mrf.mxu0
      %2176 = vmatprep.mubr.bf16.mxu0 0
      %2177 = vmatmul.mubr.bf16.gmra.mxu0 %v1702
      %v2178 = vpop.f32.mrf.mxu0
      %v2179 = vadd.f32 0.0, %v2178
      %v2180 = vpop.f32.mrf.mxu0
      %v2181 = vpop.f32.mrf.mxu0
      %v2182 = vadd.f32 0.0, %v2181
      %v2183 = vpop.f32.mrf.mxu0
      %2184 = vmatprep.mubr.bf16.mxu0 0
      %2185 = vmatmul.mubr.bf16.gmra.mxu0 %v1705
      %v2186 = vpop.f32.mrf.mxu0
      %v2187 = vadd.f32 0.0, %v2186
      %v2188 = vpop.f32.mrf.mxu0
      %v2189 = vpop.f32.mrf.mxu0
      %v2190 = vpop.f32.mrf.mxu0
      %2191 = vdwg.mxu0
      %v2192 = vld [vmem:[#allocation2] sm:$0xff]
      %v2193 = vld [vmem:[#allocation2 + $0x8] sm:$0xff]
      %v2194 = vld [vmem:[#allocation2 + $0x10] sm:$0xff]
      %v2195 = vld [vmem:[#allocation2 + $0x18] sm:$0xff]
      %v2196 = vld [vmem:[#allocation2 + $0x20] sm:$0xff]
      %v2197 = vld [vmem:[#allocation2 + $0x28] sm:$0xff]
      %v2198 = vld [vmem:[#allocation2 + $0x30] sm:$0xff]
      %v2199 = vld [vmem:[#allocation2 + $0x38] sm:$0xff]
      %v2200 = vld [vmem:[#allocation2 + $0x40] sm:$0x7f]
      %v2211 = vrot.slane %v2150, 2
      %v2212 = vrot.slane %v2155, 2
      %v2213 = vsel %vm899, %v2211, %v2212
      %v2214 = vrot.slane %v2158, 2
      %v2215 = vsel %vm899, %v2212, %v2214
      %v2216 = vrot.slane %v2163, 2
      %v2217 = vsel %vm899, %v2214, %v2216
      %v2218 = vrot.slane %v2166, 2
      %v2219 = vsel %vm899, %v2216, %v2218
      %v2220 = vrot.slane %v2171, 2
      %v2221 = vsel %vm899, %v2218, %v2220
      %v2222 = vrot.slane %v2174, 2
      %v2223 = vsel %vm899, %v2220, %v2222
      %v2224 = vrot.slane %v2179, 2
      %v2225 = vsel %vm899, %v2222, %v2224
      %v2226 = vrot.slane %v2182, 2
      %v2227 = vsel %vm899, %v2224, %v2226
      %v2228 = vrot.slane %v2187, 2
      %v2229 = vsel %vm899, %v2226, %v2228
      %v2239 = vadd.f32 %v2192, %v2213
      %v2240 = vadd.f32 %v2193, %v2215
      %v2241 = vadd.f32 %v2194, %v2217
      %v2242 = vadd.f32 %v2195, %v2219
      %v2243 = vadd.f32 %v2196, %v2221
      %v2244 = vadd.f32 %v2197, %v2223
      %v2245 = vadd.f32 %v2198, %v2225
      %v2246 = vadd.f32 %v2199, %v2227
      %v2247 = vadd.f32 %v2200, %v2229
      %2248 = vst.msk [vmem:[#allocation2] sm:$0xff] %vm464, %v2239
      %2249 = vst.msk [vmem:[#allocation2 + $0x8] sm:$0xff] %vm464, %v2240
      %2250 = vst.msk [vmem:[#allocation2 + $0x10] sm:$0xff] %vm464, %v2241
      %2251 = vst.msk [vmem:[#allocation2 + $0x18] sm:$0xff] %vm464, %v2242
      %2252 = vst.msk [vmem:[#allocation2 + $0x20] sm:$0xff] %vm464, %v2243
      %2253 = vst.msk [vmem:[#allocation2 + $0x28] sm:$0xff] %vm464, %v2244
      %2254 = vst.msk [vmem:[#allocation2 + $0x30] sm:$0xff] %vm464, %v2245
      %2255 = vst.msk [vmem:[#allocation2 + $0x38] sm:$0xff] %vm464, %v2246
      %2256 = vst.msk [vmem:[#allocation2 + $0x40] sm:$0x7f] %vm945, %v2247
      %v2257 = vld [vmem:[#allocation2] sm:$0xff]
      %v2258 = vld [vmem:[#allocation2 + $0x8] sm:$0xff]
      %v2259 = vld [vmem:[#allocation2 + $0x10] sm:$0xff]
      %v2260 = vld [vmem:[#allocation2 + $0x18] sm:$0xff]
      %v2261 = vld [vmem:[#allocation2 + $0x20] sm:$0xff]
      %v2262 = vld [vmem:[#allocation2 + $0x28] sm:$0xff]
      %v2263 = vld [vmem:[#allocation2 + $0x30] sm:$0xff]
      %v2264 = vld [vmem:[#allocation2 + $0x38] sm:$0xff]
      %v2265 = vld [vmem:[#allocation2 + $0x40] sm:$0xff]
      %v2266 = vld [vmem:[#allocation2 + $0x48] sm:$0xff]
      %v2267 = vld [vmem:[#allocation2 + $0x50] sm:$0x1]
      %v2268 = vld [vmem:[%s7] sm:$0x1]
      %v2270 = vlaneseq
      %v2271 = vshrl.u32 %v2270, 7
      %v2272 = vsub.s32 0, %v2271
      %v2273 = vrot.slane %v2268, %v2272
      %v2275 = vadd.f32 %v2257, %v2273
      %v2276 = vadd.f32 %v2258, %v2273
      %v2277 = vadd.f32 %v2259, %v2273
      %v2278 = vadd.f32 %v2260, %v2273
      %v2279 = vadd.f32 %v2261, %v2273
      %v2280 = vadd.f32 %v2262, %v2273
      %v2281 = vadd.f32 %v2263, %v2273
      %v2282 = vadd.f32 %v2264, %v2273
      %v2283 = vadd.f32 %v2265, %v2273
      %v2284 = vadd.f32 %v2266, %v2273
      %v2285 = vadd.f32 %v2267, %v2273
      %v2286 = vmax.f32 %v2275, 0.0
      %v2287 = vmax.f32 %v2276, 0.0
      %v2288 = vmax.f32 %v2277, 0.0
      %v2289 = vmax.f32 %v2278, 0.0
      %v2290 = vmax.f32 %v2279, 0.0
      %v2291 = vmax.f32 %v2280, 0.0
      %v2292 = vmax.f32 %v2281, 0.0
      %v2293 = vmax.f32 %v2282, 0.0
      %v2294 = vmax.f32 %v2283, 0.0
      %v2295 = vmax.f32 %v2284, 0.0
      %v2296 = vmax.f32 %v2285, 0.0
      %v2306 = vrot.slane %v1042, 1
      %v2307 = vrot.slane %v1043, 1
      %v2308 = vsel %vm587, %v2306, %v2307
      %v2309 = vrot.slane %v1044, 1
      %v2310 = vsel %vm587, %v2307, %v2309
      %v2311 = vrot.slane %v1045, 1
      %v2312 = vsel %vm587, %v2309, %v2311
      %v2313 = vrot.slane %v1046, 1
      %v2314 = vsel %vm587, %v2311, %v2313
      %v2315 = vrot.slane %v1047, 1
      %v2316 = vsel %vm587, %v2313, %v2315
      %v2317 = vrot.slane %v1048, 1
      %v2318 = vsel %vm587, %v2315, %v2317
      %v2319 = vrot.slane %v1049, 1
      %v2320 = vsel %vm587, %v2317, %v2319
      %v2321 = vrot.slane %v1050, 1
      %v2322 = vsel %vm587, %v2319, %v2321
      %v2332 = vmax.f32 %v1042, %v2308
      %v2333 = vmax.f32 %v1043, %v2310
      %v2334 = vmax.f32 %v1044, %v2312
      %v2335 = vmax.f32 %v1045, %v2314
      %v2336 = vmax.f32 %v1046, %v2316
      %v2337 = vmax.f32 %v1047, %v2318
      %v2338 = vmax.f32 %v1048, %v2320
      %v2339 = vmax.f32 %v1049, %v2322
      %v2340 = vmax.f32 %v1050, %v2321
      %v2343 = vrot.slane %v1051, 1
      %v2344 = vsel %vm587, %v2321, %v2343
      %v2345 = vrot.slane %v1052, 1
      %v2346 = vsel %vm587, %v2343, %v2345
      %v2349 = vmax.f32 %v1050, %v2344
      %v2350 = vmax.f32 %v1051, %v2346
      %v2360 = vrot.slane %v2333, 1
      %v2361 = vrot.slane %v2334, 1
      %v2362 = vsel %vm587, %v2360, %v2361
      %v2363 = vrot.slane %v2335, 1
      %v2364 = vsel %vm587, %v2361, %v2363
      %v2365 = vrot.slane %v2336, 1
      %v2366 = vsel %vm587, %v2363, %v2365
      %v2367 = vrot.slane %v2337, 1
      %v2368 = vsel %vm587, %v2365, %v2367
      %v2369 = vrot.slane %v2338, 1
      %v2370 = vsel %vm587, %v2367, %v2369
      %v2371 = vrot.slane %v2339, 1
      %v2372 = vsel %vm587, %v2369, %v2371
      %v2373 = vrot.slane %v2349, 1
      %v2374 = vsel %vm587, %v2371, %v2373
      %v2375 = vrot.slane %v2350, 1
      %v2376 = vsel %vm587, %v2373, %v2375
      %v2386 = vmax.f32 %v2332, %v2362
      %v2387 = vmax.f32 %v2333, %v2364
      %v2388 = vmax.f32 %v2334, %v2366
      %v2389 = vmax.f32 %v2335, %v2368
      %v2390 = vmax.f32 %v2336, %v2370
      %v2391 = vmax.f32 %v2337, %v2372
      %v2392 = vmax.f32 %v2338, %v2374
      %v2393 = vmax.f32 %v2339, %v2376
      %v2394 = vmax.f32 %v2340, %v2375
      %v2395 = vsel %vm587, %v2394, 0.0
      %2407 = vrot.lane.b32.xlu0 %v2286, 8
      %v2408 = vpop.permute.xlu0 %2407
      %2409 = vrot.lane.b32.xlu0 %v2287, 8
      %v2410 = vpop.permute.xlu0 %2409
      %2411 = vrot.lane.b32.xlu0 %v2288, 8
      %v2412 = vpop.permute.xlu0 %2411
      %2413 = vrot.lane.b32.xlu0 %v2289, 8
      %v2414 = vpop.permute.xlu0 %2413
      %2415 = vrot.lane.b32.xlu0 %v2290, 8
      %v2416 = vpop.permute.xlu0 %2415
      %2417 = vrot.lane.b32.xlu0 %v2291, 8
      %v2418 = vpop.permute.xlu0 %2417
      %2419 = vrot.lane.b32.xlu0 %v2292, 8
      %v2420 = vpop.permute.xlu0 %2419
      %2421 = vrot.lane.b32.xlu0 %v2293, 8
      %v2422 = vpop.permute.xlu0 %2421
      %2423 = vrot.lane.b32.xlu0 %v2294, 8
      %v2424 = vpop.permute.xlu0 %2423
      %2425 = vrot.lane.b32.xlu0 %v2295, 8
      %v2426 = vpop.permute.xlu0 %2425
      %2427 = vrot.lane.b32.xlu0 %v2296, 8
      %v2428 = vpop.permute.xlu0 %2427
      %v2440 = vsel %vm464, %v2386, %v2408
      %v2441 = vsel %vm464, %v2387, %v2410
      %v2442 = vsel %vm464, %v2388, %v2412
      %v2443 = vsel %vm464, %v2389, %v2414
      %v2444 = vsel %vm464, %v2390, %v2416
      %v2445 = vsel %vm464, %v2391, %v2418
      %v2446 = vsel %vm464, %v2392, %v2420
      %v2447 = vsel %vm464, %v2393, %v2422
      %v2448 = vsel %vm464, %v2395, %v2424
      %v2449 = vsel %vm464, 0.0, %v2426
      %v2450 = vsel %vm464, 0.0, %v2428
      %v2451 = vpack.c.bf16 %v2441, %v2440
      %v2452 = vpack.c.bf16 %v2443, %v2442
      %v2453 = vpack.c.bf16 %v2445, %v2444
      %v2454 = vpack.c.bf16 %v2447, %v2446
      %v2455 = vpack.c.bf16 %v2449, %v2448
      %v2456 = vpack.c.bf16 %v2450, %v2450
      %v2463 = vunpack.c.l.b16 %v2451
      %v2464 = vunpack.c.h.b16 %v2451
      %v2465 = vunpack.c.l.b16 %v2452
      %v2466 = vunpack.c.h.b16 %v2452
      %v2467 = vunpack.c.l.b16 %v2453
      %v2468 = vunpack.c.h.b16 %v2453
      %v2469 = vunpack.c.l.b16 %v2454
      %v2470 = vunpack.c.h.b16 %v2454
      %v2471 = vunpack.c.l.b16 %v2455
      %v2472 = vunpack.c.h.b16 %v2455
      %v2473 = vunpack.c.l.b16 %v2456
      %v2474 = vpack.c.b16 %v2463, %v2463
      %v2475 = vpack.c.b16 %v2464, %v2464
      %v2476 = vpack.c.b16 %v2465, %v2465
      %v2477 = vpack.c.b16 %v2466, %v2466
      %v2478 = vpack.c.b16 %v2467, %v2467
      %v2479 = vpack.c.b16 %v2468, %v2468
      %v2480 = vpack.c.b16 %v2469, %v2469
      %v2481 = vpack.c.b16 %v2470, %v2470
      %v2482 = vpack.c.b16 %v2471, %v2471
      %v2483 = vpack.c.b16 %v2472, %v2472
      %v2484 = vpack.c.b16 %v2473, %v2473
      %vm2496 = vcmask 125952
      %2497 = vst.msk [vmem:[%s305] sm:$0xf] %vm2496, %v2474
      %2498 = vst.msk [vmem:[%s305 + $0x4] sm:$0xf] %vm2496, %v2475
      %2499 = vst.msk [vmem:[%s305 + $0x8] sm:$0xf] %vm2496, %v2476
      %2500 = vst.msk [vmem:[%s305 + $0xc] sm:$0xf] %vm2496, %v2477
      %2501 = vst.msk [vmem:[%s305 + $0x10] sm:$0xf] %vm2496, %v2478
      %2502 = vst.msk [vmem:[%s305 + $0x14] sm:$0xf] %vm2496, %v2479
      %2503 = vst.msk [vmem:[%s305 + $0x18] sm:$0xf] %vm2496, %v2480
      %2504 = vst.msk [vmem:[%s305 + $0x1c] sm:$0xf] %vm2496, %v2481
      %2505 = vst.msk [vmem:[%s305 + $0x20] sm:$0xf] %vm2496, %v2482
      %2506 = vst.msk [vmem:[%s305 + $0x24] sm:$0xf] %vm2496, %v2483
      %vm2507 = vcmask 122880
      %vm2508 = vsmask.f32 256
      %vm2509 = vmand %vm2507, %vm2508
      %v2510 = vld [vmem:[%s305 + $0x28] sm:$0x1]
      %v2511 = vsel %vm2509, %v2484, %v2510
      %2512 = vst [vmem:[%s305 + $0x28] sm:$0x1] %v2511
      %p2513 = scmp.lt.s32.totalorder %s19, 1
      %s2514 = scalar_select %p2513, %s19, 1
      %s2515 = smul.addr %s2514, 11
      %s2516 = smul.addr %s2515, 4
      %s2517 = scalar_lea.vmem %s8, %s2516
      // Predicated region
      $region53: #{stem_block_forward.2} parent=51 // pred_check
        %p2518 = pneg %p210
      $region54: #{stem_block_forward.2} parent=51 // pred_check_branch
        %2520 = sbr.rel (%p2518) target = $region56
      $region55: #{stem_block_forward.2} parent=51 // pred_region
        _
      $region56: #{stem_block_forward.2} parent=51 // pred_fallthru
        _
    $region52: #{stem_block_forward.2} parent=5 // pred_fallthru
      _
    %p2521 = scmp.le.s32.totalorder 2, %s14
    // Predicated region
    $region57: #{stem_block_forward.2} parent=5 // pred_check
      %p2522 = pneg %p2521
    $region58: #{stem_block_forward.2} parent=5 // pred_check_branch
      %2524 = sbr.rel (%p2522) target = $region60
    $region59: #{stem_block_forward.2} parent=5 // pred_region
      %s2525 = ssub.s32 %s14, 2
      // Predicated region
      $region61: #{stem_block_forward.2} parent=59 // pred_check
        %p2526 = pneg %p216
      $region62: #{stem_block_forward.2} parent=59 // pred_check_branch
        %2528 = sbr.rel (%p2526) target = $region64
      $region63: #{stem_block_forward.2} parent=59 // pred_region
        %p2529 = scmp.lt.s32.totalorder %s20, 1
        %s2530 = scalar_select %p2529, %s20, 1
        %s2531 = smul.addr %s2530, 11
        %s2532 = smul.addr %s2531, 4
        %s2533 = scalar_lea.vmem %s8, %s2532
      $region64: #{stem_block_forward.2} parent=59 // pred_fallthru
        _
    $region60: #{stem_block_forward.2} parent=5 // pred_fallthru
      _
  $region6: #{stem_block_forward.2} parent=0 // loop_footer
    %s18 = sadd.s32 1, %s14
  $region7: #{stem_block_forward.2} parent=0 // loop_footer_branch
    %13 = sbr.rel target = $region3
  $region8: #{stem_block_forward.2} parent=0 // loop_exit
    _

</llo_original>
